<compile_context>
chip_gen: v7x
topology: tpu7x:2x2x1
jax: 0.10.0
libtpu: 0.0.40
codegen_flags: <defaults>
</compile_context>

<pallas_src>
import functools

import jax
import jax.numpy as jnp
from jax import lax
from jax.experimental import pallas as pl
from jax.experimental.pallas import tpu as pltpu


# --------------------------- fused Pallas kernel ---------------------------

def _bottleneck_kernel(x_ref, w1_ref, b1_ref, w2_ref, b2_ref, w3_ref, b3_ref,
                       wd_ref, bd_ref, o_ref, pad_ref, *, D, H, W):
    """One image (NDHWC) per grid step; every conv+BN stage fused in VMEM.

    x_ref  : (1, D, H, W, Cin)
    w1_ref : (Cin, Cp)        b1_ref : (1, Cp)        conv1 + folded BN1
    w2_ref : (27*Cp, Cp)      b2_ref : (1, Cp)        conv2 (3x3x3) + folded BN2
    w3_ref : (Cp, Cout)       b3_ref : (1, Cout)      conv3 + folded BN3
    wd_ref : (Cin, Cout)      bd_ref : (1, Cout)      downsample conv + folded BN
    o_ref  : (1, D, H, W, Cout)
    pad_ref: VMEM scratch (D+2, H+2, W+9, Cp) zero-haloed activation for conv2
    """
    Cin = x_ref.shape[-1]
    Cp = w1_ref.shape[-1]
    Cout = w3_ref.shape[-1]
    M = D * H * W
    W0 = 8  # sublane-aligned column where the un-padded interior starts

    x = x_ref[0]                               # (D, H, W, Cin)
    x_flat = x.reshape(M, Cin)                 # leading-dim collapse only (cheap)

    # ---- residual branch first (ends x_flat's live range early) ----
    res = jnp.dot(x_flat, wd_ref[...],
                  preferred_element_type=jnp.float32) + bd_ref[...]   # (M, Cout)

    # ---- conv1 (1x1x1) + folded BN1 + ReLU ----
    y1 = jnp.dot(x_flat, w1_ref[...], preferred_element_type=jnp.float32)
    y1 = jnp.maximum(y1 + b1_ref[...], 0.0)    # (M, Cp)

    # ---- conv2 (3x3x3, pad=1, stride=1) + folded BN2 + ReLU ----
    # zero halo in VMEM scratch; interior stored at sublane-aligned offset W0.
    pad_ref[...] = jnp.zeros_like(pad_ref)
    pad_ref[1:D + 1, 1:H + 1, W0:W0 + W, :] = y1.reshape(D, H, W, Cp)
    padded = pad_ref[...]                      # (D+2, H+2, W+9, Cp)

    # gather the 27 shifted windows into one (M, 27*Cp) matrix -> single matmul.
    wins = []
    for kd in range(3):
        for kh in range(3):
            for kw in range(3):
                win = padded[kd:kd + D, kh:kh + H,
                             W0 - 1 + kw:W0 - 1 + kw + W, :]
                wins.append(win.reshape(M, Cp))
    xcat = jnp.concatenate(wins, axis=-1)      # (M, 27*Cp)
    y2 = jnp.dot(xcat, w2_ref[...], preferred_element_type=jnp.float32)
    y2 = jnp.maximum(y2 + b2_ref[...], 0.0)    # (M, Cp)

    # ---- conv3 (1x1x1) + folded BN3 ----
    y3 = jnp.dot(y2, w3_ref[...], preferred_element_type=jnp.float32) + b3_ref[...]

    # ---- add residual + final ReLU ----
    out = jnp.maximum(y3 + res, 0.0)           # (M, Cout)
    o_ref[0] = out.reshape(D, H, W, Cout).astype(o_ref.dtype)


@jax.jit
def bottleneck_forward(x_ncdhw, folded):
    """x: (B, Cin, D, H, W) -> (B, 4*planes, D, H, W), Bottleneck.forward (eval)."""
    B, Cin, D, H, W = x_ncdhw.shape
    Cp = folded["w1f"].shape[1]
    Cout = folded["w3f"].shape[1]
    x = jnp.transpose(x_ncdhw, (0, 2, 3, 4, 1))       # NCDHW -> NDHWC

    kernel = functools.partial(_bottleneck_kernel, D=D, H=H, W=W)
    rep = lambda b: (0, 0)                             # weights: resident block

    out = pl.pallas_call(
        kernel,
        out_shape=jax.ShapeDtypeStruct((B, D, H, W, Cout), x.dtype),
        grid=(B,),
        in_specs=[
            pl.BlockSpec((1, D, H, W, Cin), lambda b: (b, 0, 0, 0, 0)),
            pl.BlockSpec((Cin, Cp), rep),
            pl.BlockSpec((1, Cp), rep),
            pl.BlockSpec((27 * Cp, Cp), rep),
            pl.BlockSpec((1, Cp), rep),
            pl.BlockSpec((Cp, Cout), rep),
            pl.BlockSpec((1, Cout), rep),
            pl.BlockSpec((Cin, Cout), rep),
            pl.BlockSpec((1, Cout), rep),
        ],
        out_specs=pl.BlockSpec((1, D, H, W, Cout), lambda b: (b, 0, 0, 0, 0)),
        scratch_shapes=[pltpu.VMEM((D + 2, H + 2, W + 9, Cp), jnp.float32)],
        compiler_params=pltpu.CompilerParams(
            dimension_semantics=("parallel",)),
    )(x, folded["w1f"], folded["b1f"], folded["w2f"], folded["b2f"],
      folded["w3f"], folded["b3f"], folded["wdf"], folded["bdf"])

    return jnp.transpose(out, (0, 4, 1, 2, 3))         # NDHWC -> NCDHW


# -------------------- parameter setup / offline BN folding --------------------

def init_params(key, in_planes, planes, expansion=4):
    out_planes = planes * expansion
    ks = jax.random.split(key, 8)

    def bn_params(k, c):
        k1, k2, k3, k4 = jax.random.split(k, 4)
        gamma = jax.random.uniform(k1, (c,), jnp.float32, 0.5, 1.5)
        beta = 0.1 * jax.random.normal(k2, (c,), jnp.float32)
        mean = 0.1 * jax.random.normal(k3, (c,), jnp.float32)
        var = jax.random.uniform(k4, (c,), jnp.float32, 0.5, 1.5)
        return (gamma, beta, mean, var)

    def conv_w(k, cout, cin, ksz):
        bound = 1.0 / float(cin * ksz ** 3) ** 0.5
        shape = (cout, cin) if ksz == 1 else (cout, cin, ksz, ksz, ksz)
        return jax.random.uniform(k, shape, jnp.float32, -bound, bound)

    return dict(
        w1=conv_w(ks[0], planes, in_planes, 1), bn1=bn_params(ks[1], planes),
        w2=conv_w(ks[2], planes, planes, 3),    bn2=bn_params(ks[3], planes),
        w3=conv_w(ks[4], out_planes, planes, 1), bn3=bn_params(ks[5], out_planes),
        wd=conv_w(ks[6], out_planes, in_planes, 1), bnd=bn_params(ks[7], out_planes),
    )


def fold_params(p, eps=1e-5):
    """Fold eval-mode BatchNorm into matmul weights [c_in, c_out] + bias."""
    def fold(stats):
        g, b, m, v = stats
        s = g / jnp.sqrt(v + eps)
        return s, b - s * m

    s1, c1 = fold(p["bn1"]); s2, c2 = fold(p["bn2"])
    s3, c3 = fold(p["bn3"]); sd, cd = fold(p["bnd"])
    Cp = p["w1"].shape[0]

    w1f = p["w1"].T * s1[None, :]                                     # (Cin, Cp)
    # (O, I, kd, kh, kw) -> (kd, kh, kw, I, O) -> (27*Cp, Cp); row = tap*Cp + ci
    w2f = jnp.transpose(p["w2"], (2, 3, 4, 1, 0)).reshape(27 * Cp, Cp) * s2[None, :]
    w3f = p["w3"].T * s3[None, :]                                     # (Cp, Cout)
    wdf = p["wd"].T * sd[None, :]                                     # (Cin, Cout)
    return dict(w1f=w1f, b1f=c1.reshape(1, -1),
                w2f=w2f, b2f=c2.reshape(1, -1),
                w3f=w3f, b3f=c3.reshape(1, -1),
                wdf=wdf, bdf=cd.reshape(1, -1))


# -------------------- pure-JAX reference for verification --------------------

def bottleneck_reference(x, p, eps=1e-5):
    def bn(t, stats):
        g, b, m, v = stats
        s = g / jnp.sqrt(v + eps)
        return t * s[None, :, None, None, None] + (b - s * m)[None, :, None, None, None]

    out = jnp.einsum('oc,bcdhw->bodhw', p["w1"], x)
    out = jnp.maximum(bn(out, p["bn1"]), 0.0)
    out = lax.conv_general_dilated(
        out, p["w2"], window_strides=(1, 1, 1),
        padding=[(1, 1), (1, 1), (1, 1)],
        dimension_numbers=("NCDHW", "OIDHW", "NCDHW"))
    out = jnp.maximum(bn(out, p["bn2"]), 0.0)
    out = jnp.einsum('oc,bcdhw->bodhw', p["w3"], out)
    out = bn(out, p["bn3"])
    res = jnp.einsum('oc,bcdhw->bodhw', p["wd"], x)
    res = bn(res, p["bnd"])
    return jnp.maximum(out + res, 0.0)


if __name__ == "__main__":
    B, in_planes, planes = 2, 16, 8          # output channels = planes*4 = 32
    D, H, W = 4, 8, 8

    key = jax.random.PRNGKey(0)
    kx, kp = jax.random.split(key)
    x = jax.random.normal(kx, (B, in_planes, D, H, W), jnp.float32)
    params = init_params(kp, in_planes, planes)
    folded = fold_params(params)

    out = jax.block_until_ready(bottleneck_forward(x, folded))
    assert out.shape == (B, 4 * planes, D, H, W), out.shape

    ref = jax.block_until_ready(bottleneck_reference(x, params))
    err = float(jnp.max(jnp.abs(out - ref)))
    assert err < 2e-2, f"max abs err {err}"

    print("KERNEL_OK")
</pallas_src>

<mosaic_0001>
module attributes {stable_mosaic.version = 11 : i64} {
  func.func @_bottleneck_kernel(%arg0: i32, %arg1: memref<1x4x8x8x16xf32, #tpu.memory_space<vmem>>, %arg2: memref<16x8xf32, #tpu.memory_space<vmem>>, %arg3: memref<1x8xf32, #tpu.memory_space<vmem>>, %arg4: memref<216x8xf32, #tpu.memory_space<vmem>>, %arg5: memref<1x8xf32, #tpu.memory_space<vmem>>, %arg6: memref<8x32xf32, #tpu.memory_space<vmem>>, %arg7: memref<1x32xf32, #tpu.memory_space<vmem>>, %arg8: memref<16x32xf32, #tpu.memory_space<vmem>>, %arg9: memref<1x32xf32, #tpu.memory_space<vmem>>, %arg10: memref<1x4x8x8x32xf32, #tpu.memory_space<vmem>>, %arg11: memref<6x10x17x8xf32, #tpu.memory_space<vmem>>) attributes {dimension_semantics = [#tpu.dimension_semantics<parallel>], iteration_bounds = array<i64: 2>, scalar_prefetch = 0 : i64, scratch_operands = 1 : i64, tpu.core_type = #tpu.core_type<tc>, window_params = [{transform_indices = @transform_0, window_bounds = array<i64: 1, 4, 8, 8, 16>}, {pipeline_mode = #tpu.pipeline_mode<synchronous>, transform_indices = @transform_1, window_bounds = array<i64: 16, 8>}, {pipeline_mode = #tpu.pipeline_mode<synchronous>, transform_indices = @transform_2, window_bounds = array<i64: 1, 8>}, {pipeline_mode = #tpu.pipeline_mode<synchronous>, transform_indices = @transform_3, window_bounds = array<i64: 216, 8>}, {pipeline_mode = #tpu.pipeline_mode<synchronous>, transform_indices = @transform_4, window_bounds = array<i64: 1, 8>}, {pipeline_mode = #tpu.pipeline_mode<synchronous>, transform_indices = @transform_5, window_bounds = array<i64: 8, 32>}, {pipeline_mode = #tpu.pipeline_mode<synchronous>, transform_indices = @transform_6, window_bounds = array<i64: 1, 32>}, {pipeline_mode = #tpu.pipeline_mode<synchronous>, transform_indices = @transform_7, window_bounds = array<i64: 16, 32>}, {pipeline_mode = #tpu.pipeline_mode<synchronous>, transform_indices = @transform_8, window_bounds = array<i64: 1, 32>}, {transform_indices = @transform_9, window_bounds = array<i64: 1, 4, 8, 8, 32>}]} {
    %c0 = arith.constant 0 : index
    %c0_0 = arith.constant 0 : index
    %c0_1 = arith.constant 0 : index
    %c0_2 = arith.constant 0 : index
    %c0_3 = arith.constant 0 : index
    %0 = vector.load %arg1[%c0, %c0_0, %c0_1, %c0_2, %c0_3] : memref<1x4x8x8x16xf32, #tpu.memory_space<vmem>>, vector<1x4x8x8x16xf32>
    %1 = vector.shape_cast %0 : vector<1x4x8x8x16xf32> to vector<4x8x8x16xf32>
    %2 = vector.shape_cast %1 : vector<4x8x8x16xf32> to vector<256x16xf32>
    %c0_4 = arith.constant 0 : index
    %c0_5 = arith.constant 0 : index
    %3 = vector.load %arg8[%c0_4, %c0_5] : memref<16x32xf32, #tpu.memory_space<vmem>>, vector<16x32xf32>
    %cst = arith.constant dense<0.000000e+00> : vector<256x32xf32>
    %4 = tpu.matmul %2, %3, %cst {dimension_numbers = #tpu.dot_dimension_numbers<[1], [0], [0], [1], [0, 0, 1, 1], [], []>} : vector<256x16xf32>, vector<16x32xf32>, vector<256x32xf32> -> vector<256x32xf32>
    %c0_6 = arith.constant 0 : index
    %c0_7 = arith.constant 0 : index
    %5 = vector.load %arg9[%c0_6, %c0_7] : memref<1x32xf32, #tpu.memory_space<vmem>>, vector<1x32xf32>
    %6 = vector.broadcast %5 : vector<1x32xf32> to vector<256x32xf32>
    %7 = arith.addf %4, %6 : vector<256x32xf32>
    %c0_8 = arith.constant 0 : index
    %c0_9 = arith.constant 0 : index
    %8 = vector.load %arg2[%c0_8, %c0_9] : memref<16x8xf32, #tpu.memory_space<vmem>>, vector<16x8xf32>
    %cst_10 = arith.constant dense<0.000000e+00> : vector<256x8xf32>
    %9 = tpu.matmul %2, %8, %cst_10 {dimension_numbers = #tpu.dot_dimension_numbers<[1], [0], [0], [1], [0, 0, 1, 1], [], []>} : vector<256x16xf32>, vector<16x8xf32>, vector<256x8xf32> -> vector<256x8xf32>
    %c0_11 = arith.constant 0 : index
    %c0_12 = arith.constant 0 : index
    %10 = vector.load %arg3[%c0_11, %c0_12] : memref<1x8xf32, #tpu.memory_space<vmem>>, vector<1x8xf32>
    %11 = vector.broadcast %10 : vector<1x8xf32> to vector<256x8xf32>
    %12 = arith.addf %9, %11 : vector<256x8xf32>
    %cst_13 = arith.constant 0.000000e+00 : f32
    %13 = vector.broadcast %cst_13 : f32 to vector<256x8xf32>
    %14 = arith.maximumf %12, %13 : vector<256x8xf32>
    %cst_14 = arith.constant 0.000000e+00 : f32
    %15 = vector.broadcast %cst_14 : f32 to vector<6x10x17x8xf32>
    %c0_15 = arith.constant 0 : index
    %c0_16 = arith.constant 0 : index
    %c0_17 = arith.constant 0 : index
    %c0_18 = arith.constant 0 : index
    %16 = vector.load %arg11[%c0_15, %c0_16, %c0_17, %c0_18] : memref<6x10x17x8xf32, #tpu.memory_space<vmem>>, vector<6x10x17x8xf32>
    tpu.vector_store %arg11[%c0_15, %c0_16, %c0_17, %c0_18], %15 {strides = array<i32>} : memref<6x10x17x8xf32, #tpu.memory_space<vmem>>, vector<6x10x17x8xf32>,
    %17 = vector.shape_cast %14 : vector<256x8xf32> to vector<4x8x8x8xf32>
    %c1 = arith.constant 1 : index
    %c1_19 = arith.constant 1 : index
    %c8 = arith.constant 8 : index
    %c0_20 = arith.constant 0 : index
    %18 = vector.load %arg11[%c1, %c1_19, %c8, %c0_20] : memref<6x10x17x8xf32, #tpu.memory_space<vmem>>, vector<4x8x8x8xf32>
    tpu.vector_store %arg11[%c1, %c1_19, %c8, %c0_20], %17 {strides = array<i32>} : memref<6x10x17x8xf32, #tpu.memory_space<vmem>>, vector<4x8x8x8xf32>,
    %c0_21 = arith.constant 0 : index
    %c0_22 = arith.constant 0 : index
    %c0_23 = arith.constant 0 : index
    %c0_24 = arith.constant 0 : index
    %19 = vector.load %arg11[%c0_21, %c0_22, %c0_23, %c0_24] : memref<6x10x17x8xf32, #tpu.memory_space<vmem>>, vector<6x10x17x8xf32>
    %20 = vector.extract_strided_slice %19 {offsets = [0, 0, 7, 0], sizes = [4, 8, 8, 8], strides = [1, 1, 1, 1]} : vector<6x10x17x8xf32> to vector<4x8x8x8xf32>
    %21 = vector.shape_cast %20 : vector<4x8x8x8xf32> to vector<256x8xf32>
    %22 = vector.extract_strided_slice %19 {offsets = [0, 0, 8, 0], sizes = [4, 8, 8, 8], strides = [1, 1, 1, 1]} : vector<6x10x17x8xf32> to vector<4x8x8x8xf32>
    %23 = vector.shape_cast %22 : vector<4x8x8x8xf32> to vector<256x8xf32>
    %24 = vector.extract_strided_slice %19 {offsets = [0, 0, 9, 0], sizes = [4, 8, 8, 8], strides = [1, 1, 1, 1]} : vector<6x10x17x8xf32> to vector<4x8x8x8xf32>
    %25 = vector.shape_cast %24 : vector<4x8x8x8xf32> to vector<256x8xf32>
    %26 = vector.extract_strided_slice %19 {offsets = [0, 1, 7, 0], sizes = [4, 8, 8, 8], strides = [1, 1, 1, 1]} : vector<6x10x17x8xf32> to vector<4x8x8x8xf32>
    %27 = vector.shape_cast %26 : vector<4x8x8x8xf32> to vector<256x8xf32>
    %28 = vector.extract_strided_slice %19 {offsets = [0, 1, 8, 0], sizes = [4, 8, 8, 8], strides = [1, 1, 1, 1]} : vector<6x10x17x8xf32> to vector<4x8x8x8xf32>
    %29 = vector.shape_cast %28 : vector<4x8x8x8xf32> to vector<256x8xf32>
    %30 = vector.extract_strided_slice %19 {offsets = [0, 1, 9, 0], sizes = [4, 8, 8, 8], strides = [1, 1, 1, 1]} : vector<6x10x17x8xf32> to vector<4x8x8x8xf32>
    %31 = vector.shape_cast %30 : vector<4x8x8x8xf32> to vector<256x8xf32>
    %32 = vector.extract_strided_slice %19 {offsets = [0, 2, 7, 0], sizes = [4, 8, 8, 8], strides = [1, 1, 1, 1]} : vector<6x10x17x8xf32> to vector<4x8x8x8xf32>
    %33 = vector.shape_cast %32 : vector<4x8x8x8xf32> to vector<256x8xf32>
    %34 = vector.extract_strided_slice %19 {offsets = [0, 2, 8, 0], sizes = [4, 8, 8, 8], strides = [1, 1, 1, 1]} : vector<6x10x17x8xf32> to vector<4x8x8x8xf32>
    %35 = vector.shape_cast %34 : vector<4x8x8x8xf32> to vector<256x8xf32>
    %36 = vector.extract_strided_slice %19 {offsets = [0, 2, 9, 0], sizes = [4, 8, 8, 8], strides = [1, 1, 1, 1]} : vector<6x10x17x8xf32> to vector<4x8x8x8xf32>
    %37 = vector.shape_cast %36 : vector<4x8x8x8xf32> to vector<256x8xf32>
    %38 = vector.extract_strided_slice %19 {offsets = [1, 0, 7, 0], sizes = [4, 8, 8, 8], strides = [1, 1, 1, 1]} : vector<6x10x17x8xf32> to vector<4x8x8x8xf32>
    %39 = vector.shape_cast %38 : vector<4x8x8x8xf32> to vector<256x8xf32>
    %40 = vector.extract_strided_slice %19 {offsets = [1, 0, 8, 0], sizes = [4, 8, 8, 8], strides = [1, 1, 1, 1]} : vector<6x10x17x8xf32> to vector<4x8x8x8xf32>
    %41 = vector.shape_cast %40 : vector<4x8x8x8xf32> to vector<256x8xf32>
    %42 = vector.extract_strided_slice %19 {offsets = [1, 0, 9, 0], sizes = [4, 8, 8, 8], strides = [1, 1, 1, 1]} : vector<6x10x17x8xf32> to vector<4x8x8x8xf32>
    %43 = vector.shape_cast %42 : vector<4x8x8x8xf32> to vector<256x8xf32>
    %44 = vector.extract_strided_slice %19 {offsets = [1, 1, 7, 0], sizes = [4, 8, 8, 8], strides = [1, 1, 1, 1]} : vector<6x10x17x8xf32> to vector<4x8x8x8xf32>
    %45 = vector.shape_cast %44 : vector<4x8x8x8xf32> to vector<256x8xf32>
    %46 = vector.extract_strided_slice %19 {offsets = [1, 1, 8, 0], sizes = [4, 8, 8, 8], strides = [1, 1, 1, 1]} : vector<6x10x17x8xf32> to vector<4x8x8x8xf32>
    %47 = vector.shape_cast %46 : vector<4x8x8x8xf32> to vector<256x8xf32>
    %48 = vector.extract_strided_slice %19 {offsets = [1, 1, 9, 0], sizes = [4, 8, 8, 8], strides = [1, 1, 1, 1]} : vector<6x10x17x8xf32> to vector<4x8x8x8xf32>
    %49 = vector.shape_cast %48 : vector<4x8x8x8xf32> to vector<256x8xf32>
    %50 = vector.extract_strided_slice %19 {offsets = [1, 2, 7, 0], sizes = [4, 8, 8, 8], strides = [1, 1, 1, 1]} : vector<6x10x17x8xf32> to vector<4x8x8x8xf32>
    %51 = vector.shape_cast %50 : vector<4x8x8x8xf32> to vector<256x8xf32>
    %52 = vector.extract_strided_slice %19 {offsets = [1, 2, 8, 0], sizes = [4, 8, 8, 8], strides = [1, 1, 1, 1]} : vector<6x10x17x8xf32> to vector<4x8x8x8xf32>
    %53 = vector.shape_cast %52 : vector<4x8x8x8xf32> to vector<256x8xf32>
    %54 = vector.extract_strided_slice %19 {offsets = [1, 2, 9, 0], sizes = [4, 8, 8, 8], strides = [1, 1, 1, 1]} : vector<6x10x17x8xf32> to vector<4x8x8x8xf32>
    %55 = vector.shape_cast %54 : vector<4x8x8x8xf32> to vector<256x8xf32>
    %56 = vector.extract_strided_slice %19 {offsets = [2, 0, 7, 0], sizes = [4, 8, 8, 8], strides = [1, 1, 1, 1]} : vector<6x10x17x8xf32> to vector<4x8x8x8xf32>
    %57 = vector.shape_cast %56 : vector<4x8x8x8xf32> to vector<256x8xf32>
    %58 = vector.extract_strided_slice %19 {offsets = [2, 0, 8, 0], sizes = [4, 8, 8, 8], strides = [1, 1, 1, 1]} : vector<6x10x17x8xf32> to vector<4x8x8x8xf32>
    %59 = vector.shape_cast %58 : vector<4x8x8x8xf32> to vector<256x8xf32>
    %60 = vector.extract_strided_slice %19 {offsets = [2, 0, 9, 0], sizes = [4, 8, 8, 8], strides = [1, 1, 1, 1]} : vector<6x10x17x8xf32> to vector<4x8x8x8xf32>
    %61 = vector.shape_cast %60 : vector<4x8x8x8xf32> to vector<256x8xf32>
    %62 = vector.extract_strided_slice %19 {offsets = [2, 1, 7, 0], sizes = [4, 8, 8, 8], strides = [1, 1, 1, 1]} : vector<6x10x17x8xf32> to vector<4x8x8x8xf32>
    %63 = vector.shape_cast %62 : vector<4x8x8x8xf32> to vector<256x8xf32>
    %64 = vector.extract_strided_slice %19 {offsets = [2, 1, 8, 0], sizes = [4, 8, 8, 8], strides = [1, 1, 1, 1]} : vector<6x10x17x8xf32> to vector<4x8x8x8xf32>
    %65 = vector.shape_cast %64 : vector<4x8x8x8xf32> to vector<256x8xf32>
    %66 = vector.extract_strided_slice %19 {offsets = [2, 1, 9, 0], sizes = [4, 8, 8, 8], strides = [1, 1, 1, 1]} : vector<6x10x17x8xf32> to vector<4x8x8x8xf32>
    %67 = vector.shape_cast %66 : vector<4x8x8x8xf32> to vector<256x8xf32>
    %68 = vector.extract_strided_slice %19 {offsets = [2, 2, 7, 0], sizes = [4, 8, 8, 8], strides = [1, 1, 1, 1]} : vector<6x10x17x8xf32> to vector<4x8x8x8xf32>
    %69 = vector.shape_cast %68 : vector<4x8x8x8xf32> to vector<256x8xf32>
    %70 = vector.extract_strided_slice %19 {offsets = [2, 2, 8, 0], sizes = [4, 8, 8, 8], strides = [1, 1, 1, 1]} : vector<6x10x17x8xf32> to vector<4x8x8x8xf32>
    %71 = vector.shape_cast %70 : vector<4x8x8x8xf32> to vector<256x8xf32>
    %72 = vector.extract_strided_slice %19 {offsets = [2, 2, 9, 0], sizes = [4, 8, 8, 8], strides = [1, 1, 1, 1]} : vector<6x10x17x8xf32> to vector<4x8x8x8xf32>
    %73 = vector.shape_cast %72 : vector<4x8x8x8xf32> to vector<256x8xf32>
    %74 = tpu.concatenate %21, %23, %25, %27, %29, %31, %33, %35, %37, %39, %41, %43, %45, %47, %49, %51 in 1 : vector<256x8xf32>, vector<256x8xf32>, vector<256x8xf32>, vector<256x8xf32>, vector<256x8xf32>, vector<256x8xf32>, vector<256x8xf32>, vector<256x8xf32>, vector<256x8xf32>, vector<256x8xf32>, vector<256x8xf32>, vector<256x8xf32>, vector<256x8xf32>, vector<256x8xf32>, vector<256x8xf32>, vector<256x8xf32> -> vector<256x128xf32>
    %75 = tpu.concatenate %53, %55, %57, %59, %61, %63, %65, %67, %69, %71, %73 in 1 : vector<256x8xf32>, vector<256x8xf32>, vector<256x8xf32>, vector<256x8xf32>, vector<256x8xf32>, vector<256x8xf32>, vector<256x8xf32>, vector<256x8xf32>, vector<256x8xf32>, vector<256x8xf32>, vector<256x8xf32> -> vector<256x88xf32>
    %76 = tpu.concatenate %74, %75 in 1 : vector<256x128xf32>, vector<256x88xf32> -> vector<256x216xf32>
    %c0_25 = arith.constant 0 : index
    %c0_26 = arith.constant 0 : index
    %77 = vector.load %arg4[%c0_25, %c0_26] : memref<216x8xf32, #tpu.memory_space<vmem>>, vector<216x8xf32>
    %cst_27 = arith.constant dense<0.000000e+00> : vector<256x8xf32>
    %78 = tpu.matmul %76, %77, %cst_27 {dimension_numbers = #tpu.dot_dimension_numbers<[1], [0], [0], [1], [0, 0, 1, 1], [], []>} : vector<256x216xf32>, vector<216x8xf32>, vector<256x8xf32> -> vector<256x8xf32>
    %c0_28 = arith.constant 0 : index
    %c0_29 = arith.constant 0 : index
    %79 = vector.load %arg5[%c0_28, %c0_29] : memref<1x8xf32, #tpu.memory_space<vmem>>, vector<1x8xf32>
    %80 = vector.broadcast %79 : vector<1x8xf32> to vector<256x8xf32>
    %81 = arith.addf %78, %80 : vector<256x8xf32>
    %cst_30 = arith.constant 0.000000e+00 : f32
    %82 = vector.broadcast %cst_30 : f32 to vector<256x8xf32>
    %83 = arith.maximumf %81, %82 : vector<256x8xf32>
    %c0_31 = arith.constant 0 : index
    %c0_32 = arith.constant 0 : index
    %84 = vector.load %arg6[%c0_31, %c0_32] : memref<8x32xf32, #tpu.memory_space<vmem>>, vector<8x32xf32>
    %cst_33 = arith.constant dense<0.000000e+00> : vector<256x32xf32>
    %85 = tpu.matmul %83, %84, %cst_33 {dimension_numbers = #tpu.dot_dimension_numbers<[1], [0], [0], [1], [0, 0, 1, 1], [], []>} : vector<256x8xf32>, vector<8x32xf32>, vector<256x32xf32> -> vector<256x32xf32>
    %c0_34 = arith.constant 0 : index
    %c0_35 = arith.constant 0 : index
    %86 = vector.load %arg7[%c0_34, %c0_35] : memref<1x32xf32, #tpu.memory_space<vmem>>, vector<1x32xf32>
    %87 = vector.broadcast %86 : vector<1x32xf32> to vector<256x32xf32>
    %88 = arith.addf %85, %87 : vector<256x32xf32>
    %89 = arith.addf %88, %7 : vector<256x32xf32>
    %cst_36 = arith.constant 0.000000e+00 : f32
    %90 = vector.broadcast %cst_36 : f32 to vector<256x32xf32>
    %91 = arith.maximumf %89, %90 : vector<256x32xf32>
    %92 = vector.shape_cast %91 : vector<256x32xf32> to vector<4x8x8x32xf32>
    %c0_37 = arith.constant 0 : index
    %c0_38 = arith.constant 0 : index
    %c0_39 = arith.constant 0 : index
    %c0_40 = arith.constant 0 : index
    %c0_41 = arith.constant 0 : index
    %93 = vector.load %arg10[%c0_37, %c0_38, %c0_39, %c0_40, %c0_41] : memref<1x4x8x8x32xf32, #tpu.memory_space<vmem>>, vector<1x4x8x8x32xf32>
    %94 = vector.shape_cast %93 : vector<1x4x8x8x32xf32> to vector<4x8x8x32xf32>
    %95 = vector.shape_cast %92 : vector<4x8x8x32xf32> to vector<1x4x8x8x32xf32>
    tpu.vector_store %arg10[%c0_37, %c0_38, %c0_39, %c0_40, %c0_41], %95 {strides = array<i32>} : memref<1x4x8x8x32xf32, #tpu.memory_space<vmem>>, vector<1x4x8x8x32xf32>,
    return
  }
  func.func @transform_0(%arg0: i32) -> (i32, i32, i32, i32, i32) {
    %c0_i32 = arith.constant 0 : i32
    %c0_i32_0 = arith.constant 0 : i32
    %c0_i32_1 = arith.constant 0 : i32
    %c0_i32_2 = arith.constant 0 : i32
    %c0_i32_3 = arith.constant 0 : i32
    return %arg0, %c0_i32, %c0_i32_0, %c0_i32_1, %c0_i32_2 : i32, i32, i32, i32, i32
  }
  func.func @transform_1(%arg0: i32) -> (i32, i32) {
    %c0_i32 = arith.constant 0 : i32
    %c0_i32_0 = arith.constant 0 : i32
    %c0_i32_1 = arith.constant 0 : i32
    return %c0_i32, %c0_i32_0 : i32, i32
  }
  func.func @transform_2(%arg0: i32) -> (i32, i32) {
    %c0_i32 = arith.constant 0 : i32
    %c0_i32_0 = arith.constant 0 : i32
    %c0_i32_1 = arith.constant 0 : i32
    return %c0_i32, %c0_i32_0 : i32, i32
  }
  func.func @transform_3(%arg0: i32) -> (i32, i32) {
    %c0_i32 = arith.constant 0 : i32
    %c0_i32_0 = arith.constant 0 : i32
    %c0_i32_1 = arith.constant 0 : i32
    return %c0_i32, %c0_i32_0 : i32, i32
  }
  func.func @transform_4(%arg0: i32) -> (i32, i32) {
    %c0_i32 = arith.constant 0 : i32
    %c0_i32_0 = arith.constant 0 : i32
    %c0_i32_1 = arith.constant 0 : i32
    return %c0_i32, %c0_i32_0 : i32, i32
  }
  func.func @transform_5(%arg0: i32) -> (i32, i32) {
    %c0_i32 = arith.constant 0 : i32
    %c0_i32_0 = arith.constant 0 : i32
    %c0_i32_1 = arith.constant 0 : i32
    return %c0_i32, %c0_i32_0 : i32, i32
  }
  func.func @transform_6(%arg0: i32) -> (i32, i32) {
    %c0_i32 = arith.constant 0 : i32
    %c0_i32_0 = arith.constant 0 : i32
    %c0_i32_1 = arith.constant 0 : i32
    return %c0_i32, %c0_i32_0 : i32, i32
  }
  func.func @transform_7(%arg0: i32) -> (i32, i32) {
    %c0_i32 = arith.constant 0 : i32
    %c0_i32_0 = arith.constant 0 : i32
    %c0_i32_1 = arith.constant 0 : i32
    return %c0_i32, %c0_i32_0 : i32, i32
  }
  func.func @transform_8(%arg0: i32) -> (i32, i32) {
    %c0_i32 = arith.constant 0 : i32
    %c0_i32_0 = arith.constant 0 : i32
    %c0_i32_1 = arith.constant 0 : i32
    return %c0_i32, %c0_i32_0 : i32, i32
  }
  func.func @transform_9(%arg0: i32) -> (i32, i32, i32, i32, i32) {
    %c0_i32 = arith.constant 0 : i32
    %c0_i32_0 = arith.constant 0 : i32
    %c0_i32_1 = arith.constant 0 : i32
    %c0_i32_2 = arith.constant 0 : i32
    %c0_i32_3 = arith.constant 0 : i32
    return %arg0, %c0_i32, %c0_i32_0, %c0_i32_1, %c0_i32_2 : i32, i32, i32, i32, i32
  }
}

</mosaic_0001>

<llo_original>
// kernel: bottleneck_forward.1
$region0: #{bottleneck_forward.1}
  #allocation0 [shape = 'u32[]', space=smem, size = 0x4, offset = 0x4, fixed_abs, tag = 'smem constant byte address 0x4 - core index']
  #allocation1 [shape = 'u32[144,128]{1,0:T(1,128)}', space=vmem, size = 0x12000, scoped, tag = 'internal scratch']
  #allocation2 [shape = 'f32[6,10,17,8]{3,2,1,0:T(8,128)}', space=vmem, size = 0xb4000, scoped, tag = 'scratch operand']
  %s0 = inlined_call_operand.hbm [shape: f32[2,4,8,8,16], index: 0, kind: input, shape index: {}]
  %s1 = inlined_call_operand.vmem [shape: f32[16,8], index: 1, kind: input, shape index: {}]
  %s2 = inlined_call_operand.vmem [shape: f32[1,8], index: 2, kind: input, shape index: {}]
  %s3 = inlined_call_operand.vmem [shape: f32[216,8], index: 3, kind: input, shape index: {}]
  %s4 = inlined_call_operand.vmem [shape: f32[1,8], index: 4, kind: input, shape index: {}]
  %s5 = inlined_call_operand.vmem [shape: f32[8,32], index: 5, kind: input, shape index: {}]
  %s6 = inlined_call_operand.vmem [shape: f32[1,32], index: 6, kind: input, shape index: {}]
  %s7 = inlined_call_operand.vmem [shape: f32[16,32], index: 7, kind: input, shape index: {}]
  %s8 = inlined_call_operand.vmem [shape: f32[1,32], index: 8, kind: input, shape index: {}]
  %s9 = inlined_call_operand.hbm [shape: f32[2,4,8,8,32], index: 9, kind: output, shape index: {}]
  %s10 = sld [smem:[#allocation0]]
  $region73: #{bottleneck_forward.1} parent=0
    _
  %s12 = ssub.s32 1, %s10
  %s13 = scalar_select 0, %s12, %s10
  $region1: #{bottleneck_forward.1} parent=0
    #allocation3 [shape = 'u8[262144]{0}', space=vmem, size = 0x40000, scoped, tag = 'input window, operand 0']
    #allocation4 [shape = 's32[2]{0}', space=sflag, size = 0x8, scoped, tag = 'scoped memory for bottleneck_forward.1']
    #allocation5 [shape = 's32[2]{0}', space=sflag, size = 0x8, scoped, tag = 'scoped memory for bottleneck_forward.1']
    #allocation6 [shape = 'u8[262144]{0}', space=vmem, size = 0x40000, scoped, tag = 'output window, operand 0']
    %14 = vsyncpa [#allocation4], 0
    %s15 = scalar_lea.sflag [#allocation4], 1
    %16 = vsyncpa %s15, 0
    %17 = vsyncpa [#allocation5], 0
    %s18 = scalar_lea.sflag [#allocation5], 1
    %19 = vsyncpa %s18, 0
    loop: start=0, step=1, limit=4
    $region2: #{bottleneck_forward.1} parent=1 // loop_pre_header
      _
    $region3: #{bottleneck_forward.1} parent=1 // loop_header
      %s21 = sphi 0, %s25
      %p22 = scmp.ge.s32.totalorder %s21, 4
      %s31 = sphi 0, %s33
      %s34 = sphi 0, %s31
      %s35 = sphi 0, %s34
      %s51 = sphi 0, %s35
      %s55 = sphi 0, %s55
      %s57 = sphi 0, %s55
      %s58 = sphi 0, %s57
      %s72 = sphi 0, %s58
      %s76 = sphi 0, %s76
      %s78 = sphi 0, %s76
      %s79 = sphi 0, %s78
      %s93 = sphi 0, %s79
      %s97 = sphi 0, %s97
      %s99 = sphi 0, %s97
      %s100 = sphi 0, %s99
      %s114 = sphi 0, %s100
      %s118 = sphi 0, %s118
      %s120 = sphi 0, %s118
      %s121 = sphi 0, %s120
      %s135 = sphi 0, %s121
      %s139 = sphi 0, %s139
      %s141 = sphi 0, %s139
      %s142 = sphi 0, %s141
      %s156 = sphi 0, %s142
      %s160 = sphi 0, %s160
      %s162 = sphi 0, %s160
      %s163 = sphi 0, %s162
      %s177 = sphi 0, %s163
      %s181 = sphi 0, %s181
      %s183 = sphi 0, %s181
      %s184 = sphi 0, %s183
      %s198 = sphi 0, %s184
      %s202 = sphi 0, %s202
      %s204 = sphi 0, %s202
      %s205 = sphi 0, %s204
      %s219 = sphi 0, %s205
      %s225 = sphi 0, %s227
      %s228 = sphi 0, %s225
      %s229 = sphi 0, %s228
      %s245 = sphi 0, %s229
    $region4: #{bottleneck_forward.1} parent=1 // loop_header_branch
      %24 = sbr.rel (%p22) target = $region8
    $region5: #{bottleneck_forward.1} parent=1 // loop_body
      %s26 = ssub.s32 %s21, 1
      %s27 = ssub.s32 %s21, 2
      %s28 = sadd.s32 %s21, 1
      %s29 = ssub.s32 %s21, %s28
      %p30 = scmp.eq.s32.totalorder %s29, 0
      %s32 = sadd.s32 %s31, 1
      %s33 = scalar_select %p30, %s31, %s32
      %p36 = pneg %p30
      %p37 = scmp.eq.s32.totalorder %s21, 1
      %p38 = por %p36, %p37
      %p39 = scmp.ne.s32.totalorder %s31, %s34
      %p40 = scmp.eq.s32.totalorder %s21, 0
      %p41 = por %p39, %p40
      %p42 = scmp.ne.s32.totalorder %s31, %s34
      %p43 = scmp.eq.s32.totalorder %s26, 1
      %p44 = por %p42, %p43
      %p45 = scmp.ne.s32.totalorder %s34, %s35
      %p46 = scmp.eq.s32.totalorder %s26, 0
      %p47 = por %p45, %p46
      %p48 = scmp.ne.s32.totalorder %s34, %s35
      %p49 = scmp.eq.s32.totalorder %s27, 1
      %p50 = por %p48, %p49
      %p52 = scmp.ne.s32.totalorder %s35, %s51
      %p53 = scmp.eq.s32.totalorder %s27, 0
      %p54 = por %p52, %p53
      %s56 = sadd.s32 %s55, 1
      %p59 = scmp.eq.s32.totalorder %s21, 1
      %p60 = scmp.ne.s32.totalorder %s55, %s57
      %p61 = scmp.eq.s32.totalorder %s21, 0
      %p62 = por %p60, %p61
      %p63 = scmp.ne.s32.totalorder %s55, %s57
      %p64 = scmp.eq.s32.totalorder %s26, 1
      %p65 = por %p63, %p64
      %p66 = scmp.ne.s32.totalorder %s57, %s58
      %p67 = scmp.eq.s32.totalorder %s26, 0
      %p68 = por %p66, %p67
      %p69 = scmp.ne.s32.totalorder %s57, %s58
      %p70 = scmp.eq.s32.totalorder %s27, 1
      %p71 = por %p69, %p70
      %p73 = scmp.ne.s32.totalorder %s58, %s72
      %p74 = scmp.eq.s32.totalorder %s27, 0
      %p75 = por %p73, %p74
      %s77 = sadd.s32 %s76, 1
      %p80 = scmp.eq.s32.totalorder %s21, 1
      %p81 = scmp.ne.s32.totalorder %s76, %s78
      %p82 = scmp.eq.s32.totalorder %s21, 0
      %p83 = por %p81, %p82
      %p84 = scmp.ne.s32.totalorder %s76, %s78
      %p85 = scmp.eq.s32.totalorder %s26, 1
      %p86 = por %p84, %p85
      %p87 = scmp.ne.s32.totalorder %s78, %s79
      %p88 = scmp.eq.s32.totalorder %s26, 0
      %p89 = por %p87, %p88
      %p90 = scmp.ne.s32.totalorder %s78, %s79
      %p91 = scmp.eq.s32.totalorder %s27, 1
      %p92 = por %p90, %p91
      %p94 = scmp.ne.s32.totalorder %s79, %s93
      %p95 = scmp.eq.s32.totalorder %s27, 0
      %p96 = por %p94, %p95
      %s98 = sadd.s32 %s97, 1
      %p101 = scmp.eq.s32.totalorder %s21, 1
      %p102 = scmp.ne.s32.totalorder %s97, %s99
      %p103 = scmp.eq.s32.totalorder %s21, 0
      %p104 = por %p102, %p103
      %p105 = scmp.ne.s32.totalorder %s97, %s99
      %p106 = scmp.eq.s32.totalorder %s26, 1
      %p107 = por %p105, %p106
      %p108 = scmp.ne.s32.totalorder %s99, %s100
      %p109 = scmp.eq.s32.totalorder %s26, 0
      %p110 = por %p108, %p109
      %p111 = scmp.ne.s32.totalorder %s99, %s100
      %p112 = scmp.eq.s32.totalorder %s27, 1
      %p113 = por %p111, %p112
      %p115 = scmp.ne.s32.totalorder %s100, %s114
      %p116 = scmp.eq.s32.totalorder %s27, 0
      %p117 = por %p115, %p116
      %s119 = sadd.s32 %s118, 1
      %p122 = scmp.eq.s32.totalorder %s21, 1
      %p123 = scmp.ne.s32.totalorder %s118, %s120
      %p124 = scmp.eq.s32.totalorder %s21, 0
      %p125 = por %p123, %p124
      %p126 = scmp.ne.s32.totalorder %s118, %s120
      %p127 = scmp.eq.s32.totalorder %s26, 1
      %p128 = por %p126, %p127
      %p129 = scmp.ne.s32.totalorder %s120, %s121
      %p130 = scmp.eq.s32.totalorder %s26, 0
      %p131 = por %p129, %p130
      %p132 = scmp.ne.s32.totalorder %s120, %s121
      %p133 = scmp.eq.s32.totalorder %s27, 1
      %p134 = por %p132, %p133
      %p136 = scmp.ne.s32.totalorder %s121, %s135
      %p137 = scmp.eq.s32.totalorder %s27, 0
      %p138 = por %p136, %p137
      %s140 = sadd.s32 %s139, 1
      %p143 = scmp.eq.s32.totalorder %s21, 1
      %p144 = scmp.ne.s32.totalorder %s139, %s141
      %p145 = scmp.eq.s32.totalorder %s21, 0
      %p146 = por %p144, %p145
      %p147 = scmp.ne.s32.totalorder %s139, %s141
      %p148 = scmp.eq.s32.totalorder %s26, 1
      %p149 = por %p147, %p148
      %p150 = scmp.ne.s32.totalorder %s141, %s142
      %p151 = scmp.eq.s32.totalorder %s26, 0
      %p152 = por %p150, %p151
      %p153 = scmp.ne.s32.totalorder %s141, %s142
      %p154 = scmp.eq.s32.totalorder %s27, 1
      %p155 = por %p153, %p154
      %p157 = scmp.ne.s32.totalorder %s142, %s156
      %p158 = scmp.eq.s32.totalorder %s27, 0
      %p159 = por %p157, %p158
      %s161 = sadd.s32 %s160, 1
      %p164 = scmp.eq.s32.totalorder %s21, 1
      %p165 = scmp.ne.s32.totalorder %s160, %s162
      %p166 = scmp.eq.s32.totalorder %s21, 0
      %p167 = por %p165, %p166
      %p168 = scmp.ne.s32.totalorder %s160, %s162
      %p169 = scmp.eq.s32.totalorder %s26, 1
      %p170 = por %p168, %p169
      %p171 = scmp.ne.s32.totalorder %s162, %s163
      %p172 = scmp.eq.s32.totalorder %s26, 0
      %p173 = por %p171, %p172
      %p174 = scmp.ne.s32.totalorder %s162, %s163
      %p175 = scmp.eq.s32.totalorder %s27, 1
      %p176 = por %p174, %p175
      %p178 = scmp.ne.s32.totalorder %s163, %s177
      %p179 = scmp.eq.s32.totalorder %s27, 0
      %p180 = por %p178, %p179
      %s182 = sadd.s32 %s181, 1
      %p185 = scmp.eq.s32.totalorder %s21, 1
      %p186 = scmp.ne.s32.totalorder %s181, %s183
      %p187 = scmp.eq.s32.totalorder %s21, 0
      %p188 = por %p186, %p187
      %p189 = scmp.ne.s32.totalorder %s181, %s183
      %p190 = scmp.eq.s32.totalorder %s26, 1
      %p191 = por %p189, %p190
      %p192 = scmp.ne.s32.totalorder %s183, %s184
      %p193 = scmp.eq.s32.totalorder %s26, 0
      %p194 = por %p192, %p193
      %p195 = scmp.ne.s32.totalorder %s183, %s184
      %p196 = scmp.eq.s32.totalorder %s27, 1
      %p197 = por %p195, %p196
      %p199 = scmp.ne.s32.totalorder %s184, %s198
      %p200 = scmp.eq.s32.totalorder %s27, 0
      %p201 = por %p199, %p200
      %s203 = sadd.s32 %s202, 1
      %p206 = scmp.eq.s32.totalorder %s21, 1
      %p207 = scmp.ne.s32.totalorder %s202, %s204
      %p208 = scmp.eq.s32.totalorder %s21, 0
      %p209 = por %p207, %p208
      %p210 = scmp.ne.s32.totalorder %s202, %s204
      %p211 = scmp.eq.s32.totalorder %s26, 1
      %p212 = por %p210, %p211
      %p213 = scmp.ne.s32.totalorder %s204, %s205
      %p214 = scmp.eq.s32.totalorder %s26, 0
      %p215 = por %p213, %p214
      %p216 = scmp.ne.s32.totalorder %s204, %s205
      %p217 = scmp.eq.s32.totalorder %s27, 1
      %p218 = por %p216, %p217
      %p220 = scmp.ne.s32.totalorder %s205, %s219
      %p221 = scmp.eq.s32.totalorder %s27, 0
      %p222 = por %p220, %p221
      %s223 = ssub.s32 %s21, %s28
      %p224 = scmp.eq.s32.totalorder %s223, 0
      %s226 = sadd.s32 %s225, 1
      %s227 = scalar_select %p224, %s225, %s226
      %p230 = pneg %p224
      %p231 = scmp.eq.s32.totalorder %s21, 1
      %p232 = por %p230, %p231
      %p233 = scmp.ne.s32.totalorder %s225, %s228
      %p234 = scmp.eq.s32.totalorder %s21, 0
      %p235 = por %p233, %p234
      %p236 = scmp.ne.s32.totalorder %s225, %s228
      %p237 = scmp.eq.s32.totalorder %s26, 1
      %p238 = por %p236, %p237
      %p239 = scmp.ne.s32.totalorder %s228, %s229
      %p240 = scmp.eq.s32.totalorder %s26, 0
      %p241 = por %p239, %p240
      %p242 = scmp.ne.s32.totalorder %s228, %s229
      %p243 = scmp.eq.s32.totalorder %s27, 1
      %p244 = por %p242, %p243
      %p246 = scmp.ne.s32.totalorder %s229, %s245
      %p247 = scmp.eq.s32.totalorder %s27, 0
      %p248 = por %p246, %p247
      %p249 = scmp.le.s32.totalorder 1, %s21
      %p250 = scmp.lt.s32.totalorder %s21, 3
      %p251 = pnand %p249, %p250
      %p252 = pneg %p251
      // Predicated region
      $region9: #{bottleneck_forward.1} parent=5 // pred_check
        _
      $region10: #{bottleneck_forward.1} parent=5 // pred_check_branch
        %254 = sbr.rel (%p251) target = $region12
      $region11: #{bottleneck_forward.1} parent=5 // pred_region
        %s255 = ssub.s32 %s21, 1
        // Predicated region
        $region13: #{bottleneck_forward.1} parent=11 // pred_check
          %p256 = pneg %p68
        $region14: #{bottleneck_forward.1} parent=11 // pred_check_branch
          %258 = sbr.rel (%p256) target = $region16
        $region15: #{bottleneck_forward.1} parent=11 // pred_region
          _
        $region16: #{bottleneck_forward.1} parent=11 // pred_fallthru
          _
        // Predicated region
        $region17: #{bottleneck_forward.1} parent=11 // pred_check
          %p259 = pneg %p89
        $region18: #{bottleneck_forward.1} parent=11 // pred_check_branch
          %261 = sbr.rel (%p259) target = $region20
        $region19: #{bottleneck_forward.1} parent=11 // pred_region
          _
        $region20: #{bottleneck_forward.1} parent=11 // pred_fallthru
          _
        // Predicated region
        $region21: #{bottleneck_forward.1} parent=11 // pred_check
          %p262 = pneg %p110
        $region22: #{bottleneck_forward.1} parent=11 // pred_check_branch
          %264 = sbr.rel (%p262) target = $region24
        $region23: #{bottleneck_forward.1} parent=11 // pred_region
          _
        $region24: #{bottleneck_forward.1} parent=11 // pred_fallthru
          _
        // Predicated region
        $region25: #{bottleneck_forward.1} parent=11 // pred_check
          %p265 = pneg %p131
        $region26: #{bottleneck_forward.1} parent=11 // pred_check_branch
          %267 = sbr.rel (%p265) target = $region28
        $region27: #{bottleneck_forward.1} parent=11 // pred_region
          _
        $region28: #{bottleneck_forward.1} parent=11 // pred_fallthru
          _
        // Predicated region
        $region29: #{bottleneck_forward.1} parent=11 // pred_check
          %p268 = pneg %p152
        $region30: #{bottleneck_forward.1} parent=11 // pred_check_branch
          %270 = sbr.rel (%p268) target = $region32
        $region31: #{bottleneck_forward.1} parent=11 // pred_region
          _
        $region32: #{bottleneck_forward.1} parent=11 // pred_fallthru
          _
        // Predicated region
        $region33: #{bottleneck_forward.1} parent=11 // pred_check
          %p271 = pneg %p173
        $region34: #{bottleneck_forward.1} parent=11 // pred_check_branch
          %273 = sbr.rel (%p271) target = $region36
        $region35: #{bottleneck_forward.1} parent=11 // pred_region
          _
        $region36: #{bottleneck_forward.1} parent=11 // pred_fallthru
          _
        // Predicated region
        $region37: #{bottleneck_forward.1} parent=11 // pred_check
          %p274 = pneg %p194
        $region38: #{bottleneck_forward.1} parent=11 // pred_check_branch
          %276 = sbr.rel (%p274) target = $region40
        $region39: #{bottleneck_forward.1} parent=11 // pred_region
          _
        $region40: #{bottleneck_forward.1} parent=11 // pred_fallthru
          _
        // Predicated region
        $region41: #{bottleneck_forward.1} parent=11 // pred_check
          %p277 = pneg %p215
        $region42: #{bottleneck_forward.1} parent=11 // pred_check_branch
          %279 = sbr.rel (%p277) target = $region44
        $region43: #{bottleneck_forward.1} parent=11 // pred_region
          _
        $region44: #{bottleneck_forward.1} parent=11 // pred_fallthru
          _
      $region12: #{bottleneck_forward.1} parent=5 // pred_fallthru
        _
      %p280 = scmp.lt.s32.totalorder %s21, 2
      // Predicated region
      $region45: #{bottleneck_forward.1} parent=5 // pred_check
        %p281 = pneg %p280
      $region46: #{bottleneck_forward.1} parent=5 // pred_check_branch
        %283 = sbr.rel (%p281) target = $region48
      $region47: #{bottleneck_forward.1} parent=5 // pred_region
        // Predicated region
        $region49: #{bottleneck_forward.1} parent=47 // pred_check
          %p284 = pneg %p41
        $region50: #{bottleneck_forward.1} parent=47 // pred_check_branch
          %286 = sbr.rel (%p284) target = $region52
        $region51: #{bottleneck_forward.1} parent=47 // pred_region
          %s287 = sand.u32 %s31, 1
          %s288 = scalar_lea.sflag [#allocation4], %s287
          %s289 = sand.u32 %s31, 1
          %s290 = smul.addr %s289, 256
          %s291 = scalar_lea.vmem [#allocation3], %s290
          %s293 = ssub.s32 4096, 4096
          %294 = vsyncadd %s288, %s293
          %s295 = smul.addr %s21, 32
          %s296 = smul.addr %s295, 128
          %s297 = scalar_lea.hbm %s0, %s296
          %s298 = sshll.u32 %s291, 4
          %s299 = int_to_ptr.vmem [resolvable:$true] %s298
          %304 = dma.hbm_to_vmem [thread:$0]  %s297, 4096, %s299, %s288, 128, 128, 8
        $region52: #{bottleneck_forward.1} parent=47 // pred_fallthru
          _
      $region48: #{bottleneck_forward.1} parent=5 // pred_fallthru
        _
      %p305 = scmp.le.s32.totalorder 1, %s21
      %p306 = scmp.lt.s32.totalorder %s21, 3
      %p307 = pnand %p305, %p306
      %p308 = pneg %p307
      // Predicated region
      $region53: #{bottleneck_forward.1} parent=5 // pred_check
        _
      $region54: #{bottleneck_forward.1} parent=5 // pred_check_branch
        %310 = sbr.rel (%p307) target = $region56
      $region55: #{bottleneck_forward.1} parent=5 // pred_region
        %s311 = ssub.s32 %s21, 1
        %s312 = sand.u32 %s34, 1
        %s313 = scalar_lea.sflag [#allocation4], %s312
        %s314 = sand.u32 %s34, 1
        %s315 = smul.addr %s314, 256
        %s316 = scalar_lea.vmem [#allocation3], %s315
        // Predicated region
        $region57: #{bottleneck_forward.1} parent=55 // pred_check
          %p317 = pneg %p47
        $region58: #{bottleneck_forward.1} parent=55 // pred_check_branch
          %319 = sbr.rel (%p317) target = $region60
        $region59: #{bottleneck_forward.1} parent=55 // pred_region
          %320 = dma.done %s313, 4096
        $region60: #{bottleneck_forward.1} parent=55 // pred_fallthru
          _
        %s321 = sand.u32 %s34, 1
        %s322 = scalar_lea.sflag [#allocation4], %s321
        %s323 = sand.u32 %s34, 1
        %s324 = smul.addr %s323, 256
        %s325 = scalar_lea.vmem [#allocation3], %s324
        %p326 = pneg %p47
        %p327 = pneg %p44
        %p328 = pneg %p68
        %p329 = pneg %p65
        %p330 = pneg %p89
        %p331 = pneg %p86
        %p332 = pneg %p110
        %p333 = pneg %p107
        %p334 = pneg %p131
        %p335 = pneg %p128
        %p336 = pneg %p152
        %p337 = pneg %p149
        %p338 = pneg %p173
        %p339 = pneg %p170
        %p340 = pneg %p194
        %p341 = pneg %p191
        %p342 = pneg %p215
        %p343 = pneg %p212
        %p344 = pneg %p241
        %p345 = pneg %p238
        %s346 = sand.u32 %s228, 1
        %s347 = scalar_lea.sflag [#allocation5], %s346
        %s348 = sand.u32 %s228, 1
        %s349 = smul.addr %s348, 256
        %s350 = scalar_lea.vmem [#allocation6], %s349
        %v351 = vld [vmem:[%s316] sm:$0xff]
        %v352 = vld [vmem:[%s316 + $0x8] sm:$0xff]
        %v353 = vld [vmem:[%s316 + $0x10] sm:$0xff]
        %v354 = vld [vmem:[%s316 + $0x18] sm:$0xff]
        %v355 = vld [vmem:[%s316 + $0x20] sm:$0xff]
        %v356 = vld [vmem:[%s316 + $0x28] sm:$0xff]
        %v357 = vld [vmem:[%s316 + $0x30] sm:$0xff]
        %v358 = vld [vmem:[%s316 + $0x38] sm:$0xff]
        %v359 = vld [vmem:[%s316 + $0x40] sm:$0xff]
        %v360 = vld [vmem:[%s316 + $0x48] sm:$0xff]
        %v361 = vld [vmem:[%s316 + $0x50] sm:$0xff]
        %v362 = vld [vmem:[%s316 + $0x58] sm:$0xff]
        %v363 = vld [vmem:[%s316 + $0x60] sm:$0xff]
        %v364 = vld [vmem:[%s316 + $0x68] sm:$0xff]
        %v365 = vld [vmem:[%s316 + $0x70] sm:$0xff]
        %v366 = vld [vmem:[%s316 + $0x78] sm:$0xff]
        %v367 = vld [vmem:[%s316 + $0x80] sm:$0xff]
        %v368 = vld [vmem:[%s316 + $0x88] sm:$0xff]
        %v369 = vld [vmem:[%s316 + $0x90] sm:$0xff]
        %v370 = vld [vmem:[%s316 + $0x98] sm:$0xff]
        %v371 = vld [vmem:[%s316 + $0xa0] sm:$0xff]
        %v372 = vld [vmem:[%s316 + $0xa8] sm:$0xff]
        %v373 = vld [vmem:[%s316 + $0xb0] sm:$0xff]
        %v374 = vld [vmem:[%s316 + $0xb8] sm:$0xff]
        %v375 = vld [vmem:[%s316 + $0xc0] sm:$0xff]
        %v376 = vld [vmem:[%s316 + $0xc8] sm:$0xff]
        %v377 = vld [vmem:[%s316 + $0xd0] sm:$0xff]
        %v378 = vld [vmem:[%s316 + $0xd8] sm:$0xff]
        %v379 = vld [vmem:[%s316 + $0xe0] sm:$0xff]
        %v380 = vld [vmem:[%s316 + $0xe8] sm:$0xff]
        %v381 = vld [vmem:[%s316 + $0xf0] sm:$0xff]
        %v382 = vld [vmem:[%s316 + $0xf8] sm:$0xff]
        %v383 = vld [vmem:[%s7] sm:$0xff]
        %v384 = vld [vmem:[%s7 + $0x8] sm:$0xff]
        %v385 = vld [vmem:[%s8] sm:$0x1]
        %v387 = vlaneseq
        %v388 = vshrl.u32 %v387, 7
        %v389 = vsub.s32 0, %v388
        %v390 = vrot.slane %v385, %v389
        %vm392 = vcmask 130048
        %v394 = vsel %vm392, %v351, 0
        %v397 = vsel %vm392, %v352, 0
        %v400 = vsel %vm392, %v353, 0
        %v403 = vsel %vm392, %v354, 0
        %v406 = vsel %vm392, %v355, 0
        %v409 = vsel %vm392, %v356, 0
        %v412 = vsel %vm392, %v357, 0
        %v415 = vsel %vm392, %v358, 0
        %v418 = vsel %vm392, %v359, 0
        %v421 = vsel %vm392, %v360, 0
        %v424 = vsel %vm392, %v361, 0
        %v427 = vsel %vm392, %v362, 0
        %v430 = vsel %vm392, %v363, 0
        %v433 = vsel %vm392, %v364, 0
        %v436 = vsel %vm392, %v365, 0
        %v439 = vsel %vm392, %v366, 0
        %v442 = vsel %vm392, %v367, 0
        %v445 = vsel %vm392, %v368, 0
        %v448 = vsel %vm392, %v369, 0
        %v451 = vsel %vm392, %v370, 0
        %v454 = vsel %vm392, %v371, 0
        %v457 = vsel %vm392, %v372, 0
        %v460 = vsel %vm392, %v373, 0
        %v463 = vsel %vm392, %v374, 0
        %v466 = vsel %vm392, %v375, 0
        %v469 = vsel %vm392, %v376, 0
        %v472 = vsel %vm392, %v377, 0
        %v475 = vsel %vm392, %v378, 0
        %v478 = vsel %vm392, %v379, 0
        %v481 = vsel %vm392, %v380, 0
        %v484 = vsel %vm392, %v381, 0
        %v487 = vsel %vm392, %v382, 0
        %489 = vmatprep.subr.mxu0 0.0
        %490 = vmatpush1.msra.mxu0 %v383
        %491 = vmatprep.subr.mxu0 0.0
        %492 = vmatpush1.msra.mxu0 %v384
        %493 = vmatprep.subr.mxu0 0.0
        %494 = vmatpush1.msra.mxu0 0.0
        %495 = vmatprep.subr.mxu0 0.0
        %496 = vmatpush1.msra.mxu0 0.0
        %497 = vmatprep.subr.mxu0 0.0
        %498 = vmatpush1.msra.mxu0 0.0
        %499 = vmatprep.subr.mxu0 0.0
        %500 = vmatpush1.msra.mxu0 0.0
        %501 = vmatprep.subr.mxu0 0.0
        %502 = vmatpush1.msra.mxu0 0.0
        %503 = vmatprep.subr.mxu0 0.0
        %504 = vmatpush1.msra.mxu0 0.0
        %505 = vmatprep.subr.mxu0 0.0
        %506 = vmatpush1.msra.mxu0 0.0
        %507 = vmatprep.subr.mxu0 0.0
        %508 = vmatpush1.msra.mxu0 0.0
        %509 = vmatprep.subr.mxu0 0.0
        %510 = vmatpush1.msra.mxu0 0.0
        %511 = vmatprep.subr.mxu0 0.0
        %512 = vmatpush1.msra.mxu0 0.0
        %513 = vmatprep.subr.mxu0 0.0
        %514 = vmatpush1.msra.mxu0 0.0
        %515 = vmatprep.subr.mxu0 0.0
        %516 = vmatpush1.msra.mxu0 0.0
        %517 = vmatprep.subr.mxu0 0.0
        %518 = vmatpush1.msra.mxu0 0.0
        %519 = vmatprep.subr.mxu0 0.0
        %520 = vmatpush1.msra.mxu0 0.0
        %521 = vmatprep.subr.mxu0 0.0
        %522 = vmatpush1.msra.mxu0 0.0
        %523 = vmatprep.subr.mxu0 0.0
        %524 = vmatpush1.msra.mxu0 0.0
        %525 = vmatprep.subr.mxu0 0.0
        %526 = vmatpush1.msra.mxu0 0.0
        %527 = vmatprep.subr.mxu0 0.0
        %528 = vmatpush1.msra.mxu0 0.0
        %529 = vmatprep.subr.mxu0 0.0
        %530 = vmatpush1.msra.mxu0 0.0
        %531 = vmatprep.subr.mxu0 0.0
        %532 = vmatpush1.msra.mxu0 0.0
        %533 = vmatprep.subr.mxu0 0.0
        %534 = vmatpush1.msra.mxu0 0.0
        %535 = vmatprep.subr.mxu0 0.0
        %536 = vmatpush1.msra.mxu0 0.0
        %537 = vmatprep.subr.mxu0 0.0
        %538 = vmatpush1.msra.mxu0 0.0
        %539 = vmatprep.subr.mxu0 0.0
        %540 = vmatpush1.msra.mxu0 0.0
        %541 = vmatprep.subr.mxu0 0.0
        %542 = vmatpush1.msra.mxu0 0.0
        %543 = vmatprep.subr.mxu0 0.0
        %544 = vmatpush1.msra.mxu0 0.0
        %545 = vmatprep.subr.mxu0 0.0
        %546 = vmatpush1.msra.mxu0 0.0
        %547 = vmatprep.subr.mxu0 0.0
        %548 = vmatpush1.msra.mxu0 0.0
        %549 = vmatprep.subr.mxu0 0.0
        %550 = vmatpush1.msra.mxu0 0.0
        %551 = vmatprep.subr.mxu0 0.0
        %552 = vmatpush1.msra.mxu0 0.0
        %553 = vmatprep.mubr.f32.mxu0 0.0
        %554 = vmatmul.mubr.f32.gmra.mrb[0].mxu0 %v394
        %v555 = vpop.f32.mrb[0].mxu0
        %v556 = vadd.f32 %v390, %v555
        %v557 = vpop.f32.mrb[0].mxu0
        %558 = vmatprep.mubr.f32.mxu0 0.0
        %559 = vmatmul.mubr.f32.gmra.mrb[0].mxu0 %v397
        %v560 = vpop.f32.mrb[0].mxu0
        %v561 = vadd.f32 %v390, %v560
        %v562 = vpop.f32.mrb[0].mxu0
        %563 = vmatprep.mubr.f32.mxu0 0.0
        %564 = vmatmul.mubr.f32.gmra.mrb[0].mxu0 %v400
        %v565 = vpop.f32.mrb[0].mxu0
        %v566 = vadd.f32 %v390, %v565
        %v567 = vpop.f32.mrb[0].mxu0
        %568 = vmatprep.mubr.f32.mxu0 0.0
        %569 = vmatmul.mubr.f32.gmra.mrb[0].mxu0 %v403
        %v570 = vpop.f32.mrb[0].mxu0
        %v571 = vadd.f32 %v390, %v570
        %v572 = vpop.f32.mrb[0].mxu0
        %573 = vmatprep.mubr.f32.mxu0 0.0
        %574 = vmatmul.mubr.f32.gmra.mrb[0].mxu0 %v406
        %v575 = vpop.f32.mrb[0].mxu0
        %v576 = vadd.f32 %v390, %v575
        %v577 = vpop.f32.mrb[0].mxu0
        %578 = vmatprep.mubr.f32.mxu0 0.0
        %579 = vmatmul.mubr.f32.gmra.mrb[0].mxu0 %v409
        %v580 = vpop.f32.mrb[0].mxu0
        %v581 = vadd.f32 %v390, %v580
        %v582 = vpop.f32.mrb[0].mxu0
        %583 = vmatprep.mubr.f32.mxu0 0.0
        %584 = vmatmul.mubr.f32.gmra.mrb[0].mxu0 %v412
        %v585 = vpop.f32.mrb[0].mxu0
        %v586 = vadd.f32 %v390, %v585
        %v587 = vpop.f32.mrb[0].mxu0
        %588 = vmatprep.mubr.f32.mxu0 0.0
        %589 = vmatmul.mubr.f32.gmra.mrb[0].mxu0 %v415
        %v590 = vpop.f32.mrb[0].mxu0
        %v591 = vadd.f32 %v390, %v590
        %v592 = vpop.f32.mrb[0].mxu0
        %593 = vmatprep.mubr.f32.mxu0 0.0
        %594 = vmatmul.mubr.f32.gmra.mrb[0].mxu0 %v418
        %v595 = vpop.f32.mrb[0].mxu0
        %v596 = vadd.f32 %v390, %v595
        %v597 = vpop.f32.mrb[0].mxu0
        %598 = vmatprep.mubr.f32.mxu0 0.0
        %599 = vmatmul.mubr.f32.gmra.mrb[0].mxu0 %v421
        %v600 = vpop.f32.mrb[0].mxu0
        %v601 = vadd.f32 %v390, %v600
        %v602 = vpop.f32.mrb[0].mxu0
        %603 = vmatprep.mubr.f32.mxu0 0.0
        %604 = vmatmul.mubr.f32.gmra.mrb[0].mxu0 %v424
        %v605 = vpop.f32.mrb[0].mxu0
        %v606 = vadd.f32 %v390, %v605
        %v607 = vpop.f32.mrb[0].mxu0
        %608 = vmatprep.mubr.f32.mxu0 0.0
        %609 = vmatmul.mubr.f32.gmra.mrb[0].mxu0 %v427
        %v610 = vpop.f32.mrb[0].mxu0
        %v611 = vadd.f32 %v390, %v610
        %v612 = vpop.f32.mrb[0].mxu0
        %613 = vmatprep.mubr.f32.mxu0 0.0
        %614 = vmatmul.mubr.f32.gmra.mrb[0].mxu0 %v430
        %v615 = vpop.f32.mrb[0].mxu0
        %v616 = vadd.f32 %v390, %v615
        %v617 = vpop.f32.mrb[0].mxu0
        %618 = vmatprep.mubr.f32.mxu0 0.0
        %619 = vmatmul.mubr.f32.gmra.mrb[0].mxu0 %v433
        %v620 = vpop.f32.mrb[0].mxu0
        %v621 = vadd.f32 %v390, %v620
        %v622 = vpop.f32.mrb[0].mxu0
        %623 = vmatprep.mubr.f32.mxu0 0.0
        %624 = vmatmul.mubr.f32.gmra.mrb[0].mxu0 %v436
        %v625 = vpop.f32.mrb[0].mxu0
        %v626 = vadd.f32 %v390, %v625
        %v627 = vpop.f32.mrb[0].mxu0
        %628 = vmatprep.mubr.f32.mxu0 0.0
        %629 = vmatmul.mubr.f32.gmra.mrb[0].mxu0 %v439
        %v630 = vpop.f32.mrb[0].mxu0
        %v631 = vadd.f32 %v390, %v630
        %v632 = vpop.f32.mrb[0].mxu0
        %633 = vmatprep.mubr.f32.mxu0 0.0
        %634 = vmatmul.mubr.f32.gmra.mrb[0].mxu0 %v442
        %v635 = vpop.f32.mrb[0].mxu0
        %v636 = vadd.f32 %v390, %v635
        %v637 = vpop.f32.mrb[0].mxu0
        %638 = vmatprep.mubr.f32.mxu0 0.0
        %639 = vmatmul.mubr.f32.gmra.mrb[0].mxu0 %v445
        %v640 = vpop.f32.mrb[0].mxu0
        %v641 = vadd.f32 %v390, %v640
        %v642 = vpop.f32.mrb[0].mxu0
        %643 = vmatprep.mubr.f32.mxu0 0.0
        %644 = vmatmul.mubr.f32.gmra.mrb[0].mxu0 %v448
        %v645 = vpop.f32.mrb[0].mxu0
        %v646 = vadd.f32 %v390, %v645
        %v647 = vpop.f32.mrb[0].mxu0
        %648 = vmatprep.mubr.f32.mxu0 0.0
        %649 = vmatmul.mubr.f32.gmra.mrb[0].mxu0 %v451
        %v650 = vpop.f32.mrb[0].mxu0
        %v651 = vadd.f32 %v390, %v650
        %v652 = vpop.f32.mrb[0].mxu0
        %653 = vmatprep.mubr.f32.mxu0 0.0
        %654 = vmatmul.mubr.f32.gmra.mrb[0].mxu0 %v454
        %v655 = vpop.f32.mrb[0].mxu0
        %v656 = vadd.f32 %v390, %v655
        %v657 = vpop.f32.mrb[0].mxu0
        %658 = vmatprep.mubr.f32.mxu0 0.0
        %659 = vmatmul.mubr.f32.gmra.mrb[0].mxu0 %v457
        %v660 = vpop.f32.mrb[0].mxu0
        %v661 = vadd.f32 %v390, %v660
        %v662 = vpop.f32.mrb[0].mxu0
        %663 = vmatprep.mubr.f32.mxu0 0.0
        %664 = vmatmul.mubr.f32.gmra.mrb[0].mxu0 %v460
        %v665 = vpop.f32.mrb[0].mxu0
        %v666 = vadd.f32 %v390, %v665
        %v667 = vpop.f32.mrb[0].mxu0
        %668 = vmatprep.mubr.f32.mxu0 0.0
        %669 = vmatmul.mubr.f32.gmra.mrb[0].mxu0 %v463
        %v670 = vpop.f32.mrb[0].mxu0
        %v671 = vadd.f32 %v390, %v670
        %v672 = vpop.f32.mrb[0].mxu0
        %673 = vmatprep.mubr.f32.mxu0 0.0
        %674 = vmatmul.mubr.f32.gmra.mrb[0].mxu0 %v466
        %v675 = vpop.f32.mrb[0].mxu0
        %v676 = vadd.f32 %v390, %v675
        %v677 = vpop.f32.mrb[0].mxu0
        %678 = vmatprep.mubr.f32.mxu0 0.0
        %679 = vmatmul.mubr.f32.gmra.mrb[0].mxu0 %v469
        %v680 = vpop.f32.mrb[0].mxu0
        %v681 = vadd.f32 %v390, %v680
        %v682 = vpop.f32.mrb[0].mxu0
        %683 = vmatprep.mubr.f32.mxu0 0.0
        %684 = vmatmul.mubr.f32.gmra.mrb[0].mxu0 %v472
        %v685 = vpop.f32.mrb[0].mxu0
        %v686 = vadd.f32 %v390, %v685
        %v687 = vpop.f32.mrb[0].mxu0
        %688 = vmatprep.mubr.f32.mxu0 0.0
        %689 = vmatmul.mubr.f32.gmra.mrb[0].mxu0 %v475
        %v690 = vpop.f32.mrb[0].mxu0
        %v691 = vadd.f32 %v390, %v690
        %v692 = vpop.f32.mrb[0].mxu0
        %693 = vmatprep.mubr.f32.mxu0 0.0
        %694 = vmatmul.mubr.f32.gmra.mrb[0].mxu0 %v478
        %v695 = vpop.f32.mrb[0].mxu0
        %v696 = vadd.f32 %v390, %v695
        %v697 = vpop.f32.mrb[0].mxu0
        %698 = vmatprep.mubr.f32.mxu0 0.0
        %699 = vmatmul.mubr.f32.gmra.mrb[0].mxu0 %v481
        %v700 = vpop.f32.mrb[0].mxu0
        %v701 = vadd.f32 %v390, %v700
        %v702 = vpop.f32.mrb[0].mxu0
        %703 = vmatprep.mubr.f32.mxu0 0.0
        %704 = vmatmul.mubr.f32.gmra.mrb[0].mxu0 %v484
        %v705 = vpop.f32.mrb[0].mxu0
        %v706 = vadd.f32 %v390, %v705
        %v707 = vpop.f32.mrb[0].mxu0
        %708 = vmatprep.mubr.f32.mxu0 0.0
        %709 = vmatmul.mubr.f32.gmra.mrb[0].mxu0 %v487
        %v710 = vpop.f32.mrb[0].mxu0
        %v711 = vadd.f32 %v390, %v710
        %v712 = vpop.f32.mrb[0].mxu0
        %713 = vdwg.mxu0
        %v714 = vld [vmem:[%s1] sm:$0xff]
        %v715 = vld [vmem:[%s1 + $0x8] sm:$0xff]
        %v716 = vld [vmem:[%s2] sm:$0x1]
        %v718 = vlaneseq
        %v719 = vshrl.u32 %v718, 7
        %v720 = vsub.s32 0, %v719
        %v721 = vrot.slane %v716, %v720
        %723 = vmatprep.subr.mxu0 0.0
        %724 = vmatpush1.msra.mxu0 %v714
        %725 = vmatprep.subr.mxu0 0.0
        %726 = vmatpush1.msra.mxu0 %v715
        %727 = vmatprep.subr.mxu0 0.0
        %728 = vmatpush1.msra.mxu0 0.0
        %729 = vmatprep.subr.mxu0 0.0
        %730 = vmatpush1.msra.mxu0 0.0
        %731 = vmatprep.subr.mxu0 0.0
        %732 = vmatpush1.msra.mxu0 0.0
        %733 = vmatprep.subr.mxu0 0.0
        %734 = vmatpush1.msra.mxu0 0.0
        %735 = vmatprep.subr.mxu0 0.0
        %736 = vmatpush1.msra.mxu0 0.0
        %737 = vmatprep.subr.mxu0 0.0
        %738 = vmatpush1.msra.mxu0 0.0
        %739 = vmatprep.subr.mxu0 0.0
        %740 = vmatpush1.msra.mxu0 0.0
        %741 = vmatprep.subr.mxu0 0.0
        %742 = vmatpush1.msra.mxu0 0.0
        %743 = vmatprep.subr.mxu0 0.0
        %744 = vmatpush1.msra.mxu0 0.0
        %745 = vmatprep.subr.mxu0 0.0
        %746 = vmatpush1.msra.mxu0 0.0
        %747 = vmatprep.subr.mxu0 0.0
        %748 = vmatpush1.msra.mxu0 0.0
        %749 = vmatprep.subr.mxu0 0.0
        %750 = vmatpush1.msra.mxu0 0.0
        %751 = vmatprep.subr.mxu0 0.0
        %752 = vmatpush1.msra.mxu0 0.0
        %753 = vmatprep.subr.mxu0 0.0
        %754 = vmatpush1.msra.mxu0 0.0
        %755 = vmatprep.subr.mxu0 0.0
        %756 = vmatpush1.msra.mxu0 0.0
        %757 = vmatprep.subr.mxu0 0.0
        %758 = vmatpush1.msra.mxu0 0.0
        %759 = vmatprep.subr.mxu0 0.0
        %760 = vmatpush1.msra.mxu0 0.0
        %761 = vmatprep.subr.mxu0 0.0
        %762 = vmatpush1.msra.mxu0 0.0
        %763 = vmatprep.subr.mxu0 0.0
        %764 = vmatpush1.msra.mxu0 0.0
        %765 = vmatprep.subr.mxu0 0.0
        %766 = vmatpush1.msra.mxu0 0.0
        %767 = vmatprep.subr.mxu0 0.0
        %768 = vmatpush1.msra.mxu0 0.0
        %769 = vmatprep.subr.mxu0 0.0
        %770 = vmatpush1.msra.mxu0 0.0
        %771 = vmatprep.subr.mxu0 0.0
        %772 = vmatpush1.msra.mxu0 0.0
        %773 = vmatprep.subr.mxu0 0.0
        %774 = vmatpush1.msra.mxu0 0.0
        %775 = vmatprep.subr.mxu0 0.0
        %776 = vmatpush1.msra.mxu0 0.0
        %777 = vmatprep.subr.mxu0 0.0
        %778 = vmatpush1.msra.mxu0 0.0
        %779 = vmatprep.subr.mxu0 0.0
        %780 = vmatpush1.msra.mxu0 0.0
        %781 = vmatprep.subr.mxu0 0.0
        %782 = vmatpush1.msra.mxu0 0.0
        %783 = vmatprep.subr.mxu0 0.0
        %784 = vmatpush1.msra.mxu0 0.0
        %785 = vmatprep.subr.mxu0 0.0
        %786 = vmatpush1.msra.mxu0 0.0
        %787 = vmatprep.mubr.f32.mxu0 0.0
        %788 = vmatmul.mubr.f32.gmra.mrb[0].mxu0 %v394
        %v789 = vpop.f32.mrb[0].mxu0
        %v790 = vadd.f32 %v721, %v789
        %v791 = vpop.f32.mrb[0].mxu0
        %792 = vmatprep.mubr.f32.mxu0 0.0
        %793 = vmatmul.mubr.f32.gmra.mrb[0].mxu0 %v397
        %v794 = vpop.f32.mrb[0].mxu0
        %v795 = vadd.f32 %v721, %v794
        %v796 = vpop.f32.mrb[0].mxu0
        %797 = vmatprep.mubr.f32.mxu0 0.0
        %798 = vmatmul.mubr.f32.gmra.mrb[0].mxu0 %v400
        %v799 = vpop.f32.mrb[0].mxu0
        %v800 = vadd.f32 %v721, %v799
        %v801 = vpop.f32.mrb[0].mxu0
        %802 = vmatprep.mubr.f32.mxu0 0.0
        %803 = vmatmul.mubr.f32.gmra.mrb[0].mxu0 %v403
        %v804 = vpop.f32.mrb[0].mxu0
        %v805 = vadd.f32 %v721, %v804
        %v806 = vpop.f32.mrb[0].mxu0
        %807 = vmatprep.mubr.f32.mxu0 0.0
        %808 = vmatmul.mubr.f32.gmra.mrb[0].mxu0 %v406
        %v809 = vpop.f32.mrb[0].mxu0
        %v810 = vadd.f32 %v721, %v809
        %v811 = vpop.f32.mrb[0].mxu0
        %812 = vmatprep.mubr.f32.mxu0 0.0
        %813 = vmatmul.mubr.f32.gmra.mrb[0].mxu0 %v409
        %v814 = vpop.f32.mrb[0].mxu0
        %v815 = vadd.f32 %v721, %v814
        %v816 = vpop.f32.mrb[0].mxu0
        %817 = vmatprep.mubr.f32.mxu0 0.0
        %818 = vmatmul.mubr.f32.gmra.mrb[0].mxu0 %v412
        %v819 = vpop.f32.mrb[0].mxu0
        %v820 = vadd.f32 %v721, %v819
        %v821 = vpop.f32.mrb[0].mxu0
        %822 = vmatprep.mubr.f32.mxu0 0.0
        %823 = vmatmul.mubr.f32.gmra.mrb[0].mxu0 %v415
        %v824 = vpop.f32.mrb[0].mxu0
        %v825 = vadd.f32 %v721, %v824
        %v826 = vpop.f32.mrb[0].mxu0
        %827 = vmatprep.mubr.f32.mxu0 0.0
        %828 = vmatmul.mubr.f32.gmra.mrb[0].mxu0 %v418
        %v829 = vpop.f32.mrb[0].mxu0
        %v830 = vadd.f32 %v721, %v829
        %v831 = vpop.f32.mrb[0].mxu0
        %832 = vmatprep.mubr.f32.mxu0 0.0
        %833 = vmatmul.mubr.f32.gmra.mrb[0].mxu0 %v421
        %v834 = vpop.f32.mrb[0].mxu0
        %v835 = vadd.f32 %v721, %v834
        %v836 = vpop.f32.mrb[0].mxu0
        %837 = vmatprep.mubr.f32.mxu0 0.0
        %838 = vmatmul.mubr.f32.gmra.mrb[0].mxu0 %v424
        %v839 = vpop.f32.mrb[0].mxu0
        %v840 = vadd.f32 %v721, %v839
        %v841 = vpop.f32.mrb[0].mxu0
        %842 = vmatprep.mubr.f32.mxu0 0.0
        %843 = vmatmul.mubr.f32.gmra.mrb[0].mxu0 %v427
        %v844 = vpop.f32.mrb[0].mxu0
        %v845 = vadd.f32 %v721, %v844
        %v846 = vpop.f32.mrb[0].mxu0
        %847 = vmatprep.mubr.f32.mxu0 0.0
        %848 = vmatmul.mubr.f32.gmra.mrb[0].mxu0 %v430
        %v849 = vpop.f32.mrb[0].mxu0
        %v850 = vadd.f32 %v721, %v849
        %v851 = vpop.f32.mrb[0].mxu0
        %852 = vmatprep.mubr.f32.mxu0 0.0
        %853 = vmatmul.mubr.f32.gmra.mrb[0].mxu0 %v433
        %v854 = vpop.f32.mrb[0].mxu0
        %v855 = vadd.f32 %v721, %v854
        %v856 = vpop.f32.mrb[0].mxu0
        %857 = vmatprep.mubr.f32.mxu0 0.0
        %858 = vmatmul.mubr.f32.gmra.mrb[0].mxu0 %v436
        %v859 = vpop.f32.mrb[0].mxu0
        %v860 = vadd.f32 %v721, %v859
        %v861 = vpop.f32.mrb[0].mxu0
        %862 = vmatprep.mubr.f32.mxu0 0.0
        %863 = vmatmul.mubr.f32.gmra.mrb[0].mxu0 %v439
        %v864 = vpop.f32.mrb[0].mxu0
        %v865 = vadd.f32 %v721, %v864
        %v866 = vpop.f32.mrb[0].mxu0
        %867 = vmatprep.mubr.f32.mxu0 0.0
        %868 = vmatmul.mubr.f32.gmra.mrb[0].mxu0 %v442
        %v869 = vpop.f32.mrb[0].mxu0
        %v870 = vadd.f32 %v721, %v869
        %v871 = vpop.f32.mrb[0].mxu0
        %872 = vmatprep.mubr.f32.mxu0 0.0
        %873 = vmatmul.mubr.f32.gmra.mrb[0].mxu0 %v445
        %v874 = vpop.f32.mrb[0].mxu0
        %v875 = vadd.f32 %v721, %v874
        %v876 = vpop.f32.mrb[0].mxu0
        %877 = vmatprep.mubr.f32.mxu0 0.0
        %878 = vmatmul.mubr.f32.gmra.mrb[0].mxu0 %v448
        %v879 = vpop.f32.mrb[0].mxu0
        %v880 = vadd.f32 %v721, %v879
        %v881 = vpop.f32.mrb[0].mxu0
        %882 = vmatprep.mubr.f32.mxu0 0.0
        %883 = vmatmul.mubr.f32.gmra.mrb[0].mxu0 %v451
        %v884 = vpop.f32.mrb[0].mxu0
        %v885 = vadd.f32 %v721, %v884
        %v886 = vpop.f32.mrb[0].mxu0
        %887 = vmatprep.mubr.f32.mxu0 0.0
        %888 = vmatmul.mubr.f32.gmra.mrb[0].mxu0 %v454
        %v889 = vpop.f32.mrb[0].mxu0
        %v890 = vadd.f32 %v721, %v889
        %v891 = vpop.f32.mrb[0].mxu0
        %892 = vmatprep.mubr.f32.mxu0 0.0
        %893 = vmatmul.mubr.f32.gmra.mrb[0].mxu0 %v457
        %v894 = vpop.f32.mrb[0].mxu0
        %v895 = vadd.f32 %v721, %v894
        %v896 = vpop.f32.mrb[0].mxu0
        %897 = vmatprep.mubr.f32.mxu0 0.0
        %898 = vmatmul.mubr.f32.gmra.mrb[0].mxu0 %v460
        %v899 = vpop.f32.mrb[0].mxu0
        %v900 = vadd.f32 %v721, %v899
        %v901 = vpop.f32.mrb[0].mxu0
        %902 = vmatprep.mubr.f32.mxu0 0.0
        %903 = vmatmul.mubr.f32.gmra.mrb[0].mxu0 %v463
        %v904 = vpop.f32.mrb[0].mxu0
        %v905 = vadd.f32 %v721, %v904
        %v906 = vpop.f32.mrb[0].mxu0
        %907 = vmatprep.mubr.f32.mxu0 0.0
        %908 = vmatmul.mubr.f32.gmra.mrb[0].mxu0 %v466
        %v909 = vpop.f32.mrb[0].mxu0
        %v910 = vadd.f32 %v721, %v909
        %v911 = vpop.f32.mrb[0].mxu0
        %912 = vmatprep.mubr.f32.mxu0 0.0
        %913 = vmatmul.mubr.f32.gmra.mrb[0].mxu0 %v469
        %v914 = vpop.f32.mrb[0].mxu0
        %v915 = vadd.f32 %v721, %v914
        %v916 = vpop.f32.mrb[0].mxu0
        %917 = vmatprep.mubr.f32.mxu0 0.0
        %918 = vmatmul.mubr.f32.gmra.mrb[0].mxu0 %v472
        %v919 = vpop.f32.mrb[0].mxu0
        %v920 = vadd.f32 %v721, %v919
        %v921 = vpop.f32.mrb[0].mxu0
        %922 = vmatprep.mubr.f32.mxu0 0.0
        %923 = vmatmul.mubr.f32.gmra.mrb[0].mxu0 %v475
        %v924 = vpop.f32.mrb[0].mxu0
        %v925 = vadd.f32 %v721, %v924
        %v926 = vpop.f32.mrb[0].mxu0
        %927 = vmatprep.mubr.f32.mxu0 0.0
        %928 = vmatmul.mubr.f32.gmra.mrb[0].mxu0 %v478
        %v929 = vpop.f32.mrb[0].mxu0
        %v930 = vadd.f32 %v721, %v929
        %v931 = vpop.f32.mrb[0].mxu0
        %932 = vmatprep.mubr.f32.mxu0 0.0
        %933 = vmatmul.mubr.f32.gmra.mrb[0].mxu0 %v481
        %v934 = vpop.f32.mrb[0].mxu0
        %v935 = vadd.f32 %v721, %v934
        %v936 = vpop.f32.mrb[0].mxu0
        %937 = vmatprep.mubr.f32.mxu0 0.0
        %938 = vmatmul.mubr.f32.gmra.mrb[0].mxu0 %v484
        %v939 = vpop.f32.mrb[0].mxu0
        %v940 = vadd.f32 %v721, %v939
        %v941 = vpop.f32.mrb[0].mxu0
        %942 = vmatprep.mubr.f32.mxu0 0.0
        %943 = vmatmul.mubr.f32.gmra.mrb[0].mxu0 %v487
        %v944 = vpop.f32.mrb[0].mxu0
        %v945 = vadd.f32 %v721, %v944
        %v946 = vpop.f32.mrb[0].mxu0
        %947 = vdwg.mxu0
        %v948 = vmax.f32 %v790, 0.0
        %v949 = vmax.f32 %v795, 0.0
        %v950 = vmax.f32 %v800, 0.0
        %v951 = vmax.f32 %v805, 0.0
        %v952 = vmax.f32 %v810, 0.0
        %v953 = vmax.f32 %v815, 0.0
        %v954 = vmax.f32 %v820, 0.0
        %v955 = vmax.f32 %v825, 0.0
        %v956 = vmax.f32 %v830, 0.0
        %v957 = vmax.f32 %v835, 0.0
        %v958 = vmax.f32 %v840, 0.0
        %v959 = vmax.f32 %v845, 0.0
        %v960 = vmax.f32 %v850, 0.0
        %v961 = vmax.f32 %v855, 0.0
        %v962 = vmax.f32 %v860, 0.0
        %v963 = vmax.f32 %v865, 0.0
        %v964 = vmax.f32 %v870, 0.0
        %v965 = vmax.f32 %v875, 0.0
        %v966 = vmax.f32 %v880, 0.0
        %v967 = vmax.f32 %v885, 0.0
        %v968 = vmax.f32 %v890, 0.0
        %v969 = vmax.f32 %v895, 0.0
        %v970 = vmax.f32 %v900, 0.0
        %v971 = vmax.f32 %v905, 0.0
        %v972 = vmax.f32 %v910, 0.0
        %v973 = vmax.f32 %v915, 0.0
        %v974 = vmax.f32 %v920, 0.0
        %v975 = vmax.f32 %v925, 0.0
        %v976 = vmax.f32 %v930, 0.0
        %v977 = vmax.f32 %v935, 0.0
        %v978 = vmax.f32 %v940, 0.0
        %v979 = vmax.f32 %v945, 0.0
        %vm980 = vcmask 64512
        %981 = vst.msk [vmem:[#allocation2] sm:$0xff] %vm980, 0.0
        %982 = vst.msk [vmem:[#allocation2 + $0x8] sm:$0xff] %vm980, 0.0
        %vm983 = vcmask 57344
        %984 = vst.msk [vmem:[#allocation2 + $0x10] sm:$0x1] %vm983, 0.0
        %985 = vst.msk [vmem:[#allocation2 + $0x18] sm:$0xff] %vm980, 0.0
        %986 = vst.msk [vmem:[#allocation2 + $0x20] sm:$0xff] %vm980, 0.0
        %987 = vst.msk [vmem:[#allocation2 + $0x28] sm:$0x1] %vm983, 0.0
        %988 = vst.msk [vmem:[#allocation2 + $0x30] sm:$0xff] %vm980, 0.0
        %989 = vst.msk [vmem:[#allocation2 + $0x38] sm:$0xff] %vm980, 0.0
        %990 = vst.msk [vmem:[#allocation2 + $0x40] sm:$0x1] %vm983, 0.0
        %991 = vst.msk [vmem:[#allocation2 + $0x48] sm:$0xff] %vm980, 0.0
        %992 = vst.msk [vmem:[#allocation2 + $0x50] sm:$0xff] %vm980, 0.0
        %993 = vst.msk [vmem:[#allocation2 + $0x58] sm:$0x1] %vm983, 0.0
        %994 = vst.msk [vmem:[#allocation2 + $0x60] sm:$0xff] %vm980, 0.0
        %995 = vst.msk [vmem:[#allocation2 + $0x68] sm:$0xff] %vm980, 0.0
        %996 = vst.msk [vmem:[#allocation2 + $0x70] sm:$0x1] %vm983, 0.0
        %997 = vst.msk [vmem:[#allocation2 + $0x78] sm:$0xff] %vm980, 0.0
        %998 = vst.msk [vmem:[#allocation2 + $0x80] sm:$0xff] %vm980, 0.0
        %999 = vst.msk [vmem:[#allocation2 + $0x88] sm:$0x1] %vm983, 0.0
        %1000 = vst.msk [vmem:[#allocation2 + $0x90] sm:$0xff] %vm980, 0.0
        %1001 = vst.msk [vmem:[#allocation2 + $0x98] sm:$0xff] %vm980, 0.0
        %1002 = vst.msk [vmem:[#allocation2 + $0xa0] sm:$0x1] %vm983, 0.0
        %1003 = vst.msk [vmem:[#allocation2 + $0xa8] sm:$0xff] %vm980, 0.0
        %1004 = vst.msk [vmem:[#allocation2 + $0xb0] sm:$0xff] %vm980, 0.0
        %1005 = vst.msk [vmem:[#allocation2 + $0xb8] sm:$0x1] %vm983, 0.0
        %1006 = vst.msk [vmem:[#allocation2 + $0xc0] sm:$0xff] %vm980, 0.0
        %1007 = vst.msk [vmem:[#allocation2 + $0xc8] sm:$0xff] %vm980, 0.0
        %1008 = vst.msk [vmem:[#allocation2 + $0xd0] sm:$0x1] %vm983, 0.0
        %1009 = vst.msk [vmem:[#allocation2 + $0xd8] sm:$0xff] %vm980, 0.0
        %1010 = vst.msk [vmem:[#allocation2 + $0xe0] sm:$0xff] %vm980, 0.0
        %1011 = vst.msk [vmem:[#allocation2 + $0xe8] sm:$0x1] %vm983, 0.0
        %1012 = vst.msk [vmem:[#allocation2 + $0xf0] sm:$0xff] %vm980, 0.0
        %1013 = vst.msk [vmem:[#allocation2 + $0xf8] sm:$0xff] %vm980, 0.0
        %1014 = vst.msk [vmem:[#allocation2 + $0x100] sm:$0x1] %vm983, 0.0
        %1015 = vst.msk [vmem:[#allocation2 + $0x108] sm:$0xff] %vm980, 0.0
        %1016 = vst.msk [vmem:[#allocation2 + $0x110] sm:$0xff] %vm980, 0.0
        %1017 = vst.msk [vmem:[#allocation2 + $0x118] sm:$0x1] %vm983, 0.0
        %1018 = vst.msk [vmem:[#allocation2 + $0x120] sm:$0xff] %vm980, 0.0
        %1019 = vst.msk [vmem:[#allocation2 + $0x128] sm:$0xff] %vm980, 0.0
        %1020 = vst.msk [vmem:[#allocation2 + $0x130] sm:$0x1] %vm983, 0.0
        %1021 = vst.msk [vmem:[#allocation2 + $0x138] sm:$0xff] %vm980, 0.0
        %1022 = vst.msk [vmem:[#allocation2 + $0x140] sm:$0xff] %vm980, 0.0
        %1023 = vst.msk [vmem:[#allocation2 + $0x148] sm:$0x1] %vm983, 0.0
        %1024 = vst.msk [vmem:[#allocation2 + $0x150] sm:$0xff] %vm980, 0.0
        %1025 = vst.msk [vmem:[#allocation2 + $0x158] sm:$0xff] %vm980, 0.0
        %1026 = vst.msk [vmem:[#allocation2 + $0x160] sm:$0x1] %vm983, 0.0
        %1027 = vst.msk [vmem:[#allocation2 + $0x168] sm:$0xff] %vm980, 0.0
        %1028 = vst.msk [vmem:[#allocation2 + $0x170] sm:$0xff] %vm980, 0.0
        %1029 = vst.msk [vmem:[#allocation2 + $0x178] sm:$0x1] %vm983, 0.0
        %1030 = vst.msk [vmem:[#allocation2 + $0x180] sm:$0xff] %vm980, 0.0
        %1031 = vst.msk [vmem:[#allocation2 + $0x188] sm:$0xff] %vm980, 0.0
        %1032 = vst.msk [vmem:[#allocation2 + $0x190] sm:$0x1] %vm983, 0.0
        %1033 = vst.msk [vmem:[#allocation2 + $0x198] sm:$0xff] %vm980, 0.0
        %1034 = vst.msk [vmem:[#allocation2 + $0x1a0] sm:$0xff] %vm980, 0.0
        %1035 = vst.msk [vmem:[#allocation2 + $0x1a8] sm:$0x1] %vm983, 0.0
        %1036 = vst.msk [vmem:[#allocation2 + $0x1b0] sm:$0xff] %vm980, 0.0
        %1037 = vst.msk [vmem:[#allocation2 + $0x1b8] sm:$0xff] %vm980, 0.0
        %1038 = vst.msk [vmem:[#allocation2 + $0x1c0] sm:$0x1] %vm983, 0.0
        %1039 = vst.msk [vmem:[#allocation2 + $0x1c8] sm:$0xff] %vm980, 0.0
        %1040 = vst.msk [vmem:[#allocation2 + $0x1d0] sm:$0xff] %vm980, 0.0
        %1041 = vst.msk [vmem:[#allocation2 + $0x1d8] sm:$0x1] %vm983, 0.0
        %1042 = vst.msk [vmem:[#allocation2 + $0x1e0] sm:$0xff] %vm980, 0.0
        %1043 = vst.msk [vmem:[#allocation2 + $0x1e8] sm:$0xff] %vm980, 0.0
        %1044 = vst.msk [vmem:[#allocation2 + $0x1f0] sm:$0x1] %vm983, 0.0
        %1045 = vst.msk [vmem:[#allocation2 + $0x1f8] sm:$0xff] %vm980, 0.0
        %1046 = vst.msk [vmem:[#allocation2 + $0x200] sm:$0xff] %vm980, 0.0
        %1047 = vst.msk [vmem:[#allocation2 + $0x208] sm:$0x1] %vm983, 0.0
        %1048 = vst.msk [vmem:[#allocation2 + $0x210] sm:$0xff] %vm980, 0.0
        %1049 = vst.msk [vmem:[#allocation2 + $0x218] sm:$0xff] %vm980, 0.0
        %1050 = vst.msk [vmem:[#allocation2 + $0x220] sm:$0x1] %vm983, 0.0
        %1051 = vst.msk [vmem:[#allocation2 + $0x228] sm:$0xff] %vm980, 0.0
        %1052 = vst.msk [vmem:[#allocation2 + $0x230] sm:$0xff] %vm980, 0.0
        %1053 = vst.msk [vmem:[#allocation2 + $0x238] sm:$0x1] %vm983, 0.0
        %1054 = vst.msk [vmem:[#allocation2 + $0x240] sm:$0xff] %vm980, 0.0
        %1055 = vst.msk [vmem:[#allocation2 + $0x248] sm:$0xff] %vm980, 0.0
        %1056 = vst.msk [vmem:[#allocation2 + $0x250] sm:$0x1] %vm983, 0.0
        %1057 = vst.msk [vmem:[#allocation2 + $0x258] sm:$0xff] %vm980, 0.0
        %1058 = vst.msk [vmem:[#allocation2 + $0x260] sm:$0xff] %vm980, 0.0
        %1059 = vst.msk [vmem:[#allocation2 + $0x268] sm:$0x1] %vm983, 0.0
        %1060 = vst.msk [vmem:[#allocation2 + $0x270] sm:$0xff] %vm980, 0.0
        %1061 = vst.msk [vmem:[#allocation2 + $0x278] sm:$0xff] %vm980, 0.0
        %1062 = vst.msk [vmem:[#allocation2 + $0x280] sm:$0x1] %vm983, 0.0
        %1063 = vst.msk [vmem:[#allocation2 + $0x288] sm:$0xff] %vm980, 0.0
        %1064 = vst.msk [vmem:[#allocation2 + $0x290] sm:$0xff] %vm980, 0.0
        %1065 = vst.msk [vmem:[#allocation2 + $0x298] sm:$0x1] %vm983, 0.0
        %1066 = vst.msk [vmem:[#allocation2 + $0x2a0] sm:$0xff] %vm980, 0.0
        %1067 = vst.msk [vmem:[#allocation2 + $0x2a8] sm:$0xff] %vm980, 0.0
        %1068 = vst.msk [vmem:[#allocation2 + $0x2b0] sm:$0x1] %vm983, 0.0
        %1069 = vst.msk [vmem:[#allocation2 + $0x2b8] sm:$0xff] %vm980, 0.0
        %1070 = vst.msk [vmem:[#allocation2 + $0x2c0] sm:$0xff] %vm980, 0.0
        %1071 = vst.msk [vmem:[#allocation2 + $0x2c8] sm:$0x1] %vm983, 0.0
        %1072 = vst.msk [vmem:[#allocation2 + $0x2d0] sm:$0xff] %vm980, 0.0
        %1073 = vst.msk [vmem:[#allocation2 + $0x2d8] sm:$0xff] %vm980, 0.0
        %1074 = vst.msk [vmem:[#allocation2 + $0x2e0] sm:$0x1] %vm983, 0.0
        %1075 = vst.msk [vmem:[#allocation2 + $0x2e8] sm:$0xff] %vm980, 0.0
        %1076 = vst.msk [vmem:[#allocation2 + $0x2f0] sm:$0xff] %vm980, 0.0
        %1077 = vst.msk [vmem:[#allocation2 + $0x2f8] sm:$0x1] %vm983, 0.0
        %1078 = vst.msk [vmem:[#allocation2 + $0x300] sm:$0xff] %vm980, 0.0
        %1079 = vst.msk [vmem:[#allocation2 + $0x308] sm:$0xff] %vm980, 0.0
        %1080 = vst.msk [vmem:[#allocation2 + $0x310] sm:$0x1] %vm983, 0.0
        %1081 = vst.msk [vmem:[#allocation2 + $0x318] sm:$0xff] %vm980, 0.0
        %1082 = vst.msk [vmem:[#allocation2 + $0x320] sm:$0xff] %vm980, 0.0
        %1083 = vst.msk [vmem:[#allocation2 + $0x328] sm:$0x1] %vm983, 0.0
        %1084 = vst.msk [vmem:[#allocation2 + $0x330] sm:$0xff] %vm980, 0.0
        %1085 = vst.msk [vmem:[#allocation2 + $0x338] sm:$0xff] %vm980, 0.0
        %1086 = vst.msk [vmem:[#allocation2 + $0x340] sm:$0x1] %vm983, 0.0
        %1087 = vst.msk [vmem:[#allocation2 + $0x348] sm:$0xff] %vm980, 0.0
        %1088 = vst.msk [vmem:[#allocation2 + $0x350] sm:$0xff] %vm980, 0.0
        %1089 = vst.msk [vmem:[#allocation2 + $0x358] sm:$0x1] %vm983, 0.0
        %1090 = vst.msk [vmem:[#allocation2 + $0x360] sm:$0xff] %vm980, 0.0
        %1091 = vst.msk [vmem:[#allocation2 + $0x368] sm:$0xff] %vm980, 0.0
        %1092 = vst.msk [vmem:[#allocation2 + $0x370] sm:$0x1] %vm983, 0.0
        %1093 = vst.msk [vmem:[#allocation2 + $0x378] sm:$0xff] %vm980, 0.0
        %1094 = vst.msk [vmem:[#allocation2 + $0x380] sm:$0xff] %vm980, 0.0
        %1095 = vst.msk [vmem:[#allocation2 + $0x388] sm:$0x1] %vm983, 0.0
        %1096 = vst.msk [vmem:[#allocation2 + $0x390] sm:$0xff] %vm980, 0.0
        %1097 = vst.msk [vmem:[#allocation2 + $0x398] sm:$0xff] %vm980, 0.0
        %1098 = vst.msk [vmem:[#allocation2 + $0x3a0] sm:$0x1] %vm983, 0.0
        %1099 = vst.msk [vmem:[#allocation2 + $0x3a8] sm:$0xff] %vm980, 0.0
        %1100 = vst.msk [vmem:[#allocation2 + $0x3b0] sm:$0xff] %vm980, 0.0
        %1101 = vst.msk [vmem:[#allocation2 + $0x3b8] sm:$0x1] %vm983, 0.0
        %1102 = vst.msk [vmem:[#allocation2 + $0x3c0] sm:$0xff] %vm980, 0.0
        %1103 = vst.msk [vmem:[#allocation2 + $0x3c8] sm:$0xff] %vm980, 0.0
        %1104 = vst.msk [vmem:[#allocation2 + $0x3d0] sm:$0x1] %vm983, 0.0
        %1105 = vst.msk [vmem:[#allocation2 + $0x3d8] sm:$0xff] %vm980, 0.0
        %1106 = vst.msk [vmem:[#allocation2 + $0x3e0] sm:$0xff] %vm980, 0.0
        %1107 = vst.msk [vmem:[#allocation2 + $0x3e8] sm:$0x1] %vm983, 0.0
        %1108 = vst.msk [vmem:[#allocation2 + $0x3f0] sm:$0xff] %vm980, 0.0
        %1109 = vst.msk [vmem:[#allocation2 + $0x3f8] sm:$0xff] %vm980, 0.0
        %1110 = vst.msk [vmem:[#allocation2 + $0x400] sm:$0x1] %vm983, 0.0
        %1111 = vst.msk [vmem:[#allocation2 + $0x408] sm:$0xff] %vm980, 0.0
        %1112 = vst.msk [vmem:[#allocation2 + $0x410] sm:$0xff] %vm980, 0.0
        %1113 = vst.msk [vmem:[#allocation2 + $0x418] sm:$0x1] %vm983, 0.0
        %1114 = vst.msk [vmem:[#allocation2 + $0x420] sm:$0xff] %vm980, 0.0
        %1115 = vst.msk [vmem:[#allocation2 + $0x428] sm:$0xff] %vm980, 0.0
        %1116 = vst.msk [vmem:[#allocation2 + $0x430] sm:$0x1] %vm983, 0.0
        %1117 = vst.msk [vmem:[#allocation2 + $0x438] sm:$0xff] %vm980, 0.0
        %1118 = vst.msk [vmem:[#allocation2 + $0x440] sm:$0xff] %vm980, 0.0
        %1119 = vst.msk [vmem:[#allocation2 + $0x448] sm:$0x1] %vm983, 0.0
        %1120 = vst.msk [vmem:[#allocation2 + $0x450] sm:$0xff] %vm980, 0.0
        %1121 = vst.msk [vmem:[#allocation2 + $0x458] sm:$0xff] %vm980, 0.0
        %1122 = vst.msk [vmem:[#allocation2 + $0x460] sm:$0x1] %vm983, 0.0
        %1123 = vst.msk [vmem:[#allocation2 + $0x468] sm:$0xff] %vm980, 0.0
        %1124 = vst.msk [vmem:[#allocation2 + $0x470] sm:$0xff] %vm980, 0.0
        %1125 = vst.msk [vmem:[#allocation2 + $0x478] sm:$0x1] %vm983, 0.0
        %1126 = vst.msk [vmem:[#allocation2 + $0x480] sm:$0xff] %vm980, 0.0
        %1127 = vst.msk [vmem:[#allocation2 + $0x488] sm:$0xff] %vm980, 0.0
        %1128 = vst.msk [vmem:[#allocation2 + $0x490] sm:$0x1] %vm983, 0.0
        %1129 = vst.msk [vmem:[#allocation2 + $0x498] sm:$0xff] %vm980, 0.0
        %1130 = vst.msk [vmem:[#allocation2 + $0x4a0] sm:$0xff] %vm980, 0.0
        %1131 = vst.msk [vmem:[#allocation2 + $0x4a8] sm:$0x1] %vm983, 0.0
        %1132 = vst.msk [vmem:[#allocation2 + $0x4b0] sm:$0xff] %vm980, 0.0
        %1133 = vst.msk [vmem:[#allocation2 + $0x4b8] sm:$0xff] %vm980, 0.0
        %1134 = vst.msk [vmem:[#allocation2 + $0x4c0] sm:$0x1] %vm983, 0.0
        %1135 = vst.msk [vmem:[#allocation2 + $0x4c8] sm:$0xff] %vm980, 0.0
        %1136 = vst.msk [vmem:[#allocation2 + $0x4d0] sm:$0xff] %vm980, 0.0
        %1137 = vst.msk [vmem:[#allocation2 + $0x4d8] sm:$0x1] %vm983, 0.0
        %1138 = vst.msk [vmem:[#allocation2 + $0x4e0] sm:$0xff] %vm980, 0.0
        %1139 = vst.msk [vmem:[#allocation2 + $0x4e8] sm:$0xff] %vm980, 0.0
        %1140 = vst.msk [vmem:[#allocation2 + $0x4f0] sm:$0x1] %vm983, 0.0
        %1141 = vst.msk [vmem:[#allocation2 + $0x4f8] sm:$0xff] %vm980, 0.0
        %1142 = vst.msk [vmem:[#allocation2 + $0x500] sm:$0xff] %vm980, 0.0
        %1143 = vst.msk [vmem:[#allocation2 + $0x508] sm:$0x1] %vm983, 0.0
        %1144 = vst.msk [vmem:[#allocation2 + $0x510] sm:$0xff] %vm980, 0.0
        %1145 = vst.msk [vmem:[#allocation2 + $0x518] sm:$0xff] %vm980, 0.0
        %1146 = vst.msk [vmem:[#allocation2 + $0x520] sm:$0x1] %vm983, 0.0
        %1147 = vst.msk [vmem:[#allocation2 + $0x528] sm:$0xff] %vm980, 0.0
        %1148 = vst.msk [vmem:[#allocation2 + $0x530] sm:$0xff] %vm980, 0.0
        %1149 = vst.msk [vmem:[#allocation2 + $0x538] sm:$0x1] %vm983, 0.0
        %1150 = vst.msk [vmem:[#allocation2 + $0x540] sm:$0xff] %vm980, 0.0
        %1151 = vst.msk [vmem:[#allocation2 + $0x548] sm:$0xff] %vm980, 0.0
        %1152 = vst.msk [vmem:[#allocation2 + $0x550] sm:$0x1] %vm983, 0.0
        %1153 = vst.msk [vmem:[#allocation2 + $0x558] sm:$0xff] %vm980, 0.0
        %1154 = vst.msk [vmem:[#allocation2 + $0x560] sm:$0xff] %vm980, 0.0
        %1155 = vst.msk [vmem:[#allocation2 + $0x568] sm:$0x1] %vm983, 0.0
        %1156 = vst.msk [vmem:[#allocation2 + $0x570] sm:$0xff] %vm980, 0.0
        %1157 = vst.msk [vmem:[#allocation2 + $0x578] sm:$0xff] %vm980, 0.0
        %1158 = vst.msk [vmem:[#allocation2 + $0x580] sm:$0x1] %vm983, 0.0
        %1159 = vst.msk [vmem:[#allocation2 + $0x588] sm:$0xff] %vm980, 0.0
        %1160 = vst.msk [vmem:[#allocation2 + $0x590] sm:$0xff] %vm980, 0.0
        %1161 = vst.msk [vmem:[#allocation2 + $0x598] sm:$0x1] %vm983, 0.0
        %s1162 = scalar_lea.vmem [#allocation2], 264
        %1163 = vst.msk [vmem:[%s1162 + $0x8] sm:$0xff] %vm980, %v948
        %1164 = vst.msk [vmem:[%s1162 + $0x20] sm:$0xff] %vm980, %v949
        %1165 = vst.msk [vmem:[%s1162 + $0x38] sm:$0xff] %vm980, %v950
        %1166 = vst.msk [vmem:[%s1162 + $0x50] sm:$0xff] %vm980, %v951
        %1167 = vst.msk [vmem:[%s1162 + $0x68] sm:$0xff] %vm980, %v952
        %1168 = vst.msk [vmem:[%s1162 + $0x80] sm:$0xff] %vm980, %v953
        %1169 = vst.msk [vmem:[%s1162 + $0x98] sm:$0xff] %vm980, %v954
        %1170 = vst.msk [vmem:[%s1162 + $0xb0] sm:$0xff] %vm980, %v955
        %1171 = vst.msk [vmem:[%s1162 + $0xf8] sm:$0xff] %vm980, %v956
        %1172 = vst.msk [vmem:[%s1162 + $0x110] sm:$0xff] %vm980, %v957
        %1173 = vst.msk [vmem:[%s1162 + $0x128] sm:$0xff] %vm980, %v958
        %1174 = vst.msk [vmem:[%s1162 + $0x140] sm:$0xff] %vm980, %v959
        %1175 = vst.msk [vmem:[%s1162 + $0x158] sm:$0xff] %vm980, %v960
        %1176 = vst.msk [vmem:[%s1162 + $0x170] sm:$0xff] %vm980, %v961
        %1177 = vst.msk [vmem:[%s1162 + $0x188] sm:$0xff] %vm980, %v962
        %1178 = vst.msk [vmem:[%s1162 + $0x1a0] sm:$0xff] %vm980, %v963
        %1179 = vst.msk [vmem:[%s1162 + $0x1e8] sm:$0xff] %vm980, %v964
        %1180 = vst.msk [vmem:[%s1162 + $0x200] sm:$0xff] %vm980, %v965
        %1181 = vst.msk [vmem:[%s1162 + $0x218] sm:$0xff] %vm980, %v966
        %1182 = vst.msk [vmem:[%s1162 + $0x230] sm:$0xff] %vm980, %v967
        %1183 = vst.msk [vmem:[%s1162 + $0x248] sm:$0xff] %vm980, %v968
        %1184 = vst.msk [vmem:[%s1162 + $0x260] sm:$0xff] %vm980, %v969
        %1185 = vst.msk [vmem:[%s1162 + $0x278] sm:$0xff] %vm980, %v970
        %1186 = vst.msk [vmem:[%s1162 + $0x290] sm:$0xff] %vm980, %v971
        %1187 = vst.msk [vmem:[%s1162 + $0x2d8] sm:$0xff] %vm980, %v972
        %1188 = vst.msk [vmem:[%s1162 + $0x2f0] sm:$0xff] %vm980, %v973
        %1189 = vst.msk [vmem:[%s1162 + $0x308] sm:$0xff] %vm980, %v974
        %1190 = vst.msk [vmem:[%s1162 + $0x320] sm:$0xff] %vm980, %v975
        %1191 = vst.msk [vmem:[%s1162 + $0x338] sm:$0xff] %vm980, %v976
        %1192 = vst.msk [vmem:[%s1162 + $0x350] sm:$0xff] %vm980, %v977
        %1193 = vst.msk [vmem:[%s1162 + $0x368] sm:$0xff] %vm980, %v978
        %1194 = vst.msk [vmem:[%s1162 + $0x380] sm:$0xff] %vm980, %v979
        %v1195 = vld [vmem:[#allocation2] sm:$0xff]
        %v1196 = vld [vmem:[#allocation2 + $0x8] sm:$0xff]
        %v1197 = vld [vmem:[#allocation2 + $0x10] sm:$0x1]
        %v1198 = vld [vmem:[#allocation2 + $0x18] sm:$0xff]
        %v1199 = vld [vmem:[#allocation2 + $0x20] sm:$0xff]
        %v1200 = vld [vmem:[#allocation2 + $0x28] sm:$0x1]
        %v1201 = vld [vmem:[#allocation2 + $0x30] sm:$0xff]
        %v1202 = vld [vmem:[#allocation2 + $0x38] sm:$0xff]
        %v1203 = vld [vmem:[#allocation2 + $0x40] sm:$0x1]
        %v1204 = vld [vmem:[#allocation2 + $0x48] sm:$0xff]
        %v1205 = vld [vmem:[#allocation2 + $0x50] sm:$0xff]
        %v1206 = vld [vmem:[#allocation2 + $0x58] sm:$0x1]
        %v1207 = vld [vmem:[#allocation2 + $0x60] sm:$0xff]
        %v1208 = vld [vmem:[#allocation2 + $0x68] sm:$0xff]
        %v1209 = vld [vmem:[#allocation2 + $0x70] sm:$0x1]
        %v1210 = vld [vmem:[#allocation2 + $0x78] sm:$0xff]
        %v1211 = vld [vmem:[#allocation2 + $0x80] sm:$0xff]
        %v1212 = vld [vmem:[#allocation2 + $0x88] sm:$0x1]
        %v1213 = vld [vmem:[#allocation2 + $0x90] sm:$0xff]
        %v1214 = vld [vmem:[#allocation2 + $0x98] sm:$0xff]
        %v1215 = vld [vmem:[#allocation2 + $0xa0] sm:$0x1]
        %v1216 = vld [vmem:[#allocation2 + $0xa8] sm:$0xff]
        %v1217 = vld [vmem:[#allocation2 + $0xb0] sm:$0xff]
        %v1218 = vld [vmem:[#allocation2 + $0xb8] sm:$0x1]
        %v1219 = vld [vmem:[#allocation2 + $0xc0] sm:$0xff]
        %v1220 = vld [vmem:[#allocation2 + $0xc8] sm:$0xff]
        %v1221 = vld [vmem:[#allocation2 + $0xd0] sm:$0x1]
        %v1222 = vld [vmem:[#allocation2 + $0xd8] sm:$0xff]
        %v1223 = vld [vmem:[#allocation2 + $0xe0] sm:$0xff]
        %v1224 = vld [vmem:[#allocation2 + $0xe8] sm:$0x1]
        %v1225 = vld [vmem:[#allocation2 + $0xf0] sm:$0xff]
        %v1226 = vld [vmem:[#allocation2 + $0xf8] sm:$0xff]
        %v1227 = vld [vmem:[#allocation2 + $0x100] sm:$0x1]
        %v1228 = vld [vmem:[#allocation2 + $0x108] sm:$0xff]
        %v1229 = vld [vmem:[#allocation2 + $0x110] sm:$0xff]
        %v1230 = vld [vmem:[#allocation2 + $0x118] sm:$0x1]
        %v1231 = vld [vmem:[#allocation2 + $0x120] sm:$0xff]
        %v1232 = vld [vmem:[#allocation2 + $0x128] sm:$0xff]
        %v1233 = vld [vmem:[#allocation2 + $0x130] sm:$0x1]
        %v1234 = vld [vmem:[#allocation2 + $0x138] sm:$0xff]
        %v1235 = vld [vmem:[#allocation2 + $0x140] sm:$0xff]
        %v1236 = vld [vmem:[#allocation2 + $0x148] sm:$0x1]
        %v1237 = vld [vmem:[#allocation2 + $0x150] sm:$0xff]
        %v1238 = vld [vmem:[#allocation2 + $0x158] sm:$0xff]
        %v1239 = vld [vmem:[#allocation2 + $0x160] sm:$0x1]
        %v1240 = vld [vmem:[#allocation2 + $0x168] sm:$0xff]
        %v1241 = vld [vmem:[#allocation2 + $0x170] sm:$0xff]
        %v1242 = vld [vmem:[#allocation2 + $0x178] sm:$0x1]
        %v1243 = vld [vmem:[#allocation2 + $0x180] sm:$0xff]
        %v1244 = vld [vmem:[#allocation2 + $0x188] sm:$0xff]
        %v1245 = vld [vmem:[#allocation2 + $0x190] sm:$0x1]
        %v1246 = vld [vmem:[#allocation2 + $0x198] sm:$0xff]
        %v1247 = vld [vmem:[#allocation2 + $0x1a0] sm:$0xff]
        %v1248 = vld [vmem:[#allocation2 + $0x1a8] sm:$0x1]
        %v1249 = vld [vmem:[#allocation2 + $0x1b0] sm:$0xff]
        %v1250 = vld [vmem:[#allocation2 + $0x1b8] sm:$0xff]
        %v1251 = vld [vmem:[#allocation2 + $0x1c0] sm:$0x1]
        %v1252 = vld [vmem:[#allocation2 + $0x1c8] sm:$0xff]
        %v1253 = vld [vmem:[#allocation2 + $0x1d0] sm:$0xff]
        %v1254 = vld [vmem:[#allocation2 + $0x1d8] sm:$0x1]
        %v1255 = vld [vmem:[#allocation2 + $0x1e0] sm:$0xff]
        %v1256 = vld [vmem:[#allocation2 + $0x1e8] sm:$0xff]
        %v1257 = vld [vmem:[#allocation2 + $0x1f0] sm:$0x1]
        %v1258 = vld [vmem:[#allocation2 + $0x1f8] sm:$0xff]
        %v1259 = vld [vmem:[#allocation2 + $0x200] sm:$0xff]
        %v1260 = vld [vmem:[#allocation2 + $0x208] sm:$0x1]
        %v1261 = vld [vmem:[#allocation2 + $0x210] sm:$0xff]
        %v1262 = vld [vmem:[#allocation2 + $0x218] sm:$0xff]
        %v1263 = vld [vmem:[#allocation2 + $0x220] sm:$0x1]
        %v1264 = vld [vmem:[#allocation2 + $0x228] sm:$0xff]
        %v1265 = vld [vmem:[#allocation2 + $0x230] sm:$0xff]
        %v1266 = vld [vmem:[#allocation2 + $0x238] sm:$0x1]
        %v1267 = vld [vmem:[#allocation2 + $0x240] sm:$0xff]
        %v1268 = vld [vmem:[#allocation2 + $0x248] sm:$0xff]
        %v1269 = vld [vmem:[#allocation2 + $0x250] sm:$0x1]
        %v1270 = vld [vmem:[#allocation2 + $0x258] sm:$0xff]
        %v1271 = vld [vmem:[#allocation2 + $0x260] sm:$0xff]
        %v1272 = vld [vmem:[#allocation2 + $0x268] sm:$0x1]
        %v1273 = vld [vmem:[#allocation2 + $0x270] sm:$0xff]
        %v1274 = vld [vmem:[#allocation2 + $0x278] sm:$0xff]
        %v1275 = vld [vmem:[#allocation2 + $0x280] sm:$0x1]
        %v1276 = vld [vmem:[#allocation2 + $0x288] sm:$0xff]
        %v1277 = vld [vmem:[#allocation2 + $0x290] sm:$0xff]
        %v1278 = vld [vmem:[#allocation2 + $0x298] sm:$0x1]
        %v1279 = vld [vmem:[#allocation2 + $0x2a0] sm:$0xff]
        %v1280 = vld [vmem:[#allocation2 + $0x2a8] sm:$0xff]
        %v1281 = vld [vmem:[#allocation2 + $0x2b0] sm:$0x1]
        %v1282 = vld [vmem:[#allocation2 + $0x2b8] sm:$0xff]
        %v1283 = vld [vmem:[#allocation2 + $0x2c0] sm:$0xff]
        %v1284 = vld [vmem:[#allocation2 + $0x2c8] sm:$0x1]
        %v1285 = vld [vmem:[#allocation2 + $0x2d0] sm:$0xff]
        %v1286 = vld [vmem:[#allocation2 + $0x2d8] sm:$0xff]
        %v1287 = vld [vmem:[#allocation2 + $0x2e0] sm:$0x1]
        %v1288 = vld [vmem:[#allocation2 + $0x2e8] sm:$0xff]
        %v1289 = vld [vmem:[#allocation2 + $0x2f0] sm:$0xff]
        %v1290 = vld [vmem:[#allocation2 + $0x2f8] sm:$0x1]
        %v1291 = vld [vmem:[#allocation2 + $0x300] sm:$0xff]
        %v1292 = vld [vmem:[#allocation2 + $0x308] sm:$0xff]
        %v1293 = vld [vmem:[#allocation2 + $0x310] sm:$0x1]
        %v1294 = vld [vmem:[#allocation2 + $0x318] sm:$0xff]
        %v1295 = vld [vmem:[#allocation2 + $0x320] sm:$0xff]
        %v1296 = vld [vmem:[#allocation2 + $0x328] sm:$0x1]
        %v1297 = vld [vmem:[#allocation2 + $0x330] sm:$0xff]
        %v1298 = vld [vmem:[#allocation2 + $0x338] sm:$0xff]
        %v1299 = vld [vmem:[#allocation2 + $0x340] sm:$0x1]
        %v1300 = vld [vmem:[#allocation2 + $0x348] sm:$0xff]
        %v1301 = vld [vmem:[#allocation2 + $0x350] sm:$0xff]
        %v1302 = vld [vmem:[#allocation2 + $0x358] sm:$0x1]
        %v1303 = vld [vmem:[#allocation2 + $0x360] sm:$0xff]
        %v1304 = vld [vmem:[#allocation2 + $0x368] sm:$0xff]
        %v1305 = vld [vmem:[#allocation2 + $0x370] sm:$0x1]
        %v1306 = vld [vmem:[#allocation2 + $0x378] sm:$0xff]
        %v1307 = vld [vmem:[#allocation2 + $0x380] sm:$0xff]
        %v1308 = vld [vmem:[#allocation2 + $0x388] sm:$0x1]
        %v1309 = vld [vmem:[#allocation2 + $0x390] sm:$0xff]
        %v1310 = vld [vmem:[#allocation2 + $0x398] sm:$0xff]
        %v1311 = vld [vmem:[#allocation2 + $0x3a0] sm:$0x1]
        %v1312 = vld [vmem:[#allocation2 + $0x3a8] sm:$0xff]
        %v1313 = vld [vmem:[#allocation2 + $0x3b0] sm:$0xff]
        %v1314 = vld [vmem:[#allocation2 + $0x3b8] sm:$0x1]
        %v1315 = vld [vmem:[#allocation2 + $0x3c0] sm:$0xff]
        %v1316 = vld [vmem:[#allocation2 + $0x3c8] sm:$0xff]
        %v1317 = vld [vmem:[#allocation2 + $0x3d0] sm:$0x1]
        %v1318 = vld [vmem:[#allocation2 + $0x3d8] sm:$0xff]
        %v1319 = vld [vmem:[#allocation2 + $0x3e0] sm:$0xff]
        %v1320 = vld [vmem:[#allocation2 + $0x3e8] sm:$0x1]
        %v1321 = vld [vmem:[#allocation2 + $0x3f0] sm:$0xff]
        %v1322 = vld [vmem:[#allocation2 + $0x3f8] sm:$0xff]
        %v1323 = vld [vmem:[#allocation2 + $0x400] sm:$0x1]
        %v1324 = vld [vmem:[#allocation2 + $0x408] sm:$0xff]
        %v1325 = vld [vmem:[#allocation2 + $0x410] sm:$0xff]
        %v1326 = vld [vmem:[#allocation2 + $0x418] sm:$0x1]
        %v1327 = vld [vmem:[#allocation2 + $0x420] sm:$0xff]
        %v1328 = vld [vmem:[#allocation2 + $0x428] sm:$0xff]
        %v1329 = vld [vmem:[#allocation2 + $0x430] sm:$0x1]
        %v1330 = vld [vmem:[#allocation2 + $0x438] sm:$0xff]
        %v1331 = vld [vmem:[#allocation2 + $0x440] sm:$0xff]
        %v1332 = vld [vmem:[#allocation2 + $0x448] sm:$0x1]
        %v1333 = vld [vmem:[#allocation2 + $0x450] sm:$0xff]
        %v1334 = vld [vmem:[#allocation2 + $0x458] sm:$0xff]
        %v1335 = vld [vmem:[#allocation2 + $0x460] sm:$0x1]
        %v1336 = vld [vmem:[#allocation2 + $0x468] sm:$0xff]
        %v1337 = vld [vmem:[#allocation2 + $0x470] sm:$0xff]
        %v1338 = vld [vmem:[#allocation2 + $0x478] sm:$0x1]
        %v1339 = vld [vmem:[#allocation2 + $0x480] sm:$0xff]
        %v1340 = vld [vmem:[#allocation2 + $0x488] sm:$0xff]
        %v1341 = vld [vmem:[#allocation2 + $0x490] sm:$0x1]
        %v1342 = vld [vmem:[#allocation2 + $0x498] sm:$0xff]
        %v1343 = vld [vmem:[#allocation2 + $0x4a0] sm:$0xff]
        %v1344 = vld [vmem:[#allocation2 + $0x4a8] sm:$0x1]
        %v1345 = vld [vmem:[#allocation2 + $0x4b0] sm:$0xff]
        %v1346 = vld [vmem:[#allocation2 + $0x4b8] sm:$0xff]
        %v1347 = vld [vmem:[#allocation2 + $0x4c0] sm:$0x1]
        %v1348 = vld [vmem:[#allocation2 + $0x4c8] sm:$0xff]
        %v1349 = vld [vmem:[#allocation2 + $0x4d0] sm:$0xff]
        %v1350 = vld [vmem:[#allocation2 + $0x4d8] sm:$0x1]
        %v1351 = vld [vmem:[#allocation2 + $0x4e0] sm:$0xff]
        %v1352 = vld [vmem:[#allocation2 + $0x4e8] sm:$0xff]
        %v1353 = vld [vmem:[#allocation2 + $0x4f0] sm:$0x1]
        %v1354 = vld [vmem:[#allocation2 + $0x4f8] sm:$0xff]
        %v1355 = vld [vmem:[#allocation2 + $0x500] sm:$0xff]
        %v1356 = vld [vmem:[#allocation2 + $0x508] sm:$0x1]
        %v1357 = vld [vmem:[#allocation2 + $0x510] sm:$0xff]
        %v1358 = vld [vmem:[#allocation2 + $0x518] sm:$0xff]
        %v1359 = vld [vmem:[#allocation2 + $0x520] sm:$0x1]
        %v1360 = vld [vmem:[#allocation2 + $0x528] sm:$0xff]
        %v1361 = vld [vmem:[#allocation2 + $0x530] sm:$0xff]
        %v1362 = vld [vmem:[#allocation2 + $0x538] sm:$0x1]
        %v1363 = vld [vmem:[#allocation2 + $0x540] sm:$0xff]
        %v1364 = vld [vmem:[#allocation2 + $0x548] sm:$0xff]
        %v1365 = vld [vmem:[#allocation2 + $0x550] sm:$0x1]
        %v1366 = vld [vmem:[#allocation2 + $0x558] sm:$0xff]
        %v1367 = vld [vmem:[#allocation2 + $0x560] sm:$0xff]
        %v1368 = vld [vmem:[#allocation2 + $0x568] sm:$0x1]
        %v1369 = vld [vmem:[#allocation2 + $0x570] sm:$0xff]
        %v1370 = vld [vmem:[#allocation2 + $0x578] sm:$0xff]
        %v1371 = vld [vmem:[#allocation2 + $0x580] sm:$0x1]
        %v1372 = vld [vmem:[#allocation2 + $0x588] sm:$0xff]
        %v1373 = vld [vmem:[#allocation2 + $0x590] sm:$0xff]
        %v1374 = vld [vmem:[#allocation2 + $0x598] sm:$0x1]
        %vm1439 = vcmask 1040384
        %v1440 = vrot.slane %v1195, 7
        %v1441 = vrot.slane %v1196, 7
        %v1442 = vsel %vm1439, %v1440, %v1441
        %v1443 = vrot.slane %v1198, 7
        %v1444 = vrot.slane %v1199, 7
        %v1445 = vsel %vm1439, %v1443, %v1444
        %v1446 = vrot.slane %v1201, 7
        %v1447 = vrot.slane %v1202, 7
        %v1448 = vsel %vm1439, %v1446, %v1447
        %v1449 = vrot.slane %v1204, 7
        %v1450 = vrot.slane %v1205, 7
        %v1451 = vsel %vm1439, %v1449, %v1450
        %v1452 = vrot.slane %v1207, 7
        %v1453 = vrot.slane %v1208, 7
        %v1454 = vsel %vm1439, %v1452, %v1453
        %v1455 = vrot.slane %v1210, 7
        %v1456 = vrot.slane %v1211, 7
        %v1457 = vsel %vm1439, %v1455, %v1456
        %v1458 = vrot.slane %v1213, 7
        %v1459 = vrot.slane %v1214, 7
        %v1460 = vsel %vm1439, %v1458, %v1459
        %v1461 = vrot.slane %v1216, 7
        %v1462 = vrot.slane %v1217, 7
        %v1463 = vsel %vm1439, %v1461, %v1462
        %v1464 = vrot.slane %v1225, 7
        %v1465 = vrot.slane %v1226, 7
        %v1466 = vsel %vm1439, %v1464, %v1465
        %v1467 = vrot.slane %v1228, 7
        %v1468 = vrot.slane %v1229, 7
        %v1469 = vsel %vm1439, %v1467, %v1468
        %v1470 = vrot.slane %v1231, 7
        %v1471 = vrot.slane %v1232, 7
        %v1472 = vsel %vm1439, %v1470, %v1471
        %v1473 = vrot.slane %v1234, 7
        %v1474 = vrot.slane %v1235, 7
        %v1475 = vsel %vm1439, %v1473, %v1474
        %v1476 = vrot.slane %v1237, 7
        %v1477 = vrot.slane %v1238, 7
        %v1478 = vsel %vm1439, %v1476, %v1477
        %v1479 = vrot.slane %v1240, 7
        %v1480 = vrot.slane %v1241, 7
        %v1481 = vsel %vm1439, %v1479, %v1480
        %v1482 = vrot.slane %v1243, 7
        %v1483 = vrot.slane %v1244, 7
        %v1484 = vsel %vm1439, %v1482, %v1483
        %v1485 = vrot.slane %v1246, 7
        %v1486 = vrot.slane %v1247, 7
        %v1487 = vsel %vm1439, %v1485, %v1486
        %v1488 = vrot.slane %v1255, 7
        %v1489 = vrot.slane %v1256, 7
        %v1490 = vsel %vm1439, %v1488, %v1489
        %v1491 = vrot.slane %v1258, 7
        %v1492 = vrot.slane %v1259, 7
        %v1493 = vsel %vm1439, %v1491, %v1492
        %v1494 = vrot.slane %v1261, 7
        %v1495 = vrot.slane %v1262, 7
        %v1496 = vsel %vm1439, %v1494, %v1495
        %v1497 = vrot.slane %v1264, 7
        %v1498 = vrot.slane %v1265, 7
        %v1499 = vsel %vm1439, %v1497, %v1498
        %v1500 = vrot.slane %v1267, 7
        %v1501 = vrot.slane %v1268, 7
        %v1502 = vsel %vm1439, %v1500, %v1501
        %v1503 = vrot.slane %v1270, 7
        %v1504 = vrot.slane %v1271, 7
        %v1505 = vsel %vm1439, %v1503, %v1504
        %v1506 = vrot.slane %v1273, 7
        %v1507 = vrot.slane %v1274, 7
        %v1508 = vsel %vm1439, %v1506, %v1507
        %v1509 = vrot.slane %v1276, 7
        %v1510 = vrot.slane %v1277, 7
        %v1511 = vsel %vm1439, %v1509, %v1510
        %v1512 = vrot.slane %v1285, 7
        %v1513 = vrot.slane %v1286, 7
        %v1514 = vsel %vm1439, %v1512, %v1513
        %v1515 = vrot.slane %v1288, 7
        %v1516 = vrot.slane %v1289, 7
        %v1517 = vsel %vm1439, %v1515, %v1516
        %v1518 = vrot.slane %v1291, 7
        %v1519 = vrot.slane %v1292, 7
        %v1520 = vsel %vm1439, %v1518, %v1519
        %v1521 = vrot.slane %v1294, 7
        %v1522 = vrot.slane %v1295, 7
        %v1523 = vsel %vm1439, %v1521, %v1522
        %v1524 = vrot.slane %v1297, 7
        %v1525 = vrot.slane %v1298, 7
        %v1526 = vsel %vm1439, %v1524, %v1525
        %v1527 = vrot.slane %v1300, 7
        %v1528 = vrot.slane %v1301, 7
        %v1529 = vsel %vm1439, %v1527, %v1528
        %v1530 = vrot.slane %v1303, 7
        %v1531 = vrot.slane %v1304, 7
        %v1532 = vsel %vm1439, %v1530, %v1531
        %v1533 = vrot.slane %v1306, 7
        %v1534 = vrot.slane %v1307, 7
        %v1535 = vsel %vm1439, %v1533, %v1534
        %vm1600 = vcmask 1046528
        %v1601 = vrot.slane %v1196, 1
        %v1602 = vrot.slane %v1197, 1
        %v1603 = vsel %vm1600, %v1601, %v1602
        %v1604 = vrot.slane %v1199, 1
        %v1605 = vrot.slane %v1200, 1
        %v1606 = vsel %vm1600, %v1604, %v1605
        %v1607 = vrot.slane %v1202, 1
        %v1608 = vrot.slane %v1203, 1
        %v1609 = vsel %vm1600, %v1607, %v1608
        %v1610 = vrot.slane %v1205, 1
        %v1611 = vrot.slane %v1206, 1
        %v1612 = vsel %vm1600, %v1610, %v1611
        %v1613 = vrot.slane %v1208, 1
        %v1614 = vrot.slane %v1209, 1
        %v1615 = vsel %vm1600, %v1613, %v1614
        %v1616 = vrot.slane %v1211, 1
        %v1617 = vrot.slane %v1212, 1
        %v1618 = vsel %vm1600, %v1616, %v1617
        %v1619 = vrot.slane %v1214, 1
        %v1620 = vrot.slane %v1215, 1
        %v1621 = vsel %vm1600, %v1619, %v1620
        %v1622 = vrot.slane %v1217, 1
        %v1623 = vrot.slane %v1218, 1
        %v1624 = vsel %vm1600, %v1622, %v1623
        %v1625 = vrot.slane %v1226, 1
        %v1626 = vrot.slane %v1227, 1
        %v1627 = vsel %vm1600, %v1625, %v1626
        %v1628 = vrot.slane %v1229, 1
        %v1629 = vrot.slane %v1230, 1
        %v1630 = vsel %vm1600, %v1628, %v1629
        %v1631 = vrot.slane %v1232, 1
        %v1632 = vrot.slane %v1233, 1
        %v1633 = vsel %vm1600, %v1631, %v1632
        %v1634 = vrot.slane %v1235, 1
        %v1635 = vrot.slane %v1236, 1
        %v1636 = vsel %vm1600, %v1634, %v1635
        %v1637 = vrot.slane %v1238, 1
        %v1638 = vrot.slane %v1239, 1
        %v1639 = vsel %vm1600, %v1637, %v1638
        %v1640 = vrot.slane %v1241, 1
        %v1641 = vrot.slane %v1242, 1
        %v1642 = vsel %vm1600, %v1640, %v1641
        %v1643 = vrot.slane %v1244, 1
        %v1644 = vrot.slane %v1245, 1
        %v1645 = vsel %vm1600, %v1643, %v1644
        %v1646 = vrot.slane %v1247, 1
        %v1647 = vrot.slane %v1248, 1
        %v1648 = vsel %vm1600, %v1646, %v1647
        %v1649 = vrot.slane %v1256, 1
        %v1650 = vrot.slane %v1257, 1
        %v1651 = vsel %vm1600, %v1649, %v1650
        %v1652 = vrot.slane %v1259, 1
        %v1653 = vrot.slane %v1260, 1
        %v1654 = vsel %vm1600, %v1652, %v1653
        %v1655 = vrot.slane %v1262, 1
        %v1656 = vrot.slane %v1263, 1
        %v1657 = vsel %vm1600, %v1655, %v1656
        %v1658 = vrot.slane %v1265, 1
        %v1659 = vrot.slane %v1266, 1
        %v1660 = vsel %vm1600, %v1658, %v1659
        %v1661 = vrot.slane %v1268, 1
        %v1662 = vrot.slane %v1269, 1
        %v1663 = vsel %vm1600, %v1661, %v1662
        %v1664 = vrot.slane %v1271, 1
        %v1665 = vrot.slane %v1272, 1
        %v1666 = vsel %vm1600, %v1664, %v1665
        %v1667 = vrot.slane %v1274, 1
        %v1668 = vrot.slane %v1275, 1
        %v1669 = vsel %vm1600, %v1667, %v1668
        %v1670 = vrot.slane %v1277, 1
        %v1671 = vrot.slane %v1278, 1
        %v1672 = vsel %vm1600, %v1670, %v1671
        %v1673 = vrot.slane %v1286, 1
        %v1674 = vrot.slane %v1287, 1
        %v1675 = vsel %vm1600, %v1673, %v1674
        %v1676 = vrot.slane %v1289, 1
        %v1677 = vrot.slane %v1290, 1
        %v1678 = vsel %vm1600, %v1676, %v1677
        %v1679 = vrot.slane %v1292, 1
        %v1680 = vrot.slane %v1293, 1
        %v1681 = vsel %vm1600, %v1679, %v1680
        %v1682 = vrot.slane %v1295, 1
        %v1683 = vrot.slane %v1296, 1
        %v1684 = vsel %vm1600, %v1682, %v1683
        %v1685 = vrot.slane %v1298, 1
        %v1686 = vrot.slane %v1299, 1
        %v1687 = vsel %vm1600, %v1685, %v1686
        %v1688 = vrot.slane %v1301, 1
        %v1689 = vrot.slane %v1302, 1
        %v1690 = vsel %vm1600, %v1688, %v1689
        %v1691 = vrot.slane %v1304, 1
        %v1692 = vrot.slane %v1305, 1
        %v1693 = vsel %vm1600, %v1691, %v1692
        %v1694 = vrot.slane %v1307, 1
        %v1695 = vrot.slane %v1308, 1
        %v1696 = vsel %vm1600, %v1694, %v1695
        %v1705 = vrot.slane %v1219, 7
        %v1706 = vrot.slane %v1220, 7
        %v1707 = vsel %vm1439, %v1705, %v1706
        %v1708 = vrot.slane %v1249, 7
        %v1709 = vrot.slane %v1250, 7
        %v1710 = vsel %vm1439, %v1708, %v1709
        %v1711 = vrot.slane %v1279, 7
        %v1712 = vrot.slane %v1280, 7
        %v1713 = vsel %vm1439, %v1711, %v1712
        %v1714 = vrot.slane %v1309, 7
        %v1715 = vrot.slane %v1310, 7
        %v1716 = vsel %vm1439, %v1714, %v1715
        %v1721 = vrot.slane %v1220, 1
        %v1722 = vrot.slane %v1221, 1
        %v1723 = vsel %vm1600, %v1721, %v1722
        %v1724 = vrot.slane %v1250, 1
        %v1725 = vrot.slane %v1251, 1
        %v1726 = vsel %vm1600, %v1724, %v1725
        %v1727 = vrot.slane %v1280, 1
        %v1728 = vrot.slane %v1281, 1
        %v1729 = vsel %vm1600, %v1727, %v1728
        %v1730 = vrot.slane %v1310, 1
        %v1731 = vrot.slane %v1311, 1
        %v1732 = vsel %vm1600, %v1730, %v1731
        %v1741 = vrot.slane %v1222, 7
        %v1742 = vrot.slane %v1223, 7
        %v1743 = vsel %vm1439, %v1741, %v1742
        %v1744 = vrot.slane %v1252, 7
        %v1745 = vrot.slane %v1253, 7
        %v1746 = vsel %vm1439, %v1744, %v1745
        %v1747 = vrot.slane %v1282, 7
        %v1748 = vrot.slane %v1283, 7
        %v1749 = vsel %vm1439, %v1747, %v1748
        %v1750 = vrot.slane %v1312, 7
        %v1751 = vrot.slane %v1313, 7
        %v1752 = vsel %vm1439, %v1750, %v1751
        %v1757 = vrot.slane %v1223, 1
        %v1758 = vrot.slane %v1224, 1
        %v1759 = vsel %vm1600, %v1757, %v1758
        %v1760 = vrot.slane %v1253, 1
        %v1761 = vrot.slane %v1254, 1
        %v1762 = vsel %vm1600, %v1760, %v1761
        %v1763 = vrot.slane %v1283, 1
        %v1764 = vrot.slane %v1284, 1
        %v1765 = vsel %vm1600, %v1763, %v1764
        %v1766 = vrot.slane %v1313, 1
        %v1767 = vrot.slane %v1314, 1
        %v1768 = vsel %vm1600, %v1766, %v1767
        %v1785 = vrot.slane %v1315, 7
        %v1786 = vrot.slane %v1316, 7
        %v1787 = vsel %vm1439, %v1785, %v1786
        %v1788 = vrot.slane %v1318, 7
        %v1789 = vrot.slane %v1319, 7
        %v1790 = vsel %vm1439, %v1788, %v1789
        %v1791 = vrot.slane %v1321, 7
        %v1792 = vrot.slane %v1322, 7
        %v1793 = vsel %vm1439, %v1791, %v1792
        %v1794 = vrot.slane %v1324, 7
        %v1795 = vrot.slane %v1325, 7
        %v1796 = vsel %vm1439, %v1794, %v1795
        %v1797 = vrot.slane %v1327, 7
        %v1798 = vrot.slane %v1328, 7
        %v1799 = vsel %vm1439, %v1797, %v1798
        %v1800 = vrot.slane %v1330, 7
        %v1801 = vrot.slane %v1331, 7
        %v1802 = vsel %vm1439, %v1800, %v1801
        %v1803 = vrot.slane %v1333, 7
        %v1804 = vrot.slane %v1334, 7
        %v1805 = vsel %vm1439, %v1803, %v1804
        %v1806 = vrot.slane %v1336, 7
        %v1807 = vrot.slane %v1337, 7
        %v1808 = vsel %vm1439, %v1806, %v1807
        %v1817 = vrot.slane %v1316, 1
        %v1818 = vrot.slane %v1317, 1
        %v1819 = vsel %vm1600, %v1817, %v1818
        %v1820 = vrot.slane %v1319, 1
        %v1821 = vrot.slane %v1320, 1
        %v1822 = vsel %vm1600, %v1820, %v1821
        %v1823 = vrot.slane %v1322, 1
        %v1824 = vrot.slane %v1323, 1
        %v1825 = vsel %vm1600, %v1823, %v1824
        %v1826 = vrot.slane %v1325, 1
        %v1827 = vrot.slane %v1326, 1
        %v1828 = vsel %vm1600, %v1826, %v1827
        %v1829 = vrot.slane %v1328, 1
        %v1830 = vrot.slane %v1329, 1
        %v1831 = vsel %vm1600, %v1829, %v1830
        %v1832 = vrot.slane %v1331, 1
        %v1833 = vrot.slane %v1332, 1
        %v1834 = vsel %vm1600, %v1832, %v1833
        %v1835 = vrot.slane %v1334, 1
        %v1836 = vrot.slane %v1335, 1
        %v1837 = vsel %vm1600, %v1835, %v1836
        %v1838 = vrot.slane %v1337, 1
        %v1839 = vrot.slane %v1338, 1
        %v1840 = vsel %vm1600, %v1838, %v1839
        %v1843 = vrot.slane %v1339, 7
        %v1844 = vrot.slane %v1340, 7
        %v1845 = vsel %vm1439, %v1843, %v1844
        %v1847 = vrot.slane %v1340, 1
        %v1848 = vrot.slane %v1341, 1
        %v1849 = vsel %vm1600, %v1847, %v1848
        %v1852 = vrot.slane %v1342, 7
        %v1853 = vrot.slane %v1343, 7
        %v1854 = vsel %vm1439, %v1852, %v1853
        %v1856 = vrot.slane %v1343, 1
        %v1857 = vrot.slane %v1344, 1
        %v1858 = vsel %vm1600, %v1856, %v1857
        %v1875 = vrot.slane %v1345, 7
        %v1876 = vrot.slane %v1346, 7
        %v1877 = vsel %vm1439, %v1875, %v1876
        %v1878 = vrot.slane %v1348, 7
        %v1879 = vrot.slane %v1349, 7
        %v1880 = vsel %vm1439, %v1878, %v1879
        %v1881 = vrot.slane %v1351, 7
        %v1882 = vrot.slane %v1352, 7
        %v1883 = vsel %vm1439, %v1881, %v1882
        %v1884 = vrot.slane %v1354, 7
        %v1885 = vrot.slane %v1355, 7
        %v1886 = vsel %vm1439, %v1884, %v1885
        %v1887 = vrot.slane %v1357, 7
        %v1888 = vrot.slane %v1358, 7
        %v1889 = vsel %vm1439, %v1887, %v1888
        %v1890 = vrot.slane %v1360, 7
        %v1891 = vrot.slane %v1361, 7
        %v1892 = vsel %vm1439, %v1890, %v1891
        %v1893 = vrot.slane %v1363, 7
        %v1894 = vrot.slane %v1364, 7
        %v1895 = vsel %vm1439, %v1893, %v1894
        %v1896 = vrot.slane %v1366, 7
        %v1897 = vrot.slane %v1367, 7
        %v1898 = vsel %vm1439, %v1896, %v1897
        %v1907 = vrot.slane %v1346, 1
        %v1908 = vrot.slane %v1347, 1
        %v1909 = vsel %vm1600, %v1907, %v1908
        %v1910 = vrot.slane %v1349, 1
        %v1911 = vrot.slane %v1350, 1
        %v1912 = vsel %vm1600, %v1910, %v1911
        %v1913 = vrot.slane %v1352, 1
        %v1914 = vrot.slane %v1353, 1
        %v1915 = vsel %vm1600, %v1913, %v1914
        %v1916 = vrot.slane %v1355, 1
        %v1917 = vrot.slane %v1356, 1
        %v1918 = vsel %vm1600, %v1916, %v1917
        %v1919 = vrot.slane %v1358, 1
        %v1920 = vrot.slane %v1359, 1
        %v1921 = vsel %vm1600, %v1919, %v1920
        %v1922 = vrot.slane %v1361, 1
        %v1923 = vrot.slane %v1362, 1
        %v1924 = vsel %vm1600, %v1922, %v1923
        %v1925 = vrot.slane %v1364, 1
        %v1926 = vrot.slane %v1365, 1
        %v1927 = vsel %vm1600, %v1925, %v1926
        %v1928 = vrot.slane %v1367, 1
        %v1929 = vrot.slane %v1368, 1
        %v1930 = vsel %vm1600, %v1928, %v1929
        %v1933 = vrot.slane %v1369, 7
        %v1934 = vrot.slane %v1370, 7
        %v1935 = vsel %vm1439, %v1933, %v1934
        %v1937 = vrot.slane %v1370, 1
        %v1938 = vrot.slane %v1371, 1
        %v1939 = vsel %vm1600, %v1937, %v1938
        %v1942 = vrot.slane %v1372, 7
        %v1943 = vrot.slane %v1373, 7
        %v1944 = vsel %vm1439, %v1942, %v1943
        %v1946 = vrot.slane %v1373, 1
        %v1947 = vrot.slane %v1374, 1
        %v1948 = vsel %vm1600, %v1946, %v1947
        %1949 = vrot.lane.b32.xlu0 %v1196, 8
        %v1950 = vpop.permute.xlu0 %1949
        %1951 = vrot.lane.b32.xlu0 %v1199, 8
        %v1952 = vpop.permute.xlu0 %1951
        %1953 = vrot.lane.b32.xlu0 %v1202, 8
        %v1954 = vpop.permute.xlu0 %1953
        %1955 = vrot.lane.b32.xlu0 %v1205, 8
        %v1956 = vpop.permute.xlu0 %1955
        %1957 = vrot.lane.b32.xlu0 %v1208, 8
        %v1958 = vpop.permute.xlu0 %1957
        %1959 = vrot.lane.b32.xlu0 %v1211, 8
        %v1960 = vpop.permute.xlu0 %1959
        %1961 = vrot.lane.b32.xlu0 %v1214, 8
        %v1962 = vpop.permute.xlu0 %1961
        %1963 = vrot.lane.b32.xlu0 %v1217, 8
        %v1964 = vpop.permute.xlu0 %1963
        %1965 = vrot.lane.b32.xlu0 %v1226, 8
        %v1966 = vpop.permute.xlu0 %1965
        %1967 = vrot.lane.b32.xlu0 %v1229, 8
        %v1968 = vpop.permute.xlu0 %1967
        %1969 = vrot.lane.b32.xlu0 %v1232, 8
        %v1970 = vpop.permute.xlu0 %1969
        %1971 = vrot.lane.b32.xlu0 %v1235, 8
        %v1972 = vpop.permute.xlu0 %1971
        %1973 = vrot.lane.b32.xlu0 %v1238, 8
        %v1974 = vpop.permute.xlu0 %1973
        %1975 = vrot.lane.b32.xlu0 %v1241, 8
        %v1976 = vpop.permute.xlu0 %1975
        %1977 = vrot.lane.b32.xlu0 %v1244, 8
        %v1978 = vpop.permute.xlu0 %1977
        %1979 = vrot.lane.b32.xlu0 %v1247, 8
        %v1980 = vpop.permute.xlu0 %1979
        %1981 = vrot.lane.b32.xlu0 %v1256, 8
        %v1982 = vpop.permute.xlu0 %1981
        %1983 = vrot.lane.b32.xlu0 %v1259, 8
        %v1984 = vpop.permute.xlu0 %1983
        %1985 = vrot.lane.b32.xlu0 %v1262, 8
        %v1986 = vpop.permute.xlu0 %1985
        %1987 = vrot.lane.b32.xlu0 %v1265, 8
        %v1988 = vpop.permute.xlu0 %1987
        %1989 = vrot.lane.b32.xlu0 %v1268, 8
        %v1990 = vpop.permute.xlu0 %1989
        %1991 = vrot.lane.b32.xlu0 %v1271, 8
        %v1992 = vpop.permute.xlu0 %1991
        %1993 = vrot.lane.b32.xlu0 %v1274, 8
        %v1994 = vpop.permute.xlu0 %1993
        %1995 = vrot.lane.b32.xlu0 %v1277, 8
        %v1996 = vpop.permute.xlu0 %1995
        %1997 = vrot.lane.b32.xlu0 %v1286, 8
        %v1998 = vpop.permute.xlu0 %1997
        %1999 = vrot.lane.b32.xlu0 %v1289, 8
        %v2000 = vpop.permute.xlu0 %1999
        %2001 = vrot.lane.b32.xlu0 %v1292, 8
        %v2002 = vpop.permute.xlu0 %2001
        %2003 = vrot.lane.b32.xlu0 %v1295, 8
        %v2004 = vpop.permute.xlu0 %2003
        %2005 = vrot.lane.b32.xlu0 %v1298, 8
        %v2006 = vpop.permute.xlu0 %2005
        %2007 = vrot.lane.b32.xlu0 %v1301, 8
        %v2008 = vpop.permute.xlu0 %2007
        %2009 = vrot.lane.b32.xlu0 %v1304, 8
        %v2010 = vpop.permute.xlu0 %2009
        %2011 = vrot.lane.b32.xlu0 %v1307, 8
        %v2012 = vpop.permute.xlu0 %2011
        %2045 = vrot.lane.b32.xlu0 %v1603, 16
        %v2046 = vpop.permute.xlu0 %2045
        %2047 = vrot.lane.b32.xlu0 %v1606, 16
        %v2048 = vpop.permute.xlu0 %2047
        %2049 = vrot.lane.b32.xlu0 %v1609, 16
        %v2050 = vpop.permute.xlu0 %2049
        %2051 = vrot.lane.b32.xlu0 %v1612, 16
        %v2052 = vpop.permute.xlu0 %2051
        %2053 = vrot.lane.b32.xlu0 %v1615, 16
        %v2054 = vpop.permute.xlu0 %2053
        %2055 = vrot.lane.b32.xlu0 %v1618, 16
        %v2056 = vpop.permute.xlu0 %2055
        %2057 = vrot.lane.b32.xlu0 %v1621, 16
        %v2058 = vpop.permute.xlu0 %2057
        %2059 = vrot.lane.b32.xlu0 %v1624, 16
        %v2060 = vpop.permute.xlu0 %2059
        %2061 = vrot.lane.b32.xlu0 %v1627, 16
        %v2062 = vpop.permute.xlu0 %2061
        %2063 = vrot.lane.b32.xlu0 %v1630, 16
        %v2064 = vpop.permute.xlu0 %2063
        %2065 = vrot.lane.b32.xlu0 %v1633, 16
        %v2066 = vpop.permute.xlu0 %2065
        %2067 = vrot.lane.b32.xlu0 %v1636, 16
        %v2068 = vpop.permute.xlu0 %2067
        %2069 = vrot.lane.b32.xlu0 %v1639, 16
        %v2070 = vpop.permute.xlu0 %2069
        %2071 = vrot.lane.b32.xlu0 %v1642, 16
        %v2072 = vpop.permute.xlu0 %2071
        %2073 = vrot.lane.b32.xlu0 %v1645, 16
        %v2074 = vpop.permute.xlu0 %2073
        %2075 = vrot.lane.b32.xlu0 %v1648, 16
        %v2076 = vpop.permute.xlu0 %2075
        %2077 = vrot.lane.b32.xlu0 %v1651, 16
        %v2078 = vpop.permute.xlu0 %2077
        %2079 = vrot.lane.b32.xlu0 %v1654, 16
        %v2080 = vpop.permute.xlu0 %2079
        %2081 = vrot.lane.b32.xlu0 %v1657, 16
        %v2082 = vpop.permute.xlu0 %2081
        %2083 = vrot.lane.b32.xlu0 %v1660, 16
        %v2084 = vpop.permute.xlu0 %2083
        %2085 = vrot.lane.b32.xlu0 %v1663, 16
        %v2086 = vpop.permute.xlu0 %2085
        %2087 = vrot.lane.b32.xlu0 %v1666, 16
        %v2088 = vpop.permute.xlu0 %2087
        %2089 = vrot.lane.b32.xlu0 %v1669, 16
        %v2090 = vpop.permute.xlu0 %2089
        %2091 = vrot.lane.b32.xlu0 %v1672, 16
        %v2092 = vpop.permute.xlu0 %2091
        %2093 = vrot.lane.b32.xlu0 %v1675, 16
        %v2094 = vpop.permute.xlu0 %2093
        %2095 = vrot.lane.b32.xlu0 %v1678, 16
        %v2096 = vpop.permute.xlu0 %2095
        %2097 = vrot.lane.b32.xlu0 %v1681, 16
        %v2098 = vpop.permute.xlu0 %2097
        %2099 = vrot.lane.b32.xlu0 %v1684, 16
        %v2100 = vpop.permute.xlu0 %2099
        %2101 = vrot.lane.b32.xlu0 %v1687, 16
        %v2102 = vpop.permute.xlu0 %2101
        %2103 = vrot.lane.b32.xlu0 %v1690, 16
        %v2104 = vpop.permute.xlu0 %2103
        %2105 = vrot.lane.b32.xlu0 %v1693, 16
        %v2106 = vpop.permute.xlu0 %2105
        %2107 = vrot.lane.b32.xlu0 %v1696, 16
        %v2108 = vpop.permute.xlu0 %2107
        %2141 = vrot.lane.b32.xlu0 %v1445, 24
        %v2142 = vpop.permute.xlu0 %2141
        %2143 = vrot.lane.b32.xlu0 %v1448, 24
        %v2144 = vpop.permute.xlu0 %2143
        %2145 = vrot.lane.b32.xlu0 %v1451, 24
        %v2146 = vpop.permute.xlu0 %2145
        %2147 = vrot.lane.b32.xlu0 %v1454, 24
        %v2148 = vpop.permute.xlu0 %2147
        %2149 = vrot.lane.b32.xlu0 %v1457, 24
        %v2150 = vpop.permute.xlu0 %2149
        %2151 = vrot.lane.b32.xlu0 %v1460, 24
        %v2152 = vpop.permute.xlu0 %2151
        %2153 = vrot.lane.b32.xlu0 %v1463, 24
        %v2154 = vpop.permute.xlu0 %2153
        %2155 = vrot.lane.b32.xlu0 %v1707, 24
        %v2156 = vpop.permute.xlu0 %2155
        %2157 = vrot.lane.b32.xlu0 %v1469, 24
        %v2158 = vpop.permute.xlu0 %2157
        %2159 = vrot.lane.b32.xlu0 %v1472, 24
        %v2160 = vpop.permute.xlu0 %2159
        %2161 = vrot.lane.b32.xlu0 %v1475, 24
        %v2162 = vpop.permute.xlu0 %2161
        %2163 = vrot.lane.b32.xlu0 %v1478, 24
        %v2164 = vpop.permute.xlu0 %2163
        %2165 = vrot.lane.b32.xlu0 %v1481, 24
        %v2166 = vpop.permute.xlu0 %2165
        %2167 = vrot.lane.b32.xlu0 %v1484, 24
        %v2168 = vpop.permute.xlu0 %2167
        %2169 = vrot.lane.b32.xlu0 %v1487, 24
        %v2170 = vpop.permute.xlu0 %2169
        %2171 = vrot.lane.b32.xlu0 %v1710, 24
        %v2172 = vpop.permute.xlu0 %2171
        %2173 = vrot.lane.b32.xlu0 %v1493, 24
        %v2174 = vpop.permute.xlu0 %2173
        %2175 = vrot.lane.b32.xlu0 %v1496, 24
        %v2176 = vpop.permute.xlu0 %2175
        %2177 = vrot.lane.b32.xlu0 %v1499, 24
        %v2178 = vpop.permute.xlu0 %2177
        %2179 = vrot.lane.b32.xlu0 %v1502, 24
        %v2180 = vpop.permute.xlu0 %2179
        %2181 = vrot.lane.b32.xlu0 %v1505, 24
        %v2182 = vpop.permute.xlu0 %2181
        %2183 = vrot.lane.b32.xlu0 %v1508, 24
        %v2184 = vpop.permute.xlu0 %2183
        %2185 = vrot.lane.b32.xlu0 %v1511, 24
        %v2186 = vpop.permute.xlu0 %2185
        %2187 = vrot.lane.b32.xlu0 %v1713, 24
        %v2188 = vpop.permute.xlu0 %2187
        %2189 = vrot.lane.b32.xlu0 %v1517, 24
        %v2190 = vpop.permute.xlu0 %2189
        %2191 = vrot.lane.b32.xlu0 %v1520, 24
        %v2192 = vpop.permute.xlu0 %2191
        %2193 = vrot.lane.b32.xlu0 %v1523, 24
        %v2194 = vpop.permute.xlu0 %2193
        %2195 = vrot.lane.b32.xlu0 %v1526, 24
        %v2196 = vpop.permute.xlu0 %2195
        %2197 = vrot.lane.b32.xlu0 %v1529, 24
        %v2198 = vpop.permute.xlu0 %2197
        %2199 = vrot.lane.b32.xlu0 %v1532, 24
        %v2200 = vpop.permute.xlu0 %2199
        %2201 = vrot.lane.b32.xlu0 %v1535, 24
        %v2202 = vpop.permute.xlu0 %2201
        %2203 = vrot.lane.b32.xlu0 %v1716, 24
        %v2204 = vpop.permute.xlu0 %2203
        %2237 = vrot.lane.b32.xlu0 %v1199, 32
        %v2238 = vpop.permute.xlu0 %2237
        %2239 = vrot.lane.b32.xlu0 %v1202, 32
        %v2240 = vpop.permute.xlu0 %2239
        %2241 = vrot.lane.b32.xlu0 %v1205, 32
        %v2242 = vpop.permute.xlu0 %2241
        %2243 = vrot.lane.b32.xlu0 %v1208, 32
        %v2244 = vpop.permute.xlu0 %2243
        %2245 = vrot.lane.b32.xlu0 %v1211, 32
        %v2246 = vpop.permute.xlu0 %2245
        %2247 = vrot.lane.b32.xlu0 %v1214, 32
        %v2248 = vpop.permute.xlu0 %2247
        %2249 = vrot.lane.b32.xlu0 %v1217, 32
        %v2250 = vpop.permute.xlu0 %2249
        %2251 = vrot.lane.b32.xlu0 %v1220, 32
        %v2252 = vpop.permute.xlu0 %2251
        %2253 = vrot.lane.b32.xlu0 %v1229, 32
        %v2254 = vpop.permute.xlu0 %2253
        %2255 = vrot.lane.b32.xlu0 %v1232, 32
        %v2256 = vpop.permute.xlu0 %2255
        %2257 = vrot.lane.b32.xlu0 %v1235, 32
        %v2258 = vpop.permute.xlu0 %2257
        %2259 = vrot.lane.b32.xlu0 %v1238, 32
        %v2260 = vpop.permute.xlu0 %2259
        %2261 = vrot.lane.b32.xlu0 %v1241, 32
        %v2262 = vpop.permute.xlu0 %2261
        %2263 = vrot.lane.b32.xlu0 %v1244, 32
        %v2264 = vpop.permute.xlu0 %2263
        %2265 = vrot.lane.b32.xlu0 %v1247, 32
        %v2266 = vpop.permute.xlu0 %2265
        %2267 = vrot.lane.b32.xlu0 %v1250, 32
        %v2268 = vpop.permute.xlu0 %2267
        %2269 = vrot.lane.b32.xlu0 %v1259, 32
        %v2270 = vpop.permute.xlu0 %2269
        %2271 = vrot.lane.b32.xlu0 %v1262, 32
        %v2272 = vpop.permute.xlu0 %2271
        %2273 = vrot.lane.b32.xlu0 %v1265, 32
        %v2274 = vpop.permute.xlu0 %2273
        %2275 = vrot.lane.b32.xlu0 %v1268, 32
        %v2276 = vpop.permute.xlu0 %2275
        %2277 = vrot.lane.b32.xlu0 %v1271, 32
        %v2278 = vpop.permute.xlu0 %2277
        %2279 = vrot.lane.b32.xlu0 %v1274, 32
        %v2280 = vpop.permute.xlu0 %2279
        %2281 = vrot.lane.b32.xlu0 %v1277, 32
        %v2282 = vpop.permute.xlu0 %2281
        %2283 = vrot.lane.b32.xlu0 %v1280, 32
        %v2284 = vpop.permute.xlu0 %2283
        %2285 = vrot.lane.b32.xlu0 %v1289, 32
        %v2286 = vpop.permute.xlu0 %2285
        %2287 = vrot.lane.b32.xlu0 %v1292, 32
        %v2288 = vpop.permute.xlu0 %2287
        %2289 = vrot.lane.b32.xlu0 %v1295, 32
        %v2290 = vpop.permute.xlu0 %2289
        %2291 = vrot.lane.b32.xlu0 %v1298, 32
        %v2292 = vpop.permute.xlu0 %2291
        %2293 = vrot.lane.b32.xlu0 %v1301, 32
        %v2294 = vpop.permute.xlu0 %2293
        %2295 = vrot.lane.b32.xlu0 %v1304, 32
        %v2296 = vpop.permute.xlu0 %2295
        %2297 = vrot.lane.b32.xlu0 %v1307, 32
        %v2298 = vpop.permute.xlu0 %2297
        %2299 = vrot.lane.b32.xlu0 %v1310, 32
        %v2300 = vpop.permute.xlu0 %2299
        %2333 = vrot.lane.b32.xlu0 %v1606, 40
        %v2334 = vpop.permute.xlu0 %2333
        %2335 = vrot.lane.b32.xlu0 %v1609, 40
        %v2336 = vpop.permute.xlu0 %2335
        %2337 = vrot.lane.b32.xlu0 %v1612, 40
        %v2338 = vpop.permute.xlu0 %2337
        %2339 = vrot.lane.b32.xlu0 %v1615, 40
        %v2340 = vpop.permute.xlu0 %2339
        %2341 = vrot.lane.b32.xlu0 %v1618, 40
        %v2342 = vpop.permute.xlu0 %2341
        %2343 = vrot.lane.b32.xlu0 %v1621, 40
        %v2344 = vpop.permute.xlu0 %2343
        %2345 = vrot.lane.b32.xlu0 %v1624, 40
        %v2346 = vpop.permute.xlu0 %2345
        %2347 = vrot.lane.b32.xlu0 %v1723, 40
        %v2348 = vpop.permute.xlu0 %2347
        %2349 = vrot.lane.b32.xlu0 %v1630, 40
        %v2350 = vpop.permute.xlu0 %2349
        %2351 = vrot.lane.b32.xlu0 %v1633, 40
        %v2352 = vpop.permute.xlu0 %2351
        %2353 = vrot.lane.b32.xlu0 %v1636, 40
        %v2354 = vpop.permute.xlu0 %2353
        %2355 = vrot.lane.b32.xlu0 %v1639, 40
        %v2356 = vpop.permute.xlu0 %2355
        %2357 = vrot.lane.b32.xlu0 %v1642, 40
        %v2358 = vpop.permute.xlu0 %2357
        %2359 = vrot.lane.b32.xlu0 %v1645, 40
        %v2360 = vpop.permute.xlu0 %2359
        %2361 = vrot.lane.b32.xlu0 %v1648, 40
        %v2362 = vpop.permute.xlu0 %2361
        %2363 = vrot.lane.b32.xlu0 %v1726, 40
        %v2364 = vpop.permute.xlu0 %2363
        %2365 = vrot.lane.b32.xlu0 %v1654, 40
        %v2366 = vpop.permute.xlu0 %2365
        %2367 = vrot.lane.b32.xlu0 %v1657, 40
        %v2368 = vpop.permute.xlu0 %2367
        %2369 = vrot.lane.b32.xlu0 %v1660, 40
        %v2370 = vpop.permute.xlu0 %2369
        %2371 = vrot.lane.b32.xlu0 %v1663, 40
        %v2372 = vpop.permute.xlu0 %2371
        %2373 = vrot.lane.b32.xlu0 %v1666, 40
        %v2374 = vpop.permute.xlu0 %2373
        %2375 = vrot.lane.b32.xlu0 %v1669, 40
        %v2376 = vpop.permute.xlu0 %2375
        %2377 = vrot.lane.b32.xlu0 %v1672, 40
        %v2378 = vpop.permute.xlu0 %2377
        %2379 = vrot.lane.b32.xlu0 %v1729, 40
        %v2380 = vpop.permute.xlu0 %2379
        %2381 = vrot.lane.b32.xlu0 %v1678, 40
        %v2382 = vpop.permute.xlu0 %2381
        %2383 = vrot.lane.b32.xlu0 %v1681, 40
        %v2384 = vpop.permute.xlu0 %2383
        %2385 = vrot.lane.b32.xlu0 %v1684, 40
        %v2386 = vpop.permute.xlu0 %2385
        %2387 = vrot.lane.b32.xlu0 %v1687, 40
        %v2388 = vpop.permute.xlu0 %2387
        %2389 = vrot.lane.b32.xlu0 %v1690, 40
        %v2390 = vpop.permute.xlu0 %2389
        %2391 = vrot.lane.b32.xlu0 %v1693, 40
        %v2392 = vpop.permute.xlu0 %2391
        %2393 = vrot.lane.b32.xlu0 %v1696, 40
        %v2394 = vpop.permute.xlu0 %2393
        %2395 = vrot.lane.b32.xlu0 %v1732, 40
        %v2396 = vpop.permute.xlu0 %2395
        %2429 = vrot.lane.b32.xlu0 %v1448, 48
        %v2430 = vpop.permute.xlu0 %2429
        %2431 = vrot.lane.b32.xlu0 %v1451, 48
        %v2432 = vpop.permute.xlu0 %2431
        %2433 = vrot.lane.b32.xlu0 %v1454, 48
        %v2434 = vpop.permute.xlu0 %2433
        %2435 = vrot.lane.b32.xlu0 %v1457, 48
        %v2436 = vpop.permute.xlu0 %2435
        %2437 = vrot.lane.b32.xlu0 %v1460, 48
        %v2438 = vpop.permute.xlu0 %2437
        %2439 = vrot.lane.b32.xlu0 %v1463, 48
        %v2440 = vpop.permute.xlu0 %2439
        %2441 = vrot.lane.b32.xlu0 %v1707, 48
        %v2442 = vpop.permute.xlu0 %2441
        %2443 = vrot.lane.b32.xlu0 %v1743, 48
        %v2444 = vpop.permute.xlu0 %2443
        %2445 = vrot.lane.b32.xlu0 %v1472, 48
        %v2446 = vpop.permute.xlu0 %2445
        %2447 = vrot.lane.b32.xlu0 %v1475, 48
        %v2448 = vpop.permute.xlu0 %2447
        %2449 = vrot.lane.b32.xlu0 %v1478, 48
        %v2450 = vpop.permute.xlu0 %2449
        %2451 = vrot.lane.b32.xlu0 %v1481, 48
        %v2452 = vpop.permute.xlu0 %2451
        %2453 = vrot.lane.b32.xlu0 %v1484, 48
        %v2454 = vpop.permute.xlu0 %2453
        %2455 = vrot.lane.b32.xlu0 %v1487, 48
        %v2456 = vpop.permute.xlu0 %2455
        %2457 = vrot.lane.b32.xlu0 %v1710, 48
        %v2458 = vpop.permute.xlu0 %2457
        %2459 = vrot.lane.b32.xlu0 %v1746, 48
        %v2460 = vpop.permute.xlu0 %2459
        %2461 = vrot.lane.b32.xlu0 %v1496, 48
        %v2462 = vpop.permute.xlu0 %2461
        %2463 = vrot.lane.b32.xlu0 %v1499, 48
        %v2464 = vpop.permute.xlu0 %2463
        %2465 = vrot.lane.b32.xlu0 %v1502, 48
        %v2466 = vpop.permute.xlu0 %2465
        %2467 = vrot.lane.b32.xlu0 %v1505, 48
        %v2468 = vpop.permute.xlu0 %2467
        %2469 = vrot.lane.b32.xlu0 %v1508, 48
        %v2470 = vpop.permute.xlu0 %2469
        %2471 = vrot.lane.b32.xlu0 %v1511, 48
        %v2472 = vpop.permute.xlu0 %2471
        %2473 = vrot.lane.b32.xlu0 %v1713, 48
        %v2474 = vpop.permute.xlu0 %2473
        %2475 = vrot.lane.b32.xlu0 %v1749, 48
        %v2476 = vpop.permute.xlu0 %2475
        %2477 = vrot.lane.b32.xlu0 %v1520, 48
        %v2478 = vpop.permute.xlu0 %2477
        %2479 = vrot.lane.b32.xlu0 %v1523, 48
        %v2480 = vpop.permute.xlu0 %2479
        %2481 = vrot.lane.b32.xlu0 %v1526, 48
        %v2482 = vpop.permute.xlu0 %2481
        %2483 = vrot.lane.b32.xlu0 %v1529, 48
        %v2484 = vpop.permute.xlu0 %2483
        %2485 = vrot.lane.b32.xlu0 %v1532, 48
        %v2486 = vpop.permute.xlu0 %2485
        %2487 = vrot.lane.b32.xlu0 %v1535, 48
        %v2488 = vpop.permute.xlu0 %2487
        %2489 = vrot.lane.b32.xlu0 %v1716, 48
        %v2490 = vpop.permute.xlu0 %2489
        %2491 = vrot.lane.b32.xlu0 %v1752, 48
        %v2492 = vpop.permute.xlu0 %2491
        %2525 = vrot.lane.b32.xlu0 %v1202, 56
        %v2526 = vpop.permute.xlu0 %2525
        %2527 = vrot.lane.b32.xlu0 %v1205, 56
        %v2528 = vpop.permute.xlu0 %2527
        %2529 = vrot.lane.b32.xlu0 %v1208, 56
        %v2530 = vpop.permute.xlu0 %2529
        %2531 = vrot.lane.b32.xlu0 %v1211, 56
        %v2532 = vpop.permute.xlu0 %2531
        %2533 = vrot.lane.b32.xlu0 %v1214, 56
        %v2534 = vpop.permute.xlu0 %2533
        %2535 = vrot.lane.b32.xlu0 %v1217, 56
        %v2536 = vpop.permute.xlu0 %2535
        %2537 = vrot.lane.b32.xlu0 %v1220, 56
        %v2538 = vpop.permute.xlu0 %2537
        %2539 = vrot.lane.b32.xlu0 %v1223, 56
        %v2540 = vpop.permute.xlu0 %2539
        %2541 = vrot.lane.b32.xlu0 %v1232, 56
        %v2542 = vpop.permute.xlu0 %2541
        %2543 = vrot.lane.b32.xlu0 %v1235, 56
        %v2544 = vpop.permute.xlu0 %2543
        %2545 = vrot.lane.b32.xlu0 %v1238, 56
        %v2546 = vpop.permute.xlu0 %2545
        %2547 = vrot.lane.b32.xlu0 %v1241, 56
        %v2548 = vpop.permute.xlu0 %2547
        %2549 = vrot.lane.b32.xlu0 %v1244, 56
        %v2550 = vpop.permute.xlu0 %2549
        %2551 = vrot.lane.b32.xlu0 %v1247, 56
        %v2552 = vpop.permute.xlu0 %2551
        %2553 = vrot.lane.b32.xlu0 %v1250, 56
        %v2554 = vpop.permute.xlu0 %2553
        %2555 = vrot.lane.b32.xlu0 %v1253, 56
        %v2556 = vpop.permute.xlu0 %2555
        %2557 = vrot.lane.b32.xlu0 %v1262, 56
        %v2558 = vpop.permute.xlu0 %2557
        %2559 = vrot.lane.b32.xlu0 %v1265, 56
        %v2560 = vpop.permute.xlu0 %2559
        %2561 = vrot.lane.b32.xlu0 %v1268, 56
        %v2562 = vpop.permute.xlu0 %2561
        %2563 = vrot.lane.b32.xlu0 %v1271, 56
        %v2564 = vpop.permute.xlu0 %2563
        %2565 = vrot.lane.b32.xlu0 %v1274, 56
        %v2566 = vpop.permute.xlu0 %2565
        %2567 = vrot.lane.b32.xlu0 %v1277, 56
        %v2568 = vpop.permute.xlu0 %2567
        %2569 = vrot.lane.b32.xlu0 %v1280, 56
        %v2570 = vpop.permute.xlu0 %2569
        %2571 = vrot.lane.b32.xlu0 %v1283, 56
        %v2572 = vpop.permute.xlu0 %2571
        %2573 = vrot.lane.b32.xlu0 %v1292, 56
        %v2574 = vpop.permute.xlu0 %2573
        %2575 = vrot.lane.b32.xlu0 %v1295, 56
        %v2576 = vpop.permute.xlu0 %2575
        %2577 = vrot.lane.b32.xlu0 %v1298, 56
        %v2578 = vpop.permute.xlu0 %2577
        %2579 = vrot.lane.b32.xlu0 %v1301, 56
        %v2580 = vpop.permute.xlu0 %2579
        %2581 = vrot.lane.b32.xlu0 %v1304, 56
        %v2582 = vpop.permute.xlu0 %2581
        %2583 = vrot.lane.b32.xlu0 %v1307, 56
        %v2584 = vpop.permute.xlu0 %2583
        %2585 = vrot.lane.b32.xlu0 %v1310, 56
        %v2586 = vpop.permute.xlu0 %2585
        %2587 = vrot.lane.b32.xlu0 %v1313, 56
        %v2588 = vpop.permute.xlu0 %2587
        %2621 = vrot.lane.b32.xlu0 %v1609, 64
        %v2622 = vpop.permute.xlu0 %2621
        %2623 = vrot.lane.b32.xlu0 %v1612, 64
        %v2624 = vpop.permute.xlu0 %2623
        %2625 = vrot.lane.b32.xlu0 %v1615, 64
        %v2626 = vpop.permute.xlu0 %2625
        %2627 = vrot.lane.b32.xlu0 %v1618, 64
        %v2628 = vpop.permute.xlu0 %2627
        %2629 = vrot.lane.b32.xlu0 %v1621, 64
        %v2630 = vpop.permute.xlu0 %2629
        %2631 = vrot.lane.b32.xlu0 %v1624, 64
        %v2632 = vpop.permute.xlu0 %2631
        %2633 = vrot.lane.b32.xlu0 %v1723, 64
        %v2634 = vpop.permute.xlu0 %2633
        %2635 = vrot.lane.b32.xlu0 %v1759, 64
        %v2636 = vpop.permute.xlu0 %2635
        %2637 = vrot.lane.b32.xlu0 %v1633, 64
        %v2638 = vpop.permute.xlu0 %2637
        %2639 = vrot.lane.b32.xlu0 %v1636, 64
        %v2640 = vpop.permute.xlu0 %2639
        %2641 = vrot.lane.b32.xlu0 %v1639, 64
        %v2642 = vpop.permute.xlu0 %2641
        %2643 = vrot.lane.b32.xlu0 %v1642, 64
        %v2644 = vpop.permute.xlu0 %2643
        %2645 = vrot.lane.b32.xlu0 %v1645, 64
        %v2646 = vpop.permute.xlu0 %2645
        %2647 = vrot.lane.b32.xlu0 %v1648, 64
        %v2648 = vpop.permute.xlu0 %2647
        %2649 = vrot.lane.b32.xlu0 %v1726, 64
        %v2650 = vpop.permute.xlu0 %2649
        %2651 = vrot.lane.b32.xlu0 %v1762, 64
        %v2652 = vpop.permute.xlu0 %2651
        %2653 = vrot.lane.b32.xlu0 %v1657, 64
        %v2654 = vpop.permute.xlu0 %2653
        %2655 = vrot.lane.b32.xlu0 %v1660, 64
        %v2656 = vpop.permute.xlu0 %2655
        %2657 = vrot.lane.b32.xlu0 %v1663, 64
        %v2658 = vpop.permute.xlu0 %2657
        %2659 = vrot.lane.b32.xlu0 %v1666, 64
        %v2660 = vpop.permute.xlu0 %2659
        %2661 = vrot.lane.b32.xlu0 %v1669, 64
        %v2662 = vpop.permute.xlu0 %2661
        %2663 = vrot.lane.b32.xlu0 %v1672, 64
        %v2664 = vpop.permute.xlu0 %2663
        %2665 = vrot.lane.b32.xlu0 %v1729, 64
        %v2666 = vpop.permute.xlu0 %2665
        %2667 = vrot.lane.b32.xlu0 %v1765, 64
        %v2668 = vpop.permute.xlu0 %2667
        %2669 = vrot.lane.b32.xlu0 %v1681, 64
        %v2670 = vpop.permute.xlu0 %2669
        %2671 = vrot.lane.b32.xlu0 %v1684, 64
        %v2672 = vpop.permute.xlu0 %2671
        %2673 = vrot.lane.b32.xlu0 %v1687, 64
        %v2674 = vpop.permute.xlu0 %2673
        %2675 = vrot.lane.b32.xlu0 %v1690, 64
        %v2676 = vpop.permute.xlu0 %2675
        %2677 = vrot.lane.b32.xlu0 %v1693, 64
        %v2678 = vpop.permute.xlu0 %2677
        %2679 = vrot.lane.b32.xlu0 %v1696, 64
        %v2680 = vpop.permute.xlu0 %2679
        %2681 = vrot.lane.b32.xlu0 %v1732, 64
        %v2682 = vpop.permute.xlu0 %2681
        %2683 = vrot.lane.b32.xlu0 %v1768, 64
        %v2684 = vpop.permute.xlu0 %2683
        %2717 = vrot.lane.b32.xlu0 %v1466, 72
        %v2718 = vpop.permute.xlu0 %2717
        %2719 = vrot.lane.b32.xlu0 %v1469, 72
        %v2720 = vpop.permute.xlu0 %2719
        %2721 = vrot.lane.b32.xlu0 %v1472, 72
        %v2722 = vpop.permute.xlu0 %2721
        %2723 = vrot.lane.b32.xlu0 %v1475, 72
        %v2724 = vpop.permute.xlu0 %2723
        %2725 = vrot.lane.b32.xlu0 %v1478, 72
        %v2726 = vpop.permute.xlu0 %2725
        %2727 = vrot.lane.b32.xlu0 %v1481, 72
        %v2728 = vpop.permute.xlu0 %2727
        %2729 = vrot.lane.b32.xlu0 %v1484, 72
        %v2730 = vpop.permute.xlu0 %2729
        %2731 = vrot.lane.b32.xlu0 %v1487, 72
        %v2732 = vpop.permute.xlu0 %2731
        %2733 = vrot.lane.b32.xlu0 %v1490, 72
        %v2734 = vpop.permute.xlu0 %2733
        %2735 = vrot.lane.b32.xlu0 %v1493, 72
        %v2736 = vpop.permute.xlu0 %2735
        %2737 = vrot.lane.b32.xlu0 %v1496, 72
        %v2738 = vpop.permute.xlu0 %2737
        %2739 = vrot.lane.b32.xlu0 %v1499, 72
        %v2740 = vpop.permute.xlu0 %2739
        %2741 = vrot.lane.b32.xlu0 %v1502, 72
        %v2742 = vpop.permute.xlu0 %2741
        %2743 = vrot.lane.b32.xlu0 %v1505, 72
        %v2744 = vpop.permute.xlu0 %2743
        %2745 = vrot.lane.b32.xlu0 %v1508, 72
        %v2746 = vpop.permute.xlu0 %2745
        %2747 = vrot.lane.b32.xlu0 %v1511, 72
        %v2748 = vpop.permute.xlu0 %2747
        %2749 = vrot.lane.b32.xlu0 %v1514, 72
        %v2750 = vpop.permute.xlu0 %2749
        %2751 = vrot.lane.b32.xlu0 %v1517, 72
        %v2752 = vpop.permute.xlu0 %2751
        %2753 = vrot.lane.b32.xlu0 %v1520, 72
        %v2754 = vpop.permute.xlu0 %2753
        %2755 = vrot.lane.b32.xlu0 %v1523, 72
        %v2756 = vpop.permute.xlu0 %2755
        %2757 = vrot.lane.b32.xlu0 %v1526, 72
        %v2758 = vpop.permute.xlu0 %2757
        %2759 = vrot.lane.b32.xlu0 %v1529, 72
        %v2760 = vpop.permute.xlu0 %2759
        %2761 = vrot.lane.b32.xlu0 %v1532, 72
        %v2762 = vpop.permute.xlu0 %2761
        %2763 = vrot.lane.b32.xlu0 %v1535, 72
        %v2764 = vpop.permute.xlu0 %2763
        %2765 = vrot.lane.b32.xlu0 %v1787, 72
        %v2766 = vpop.permute.xlu0 %2765
        %2767 = vrot.lane.b32.xlu0 %v1790, 72
        %v2768 = vpop.permute.xlu0 %2767
        %2769 = vrot.lane.b32.xlu0 %v1793, 72
        %v2770 = vpop.permute.xlu0 %2769
        %2771 = vrot.lane.b32.xlu0 %v1796, 72
        %v2772 = vpop.permute.xlu0 %2771
        %2773 = vrot.lane.b32.xlu0 %v1799, 72
        %v2774 = vpop.permute.xlu0 %2773
        %2775 = vrot.lane.b32.xlu0 %v1802, 72
        %v2776 = vpop.permute.xlu0 %2775
        %2777 = vrot.lane.b32.xlu0 %v1805, 72
        %v2778 = vpop.permute.xlu0 %2777
        %2779 = vrot.lane.b32.xlu0 %v1808, 72
        %v2780 = vpop.permute.xlu0 %2779
        %2813 = vrot.lane.b32.xlu0 %v1226, 80
        %v2814 = vpop.permute.xlu0 %2813
        %2815 = vrot.lane.b32.xlu0 %v1229, 80
        %v2816 = vpop.permute.xlu0 %2815
        %2817 = vrot.lane.b32.xlu0 %v1232, 80
        %v2818 = vpop.permute.xlu0 %2817
        %2819 = vrot.lane.b32.xlu0 %v1235, 80
        %v2820 = vpop.permute.xlu0 %2819
        %2821 = vrot.lane.b32.xlu0 %v1238, 80
        %v2822 = vpop.permute.xlu0 %2821
        %2823 = vrot.lane.b32.xlu0 %v1241, 80
        %v2824 = vpop.permute.xlu0 %2823
        %2825 = vrot.lane.b32.xlu0 %v1244, 80
        %v2826 = vpop.permute.xlu0 %2825
        %2827 = vrot.lane.b32.xlu0 %v1247, 80
        %v2828 = vpop.permute.xlu0 %2827
        %2829 = vrot.lane.b32.xlu0 %v1256, 80
        %v2830 = vpop.permute.xlu0 %2829
        %2831 = vrot.lane.b32.xlu0 %v1259, 80
        %v2832 = vpop.permute.xlu0 %2831
        %2833 = vrot.lane.b32.xlu0 %v1262, 80
        %v2834 = vpop.permute.xlu0 %2833
        %2835 = vrot.lane.b32.xlu0 %v1265, 80
        %v2836 = vpop.permute.xlu0 %2835
        %2837 = vrot.lane.b32.xlu0 %v1268, 80
        %v2838 = vpop.permute.xlu0 %2837
        %2839 = vrot.lane.b32.xlu0 %v1271, 80
        %v2840 = vpop.permute.xlu0 %2839
        %2841 = vrot.lane.b32.xlu0 %v1274, 80
        %v2842 = vpop.permute.xlu0 %2841
        %2843 = vrot.lane.b32.xlu0 %v1277, 80
        %v2844 = vpop.permute.xlu0 %2843
        %2845 = vrot.lane.b32.xlu0 %v1286, 80
        %v2846 = vpop.permute.xlu0 %2845
        %2847 = vrot.lane.b32.xlu0 %v1289, 80
        %v2848 = vpop.permute.xlu0 %2847
        %2849 = vrot.lane.b32.xlu0 %v1292, 80
        %v2850 = vpop.permute.xlu0 %2849
        %2851 = vrot.lane.b32.xlu0 %v1295, 80
        %v2852 = vpop.permute.xlu0 %2851
        %2853 = vrot.lane.b32.xlu0 %v1298, 80
        %v2854 = vpop.permute.xlu0 %2853
        %2855 = vrot.lane.b32.xlu0 %v1301, 80
        %v2856 = vpop.permute.xlu0 %2855
        %2857 = vrot.lane.b32.xlu0 %v1304, 80
        %v2858 = vpop.permute.xlu0 %2857
        %2859 = vrot.lane.b32.xlu0 %v1307, 80
        %v2860 = vpop.permute.xlu0 %2859
        %2861 = vrot.lane.b32.xlu0 %v1316, 80
        %v2862 = vpop.permute.xlu0 %2861
        %2863 = vrot.lane.b32.xlu0 %v1319, 80
        %v2864 = vpop.permute.xlu0 %2863
        %2865 = vrot.lane.b32.xlu0 %v1322, 80
        %v2866 = vpop.permute.xlu0 %2865
        %2867 = vrot.lane.b32.xlu0 %v1325, 80
        %v2868 = vpop.permute.xlu0 %2867
        %2869 = vrot.lane.b32.xlu0 %v1328, 80
        %v2870 = vpop.permute.xlu0 %2869
        %2871 = vrot.lane.b32.xlu0 %v1331, 80
        %v2872 = vpop.permute.xlu0 %2871
        %2873 = vrot.lane.b32.xlu0 %v1334, 80
        %v2874 = vpop.permute.xlu0 %2873
        %2875 = vrot.lane.b32.xlu0 %v1337, 80
        %v2876 = vpop.permute.xlu0 %2875
        %2909 = vrot.lane.b32.xlu0 %v1627, 88
        %v2910 = vpop.permute.xlu0 %2909
        %2911 = vrot.lane.b32.xlu0 %v1630, 88
        %v2912 = vpop.permute.xlu0 %2911
        %2913 = vrot.lane.b32.xlu0 %v1633, 88
        %v2914 = vpop.permute.xlu0 %2913
        %2915 = vrot.lane.b32.xlu0 %v1636, 88
        %v2916 = vpop.permute.xlu0 %2915
        %2917 = vrot.lane.b32.xlu0 %v1639, 88
        %v2918 = vpop.permute.xlu0 %2917
        %2919 = vrot.lane.b32.xlu0 %v1642, 88
        %v2920 = vpop.permute.xlu0 %2919
        %2921 = vrot.lane.b32.xlu0 %v1645, 88
        %v2922 = vpop.permute.xlu0 %2921
        %2923 = vrot.lane.b32.xlu0 %v1648, 88
        %v2924 = vpop.permute.xlu0 %2923
        %2925 = vrot.lane.b32.xlu0 %v1651, 88
        %v2926 = vpop.permute.xlu0 %2925
        %2927 = vrot.lane.b32.xlu0 %v1654, 88
        %v2928 = vpop.permute.xlu0 %2927
        %2929 = vrot.lane.b32.xlu0 %v1657, 88
        %v2930 = vpop.permute.xlu0 %2929
        %2931 = vrot.lane.b32.xlu0 %v1660, 88
        %v2932 = vpop.permute.xlu0 %2931
        %2933 = vrot.lane.b32.xlu0 %v1663, 88
        %v2934 = vpop.permute.xlu0 %2933
        %2935 = vrot.lane.b32.xlu0 %v1666, 88
        %v2936 = vpop.permute.xlu0 %2935
        %2937 = vrot.lane.b32.xlu0 %v1669, 88
        %v2938 = vpop.permute.xlu0 %2937
        %2939 = vrot.lane.b32.xlu0 %v1672, 88
        %v2940 = vpop.permute.xlu0 %2939
        %2941 = vrot.lane.b32.xlu0 %v1675, 88
        %v2942 = vpop.permute.xlu0 %2941
        %2943 = vrot.lane.b32.xlu0 %v1678, 88
        %v2944 = vpop.permute.xlu0 %2943
        %2945 = vrot.lane.b32.xlu0 %v1681, 88
        %v2946 = vpop.permute.xlu0 %2945
        %2947 = vrot.lane.b32.xlu0 %v1684, 88
        %v2948 = vpop.permute.xlu0 %2947
        %2949 = vrot.lane.b32.xlu0 %v1687, 88
        %v2950 = vpop.permute.xlu0 %2949
        %2951 = vrot.lane.b32.xlu0 %v1690, 88
        %v2952 = vpop.permute.xlu0 %2951
        %2953 = vrot.lane.b32.xlu0 %v1693, 88
        %v2954 = vpop.permute.xlu0 %2953
        %2955 = vrot.lane.b32.xlu0 %v1696, 88
        %v2956 = vpop.permute.xlu0 %2955
        %2957 = vrot.lane.b32.xlu0 %v1819, 88
        %v2958 = vpop.permute.xlu0 %2957
        %2959 = vrot.lane.b32.xlu0 %v1822, 88
        %v2960 = vpop.permute.xlu0 %2959
        %2961 = vrot.lane.b32.xlu0 %v1825, 88
        %v2962 = vpop.permute.xlu0 %2961
        %2963 = vrot.lane.b32.xlu0 %v1828, 88
        %v2964 = vpop.permute.xlu0 %2963
        %2965 = vrot.lane.b32.xlu0 %v1831, 88
        %v2966 = vpop.permute.xlu0 %2965
        %2967 = vrot.lane.b32.xlu0 %v1834, 88
        %v2968 = vpop.permute.xlu0 %2967
        %2969 = vrot.lane.b32.xlu0 %v1837, 88
        %v2970 = vpop.permute.xlu0 %2969
        %2971 = vrot.lane.b32.xlu0 %v1840, 88
        %v2972 = vpop.permute.xlu0 %2971
        %3005 = vrot.lane.b32.xlu0 %v1469, 96
        %v3006 = vpop.permute.xlu0 %3005
        %3007 = vrot.lane.b32.xlu0 %v1472, 96
        %v3008 = vpop.permute.xlu0 %3007
        %3009 = vrot.lane.b32.xlu0 %v1475, 96
        %v3010 = vpop.permute.xlu0 %3009
        %3011 = vrot.lane.b32.xlu0 %v1478, 96
        %v3012 = vpop.permute.xlu0 %3011
        %3013 = vrot.lane.b32.xlu0 %v1481, 96
        %v3014 = vpop.permute.xlu0 %3013
        %3015 = vrot.lane.b32.xlu0 %v1484, 96
        %v3016 = vpop.permute.xlu0 %3015
        %3017 = vrot.lane.b32.xlu0 %v1487, 96
        %v3018 = vpop.permute.xlu0 %3017
        %3019 = vrot.lane.b32.xlu0 %v1710, 96
        %v3020 = vpop.permute.xlu0 %3019
        %3021 = vrot.lane.b32.xlu0 %v1493, 96
        %v3022 = vpop.permute.xlu0 %3021
        %3023 = vrot.lane.b32.xlu0 %v1496, 96
        %v3024 = vpop.permute.xlu0 %3023
        %3025 = vrot.lane.b32.xlu0 %v1499, 96
        %v3026 = vpop.permute.xlu0 %3025
        %3027 = vrot.lane.b32.xlu0 %v1502, 96
        %v3028 = vpop.permute.xlu0 %3027
        %3029 = vrot.lane.b32.xlu0 %v1505, 96
        %v3030 = vpop.permute.xlu0 %3029
        %3031 = vrot.lane.b32.xlu0 %v1508, 96
        %v3032 = vpop.permute.xlu0 %3031
        %3033 = vrot.lane.b32.xlu0 %v1511, 96
        %v3034 = vpop.permute.xlu0 %3033
        %3035 = vrot.lane.b32.xlu0 %v1713, 96
        %v3036 = vpop.permute.xlu0 %3035
        %3037 = vrot.lane.b32.xlu0 %v1517, 96
        %v3038 = vpop.permute.xlu0 %3037
        %3039 = vrot.lane.b32.xlu0 %v1520, 96
        %v3040 = vpop.permute.xlu0 %3039
        %3041 = vrot.lane.b32.xlu0 %v1523, 96
        %v3042 = vpop.permute.xlu0 %3041
        %3043 = vrot.lane.b32.xlu0 %v1526, 96
        %v3044 = vpop.permute.xlu0 %3043
        %3045 = vrot.lane.b32.xlu0 %v1529, 96
        %v3046 = vpop.permute.xlu0 %3045
        %3047 = vrot.lane.b32.xlu0 %v1532, 96
        %v3048 = vpop.permute.xlu0 %3047
        %3049 = vrot.lane.b32.xlu0 %v1535, 96
        %v3050 = vpop.permute.xlu0 %3049
        %3051 = vrot.lane.b32.xlu0 %v1716, 96
        %v3052 = vpop.permute.xlu0 %3051
        %3053 = vrot.lane.b32.xlu0 %v1790, 96
        %v3054 = vpop.permute.xlu0 %3053
        %3055 = vrot.lane.b32.xlu0 %v1793, 96
        %v3056 = vpop.permute.xlu0 %3055
        %3057 = vrot.lane.b32.xlu0 %v1796, 96
        %v3058 = vpop.permute.xlu0 %3057
        %3059 = vrot.lane.b32.xlu0 %v1799, 96
        %v3060 = vpop.permute.xlu0 %3059
        %3061 = vrot.lane.b32.xlu0 %v1802, 96
        %v3062 = vpop.permute.xlu0 %3061
        %3063 = vrot.lane.b32.xlu0 %v1805, 96
        %v3064 = vpop.permute.xlu0 %3063
        %3065 = vrot.lane.b32.xlu0 %v1808, 96
        %v3066 = vpop.permute.xlu0 %3065
        %3067 = vrot.lane.b32.xlu0 %v1845, 96
        %v3068 = vpop.permute.xlu0 %3067
        %3101 = vrot.lane.b32.xlu0 %v1229, 104
        %v3102 = vpop.permute.xlu0 %3101
        %3103 = vrot.lane.b32.xlu0 %v1232, 104
        %v3104 = vpop.permute.xlu0 %3103
        %3105 = vrot.lane.b32.xlu0 %v1235, 104
        %v3106 = vpop.permute.xlu0 %3105
        %3107 = vrot.lane.b32.xlu0 %v1238, 104
        %v3108 = vpop.permute.xlu0 %3107
        %3109 = vrot.lane.b32.xlu0 %v1241, 104
        %v3110 = vpop.permute.xlu0 %3109
        %3111 = vrot.lane.b32.xlu0 %v1244, 104
        %v3112 = vpop.permute.xlu0 %3111
        %3113 = vrot.lane.b32.xlu0 %v1247, 104
        %v3114 = vpop.permute.xlu0 %3113
        %3115 = vrot.lane.b32.xlu0 %v1250, 104
        %v3116 = vpop.permute.xlu0 %3115
        %3117 = vrot.lane.b32.xlu0 %v1259, 104
        %v3118 = vpop.permute.xlu0 %3117
        %3119 = vrot.lane.b32.xlu0 %v1262, 104
        %v3120 = vpop.permute.xlu0 %3119
        %3121 = vrot.lane.b32.xlu0 %v1265, 104
        %v3122 = vpop.permute.xlu0 %3121
        %3123 = vrot.lane.b32.xlu0 %v1268, 104
        %v3124 = vpop.permute.xlu0 %3123
        %3125 = vrot.lane.b32.xlu0 %v1271, 104
        %v3126 = vpop.permute.xlu0 %3125
        %3127 = vrot.lane.b32.xlu0 %v1274, 104
        %v3128 = vpop.permute.xlu0 %3127
        %3129 = vrot.lane.b32.xlu0 %v1277, 104
        %v3130 = vpop.permute.xlu0 %3129
        %3131 = vrot.lane.b32.xlu0 %v1280, 104
        %v3132 = vpop.permute.xlu0 %3131
        %3133 = vrot.lane.b32.xlu0 %v1289, 104
        %v3134 = vpop.permute.xlu0 %3133
        %3135 = vrot.lane.b32.xlu0 %v1292, 104
        %v3136 = vpop.permute.xlu0 %3135
        %3137 = vrot.lane.b32.xlu0 %v1295, 104
        %v3138 = vpop.permute.xlu0 %3137
        %3139 = vrot.lane.b32.xlu0 %v1298, 104
        %v3140 = vpop.permute.xlu0 %3139
        %3141 = vrot.lane.b32.xlu0 %v1301, 104
        %v3142 = vpop.permute.xlu0 %3141
        %3143 = vrot.lane.b32.xlu0 %v1304, 104
        %v3144 = vpop.permute.xlu0 %3143
        %3145 = vrot.lane.b32.xlu0 %v1307, 104
        %v3146 = vpop.permute.xlu0 %3145
        %3147 = vrot.lane.b32.xlu0 %v1310, 104
        %v3148 = vpop.permute.xlu0 %3147
        %3149 = vrot.lane.b32.xlu0 %v1319, 104
        %v3150 = vpop.permute.xlu0 %3149
        %3151 = vrot.lane.b32.xlu0 %v1322, 104
        %v3152 = vpop.permute.xlu0 %3151
        %3153 = vrot.lane.b32.xlu0 %v1325, 104
        %v3154 = vpop.permute.xlu0 %3153
        %3155 = vrot.lane.b32.xlu0 %v1328, 104
        %v3156 = vpop.permute.xlu0 %3155
        %3157 = vrot.lane.b32.xlu0 %v1331, 104
        %v3158 = vpop.permute.xlu0 %3157
        %3159 = vrot.lane.b32.xlu0 %v1334, 104
        %v3160 = vpop.permute.xlu0 %3159
        %3161 = vrot.lane.b32.xlu0 %v1337, 104
        %v3162 = vpop.permute.xlu0 %3161
        %3163 = vrot.lane.b32.xlu0 %v1340, 104
        %v3164 = vpop.permute.xlu0 %3163
        %3197 = vrot.lane.b32.xlu0 %v1630, 112
        %v3198 = vpop.permute.xlu0 %3197
        %3199 = vrot.lane.b32.xlu0 %v1633, 112
        %v3200 = vpop.permute.xlu0 %3199
        %3201 = vrot.lane.b32.xlu0 %v1636, 112
        %v3202 = vpop.permute.xlu0 %3201
        %3203 = vrot.lane.b32.xlu0 %v1639, 112
        %v3204 = vpop.permute.xlu0 %3203
        %3205 = vrot.lane.b32.xlu0 %v1642, 112
        %v3206 = vpop.permute.xlu0 %3205
        %3207 = vrot.lane.b32.xlu0 %v1645, 112
        %v3208 = vpop.permute.xlu0 %3207
        %3209 = vrot.lane.b32.xlu0 %v1648, 112
        %v3210 = vpop.permute.xlu0 %3209
        %3211 = vrot.lane.b32.xlu0 %v1726, 112
        %v3212 = vpop.permute.xlu0 %3211
        %3213 = vrot.lane.b32.xlu0 %v1654, 112
        %v3214 = vpop.permute.xlu0 %3213
        %3215 = vrot.lane.b32.xlu0 %v1657, 112
        %v3216 = vpop.permute.xlu0 %3215
        %3217 = vrot.lane.b32.xlu0 %v1660, 112
        %v3218 = vpop.permute.xlu0 %3217
        %3219 = vrot.lane.b32.xlu0 %v1663, 112
        %v3220 = vpop.permute.xlu0 %3219
        %3221 = vrot.lane.b32.xlu0 %v1666, 112
        %v3222 = vpop.permute.xlu0 %3221
        %3223 = vrot.lane.b32.xlu0 %v1669, 112
        %v3224 = vpop.permute.xlu0 %3223
        %3225 = vrot.lane.b32.xlu0 %v1672, 112
        %v3226 = vpop.permute.xlu0 %3225
        %3227 = vrot.lane.b32.xlu0 %v1729, 112
        %v3228 = vpop.permute.xlu0 %3227
        %3229 = vrot.lane.b32.xlu0 %v1678, 112
        %v3230 = vpop.permute.xlu0 %3229
        %3231 = vrot.lane.b32.xlu0 %v1681, 112
        %v3232 = vpop.permute.xlu0 %3231
        %3233 = vrot.lane.b32.xlu0 %v1684, 112
        %v3234 = vpop.permute.xlu0 %3233
        %3235 = vrot.lane.b32.xlu0 %v1687, 112
        %v3236 = vpop.permute.xlu0 %3235
        %3237 = vrot.lane.b32.xlu0 %v1690, 112
        %v3238 = vpop.permute.xlu0 %3237
        %3239 = vrot.lane.b32.xlu0 %v1693, 112
        %v3240 = vpop.permute.xlu0 %3239
        %3241 = vrot.lane.b32.xlu0 %v1696, 112
        %v3242 = vpop.permute.xlu0 %3241
        %3243 = vrot.lane.b32.xlu0 %v1732, 112
        %v3244 = vpop.permute.xlu0 %3243
        %3245 = vrot.lane.b32.xlu0 %v1822, 112
        %v3246 = vpop.permute.xlu0 %3245
        %3247 = vrot.lane.b32.xlu0 %v1825, 112
        %v3248 = vpop.permute.xlu0 %3247
        %3249 = vrot.lane.b32.xlu0 %v1828, 112
        %v3250 = vpop.permute.xlu0 %3249
        %3251 = vrot.lane.b32.xlu0 %v1831, 112
        %v3252 = vpop.permute.xlu0 %3251
        %3253 = vrot.lane.b32.xlu0 %v1834, 112
        %v3254 = vpop.permute.xlu0 %3253
        %3255 = vrot.lane.b32.xlu0 %v1837, 112
        %v3256 = vpop.permute.xlu0 %3255
        %3257 = vrot.lane.b32.xlu0 %v1840, 112
        %v3258 = vpop.permute.xlu0 %3257
        %3259 = vrot.lane.b32.xlu0 %v1849, 112
        %v3260 = vpop.permute.xlu0 %3259
        %3293 = vrot.lane.b32.xlu0 %v1472, 120
        %v3294 = vpop.permute.xlu0 %3293
        %3295 = vrot.lane.b32.xlu0 %v1475, 120
        %v3296 = vpop.permute.xlu0 %3295
        %3297 = vrot.lane.b32.xlu0 %v1478, 120
        %v3298 = vpop.permute.xlu0 %3297
        %3299 = vrot.lane.b32.xlu0 %v1481, 120
        %v3300 = vpop.permute.xlu0 %3299
        %3301 = vrot.lane.b32.xlu0 %v1484, 120
        %v3302 = vpop.permute.xlu0 %3301
        %3303 = vrot.lane.b32.xlu0 %v1487, 120
        %v3304 = vpop.permute.xlu0 %3303
        %3305 = vrot.lane.b32.xlu0 %v1710, 120
        %v3306 = vpop.permute.xlu0 %3305
        %3307 = vrot.lane.b32.xlu0 %v1746, 120
        %v3308 = vpop.permute.xlu0 %3307
        %3309 = vrot.lane.b32.xlu0 %v1496, 120
        %v3310 = vpop.permute.xlu0 %3309
        %3311 = vrot.lane.b32.xlu0 %v1499, 120
        %v3312 = vpop.permute.xlu0 %3311
        %3313 = vrot.lane.b32.xlu0 %v1502, 120
        %v3314 = vpop.permute.xlu0 %3313
        %3315 = vrot.lane.b32.xlu0 %v1505, 120
        %v3316 = vpop.permute.xlu0 %3315
        %3317 = vrot.lane.b32.xlu0 %v1508, 120
        %v3318 = vpop.permute.xlu0 %3317
        %3319 = vrot.lane.b32.xlu0 %v1511, 120
        %v3320 = vpop.permute.xlu0 %3319
        %3321 = vrot.lane.b32.xlu0 %v1713, 120
        %v3322 = vpop.permute.xlu0 %3321
        %3323 = vrot.lane.b32.xlu0 %v1749, 120
        %v3324 = vpop.permute.xlu0 %3323
        %3325 = vrot.lane.b32.xlu0 %v1520, 120
        %v3326 = vpop.permute.xlu0 %3325
        %3327 = vrot.lane.b32.xlu0 %v1523, 120
        %v3328 = vpop.permute.xlu0 %3327
        %3329 = vrot.lane.b32.xlu0 %v1526, 120
        %v3330 = vpop.permute.xlu0 %3329
        %3331 = vrot.lane.b32.xlu0 %v1529, 120
        %v3332 = vpop.permute.xlu0 %3331
        %3333 = vrot.lane.b32.xlu0 %v1532, 120
        %v3334 = vpop.permute.xlu0 %3333
        %3335 = vrot.lane.b32.xlu0 %v1535, 120
        %v3336 = vpop.permute.xlu0 %3335
        %3337 = vrot.lane.b32.xlu0 %v1716, 120
        %v3338 = vpop.permute.xlu0 %3337
        %3339 = vrot.lane.b32.xlu0 %v1752, 120
        %v3340 = vpop.permute.xlu0 %3339
        %3341 = vrot.lane.b32.xlu0 %v1793, 120
        %v3342 = vpop.permute.xlu0 %3341
        %3343 = vrot.lane.b32.xlu0 %v1796, 120
        %v3344 = vpop.permute.xlu0 %3343
        %3345 = vrot.lane.b32.xlu0 %v1799, 120
        %v3346 = vpop.permute.xlu0 %3345
        %3347 = vrot.lane.b32.xlu0 %v1802, 120
        %v3348 = vpop.permute.xlu0 %3347
        %3349 = vrot.lane.b32.xlu0 %v1805, 120
        %v3350 = vpop.permute.xlu0 %3349
        %3351 = vrot.lane.b32.xlu0 %v1808, 120
        %v3352 = vpop.permute.xlu0 %3351
        %3353 = vrot.lane.b32.xlu0 %v1845, 120
        %v3354 = vpop.permute.xlu0 %3353
        %3355 = vrot.lane.b32.xlu0 %v1854, 120
        %v3356 = vpop.permute.xlu0 %3355
        %v3389 = vsel %vm980, %v1442, %v1950
        %v3390 = vsel %vm980, %v1445, %v1952
        %v3391 = vsel %vm980, %v1448, %v1954
        %v3392 = vsel %vm980, %v1451, %v1956
        %v3393 = vsel %vm980, %v1454, %v1958
        %v3394 = vsel %vm980, %v1457, %v1960
        %v3395 = vsel %vm980, %v1460, %v1962
        %v3396 = vsel %vm980, %v1463, %v1964
        %v3397 = vsel %vm980, %v1466, %v1966
        %v3398 = vsel %vm980, %v1469, %v1968
        %v3399 = vsel %vm980, %v1472, %v1970
        %v3400 = vsel %vm980, %v1475, %v1972
        %v3401 = vsel %vm980, %v1478, %v1974
        %v3402 = vsel %vm980, %v1481, %v1976
        %v3403 = vsel %vm980, %v1484, %v1978
        %v3404 = vsel %vm980, %v1487, %v1980
        %v3405 = vsel %vm980, %v1490, %v1982
        %v3406 = vsel %vm980, %v1493, %v1984
        %v3407 = vsel %vm980, %v1496, %v1986
        %v3408 = vsel %vm980, %v1499, %v1988
        %v3409 = vsel %vm980, %v1502, %v1990
        %v3410 = vsel %vm980, %v1505, %v1992
        %v3411 = vsel %vm980, %v1508, %v1994
        %v3412 = vsel %vm980, %v1511, %v1996
        %v3413 = vsel %vm980, %v1514, %v1998
        %v3414 = vsel %vm980, %v1517, %v2000
        %v3415 = vsel %vm980, %v1520, %v2002
        %v3416 = vsel %vm980, %v1523, %v2004
        %v3417 = vsel %vm980, %v1526, %v2006
        %v3418 = vsel %vm980, %v1529, %v2008
        %v3419 = vsel %vm980, %v1532, %v2010
        %v3420 = vsel %vm980, %v1535, %v2012
        %v3421 = vsel %vm392, %v3389, %v2046
        %v3422 = vsel %vm392, %v3390, %v2048
        %v3423 = vsel %vm392, %v3391, %v2050
        %v3424 = vsel %vm392, %v3392, %v2052
        %v3425 = vsel %vm392, %v3393, %v2054
        %v3426 = vsel %vm392, %v3394, %v2056
        %v3427 = vsel %vm392, %v3395, %v2058
        %v3428 = vsel %vm392, %v3396, %v2060
        %v3429 = vsel %vm392, %v3397, %v2062
        %v3430 = vsel %vm392, %v3398, %v2064
        %v3431 = vsel %vm392, %v3399, %v2066
        %v3432 = vsel %vm392, %v3400, %v2068
        %v3433 = vsel %vm392, %v3401, %v2070
        %v3434 = vsel %vm392, %v3402, %v2072
        %v3435 = vsel %vm392, %v3403, %v2074
        %v3436 = vsel %vm392, %v3404, %v2076
        %v3437 = vsel %vm392, %v3405, %v2078
        %v3438 = vsel %vm392, %v3406, %v2080
        %v3439 = vsel %vm392, %v3407, %v2082
        %v3440 = vsel %vm392, %v3408, %v2084
        %v3441 = vsel %vm392, %v3409, %v2086
        %v3442 = vsel %vm392, %v3410, %v2088
        %v3443 = vsel %vm392, %v3411, %v2090
        %v3444 = vsel %vm392, %v3412, %v2092
        %v3445 = vsel %vm392, %v3413, %v2094
        %v3446 = vsel %vm392, %v3414, %v2096
        %v3447 = vsel %vm392, %v3415, %v2098
        %v3448 = vsel %vm392, %v3416, %v2100
        %v3449 = vsel %vm392, %v3417, %v2102
        %v3450 = vsel %vm392, %v3418, %v2104
        %v3451 = vsel %vm392, %v3419, %v2106
        %v3452 = vsel %vm392, %v3420, %v2108
        %vm3453 = vcmask 195584
        %v3454 = vsel %vm3453, %v3421, %v2142
        %v3455 = vsel %vm3453, %v3422, %v2144
        %v3456 = vsel %vm3453, %v3423, %v2146
        %v3457 = vsel %vm3453, %v3424, %v2148
        %v3458 = vsel %vm3453, %v3425, %v2150
        %v3459 = vsel %vm3453, %v3426, %v2152
        %v3460 = vsel %vm3453, %v3427, %v2154
        %v3461 = vsel %vm3453, %v3428, %v2156
        %v3462 = vsel %vm3453, %v3429, %v2158
        %v3463 = vsel %vm3453, %v3430, %v2160
        %v3464 = vsel %vm3453, %v3431, %v2162
        %v3465 = vsel %vm3453, %v3432, %v2164
        %v3466 = vsel %vm3453, %v3433, %v2166
        %v3467 = vsel %vm3453, %v3434, %v2168
        %v3468 = vsel %vm3453, %v3435, %v2170
        %v3469 = vsel %vm3453, %v3436, %v2172
        %v3470 = vsel %vm3453, %v3437, %v2174
        %v3471 = vsel %vm3453, %v3438, %v2176
        %v3472 = vsel %vm3453, %v3439, %v2178
        %v3473 = vsel %vm3453, %v3440, %v2180
        %v3474 = vsel %vm3453, %v3441, %v2182
        %v3475 = vsel %vm3453, %v3442, %v2184
        %v3476 = vsel %vm3453, %v3443, %v2186
        %v3477 = vsel %vm3453, %v3444, %v2188
        %v3478 = vsel %vm3453, %v3445, %v2190
        %v3479 = vsel %vm3453, %v3446, %v2192
        %v3480 = vsel %vm3453, %v3447, %v2194
        %v3481 = vsel %vm3453, %v3448, %v2196
        %v3482 = vsel %vm3453, %v3449, %v2198
        %v3483 = vsel %vm3453, %v3450, %v2200
        %v3484 = vsel %vm3453, %v3451, %v2202
        %v3485 = vsel %vm3453, %v3452, %v2204
        %vm3486 = vcmask 261120
        %v3487 = vsel %vm3486, %v3454, %v2238
        %v3488 = vsel %vm3486, %v3455, %v2240
        %v3489 = vsel %vm3486, %v3456, %v2242
        %v3490 = vsel %vm3486, %v3457, %v2244
        %v3491 = vsel %vm3486, %v3458, %v2246
        %v3492 = vsel %vm3486, %v3459, %v2248
        %v3493 = vsel %vm3486, %v3460, %v2250
        %v3494 = vsel %vm3486, %v3461, %v2252
        %v3495 = vsel %vm3486, %v3462, %v2254
        %v3496 = vsel %vm3486, %v3463, %v2256
        %v3497 = vsel %vm3486, %v3464, %v2258
        %v3498 = vsel %vm3486, %v3465, %v2260
        %v3499 = vsel %vm3486, %v3466, %v2262
        %v3500 = vsel %vm3486, %v3467, %v2264
        %v3501 = vsel %vm3486, %v3468, %v2266
        %v3502 = vsel %vm3486, %v3469, %v2268
        %v3503 = vsel %vm3486, %v3470, %v2270
        %v3504 = vsel %vm3486, %v3471, %v2272
        %v3505 = vsel %vm3486, %v3472, %v2274
        %v3506 = vsel %vm3486, %v3473, %v2276
        %v3507 = vsel %vm3486, %v3474, %v2278
        %v3508 = vsel %vm3486, %v3475, %v2280
        %v3509 = vsel %vm3486, %v3476, %v2282
        %v3510 = vsel %vm3486, %v3477, %v2284
        %v3511 = vsel %vm3486, %v3478, %v2286
        %v3512 = vsel %vm3486, %v3479, %v2288
        %v3513 = vsel %vm3486, %v3480, %v2290
        %v3514 = vsel %vm3486, %v3481, %v2292
        %v3515 = vsel %vm3486, %v3482, %v2294
        %v3516 = vsel %vm3486, %v3483, %v2296
        %v3517 = vsel %vm3486, %v3484, %v2298
        %v3518 = vsel %vm3486, %v3485, %v2300
        %vm3519 = vcmask 326656
        %v3520 = vsel %vm3519, %v3487, %v2334
        %v3521 = vsel %vm3519, %v3488, %v2336
        %v3522 = vsel %vm3519, %v3489, %v2338
        %v3523 = vsel %vm3519, %v3490, %v2340
        %v3524 = vsel %vm3519, %v3491, %v2342
        %v3525 = vsel %vm3519, %v3492, %v2344
        %v3526 = vsel %vm3519, %v3493, %v2346
        %v3527 = vsel %vm3519, %v3494, %v2348
        %v3528 = vsel %vm3519, %v3495, %v2350
        %v3529 = vsel %vm3519, %v3496, %v2352
        %v3530 = vsel %vm3519, %v3497, %v2354
        %v3531 = vsel %vm3519, %v3498, %v2356
        %v3532 = vsel %vm3519, %v3499, %v2358
        %v3533 = vsel %vm3519, %v3500, %v2360
        %v3534 = vsel %vm3519, %v3501, %v2362
        %v3535 = vsel %vm3519, %v3502, %v2364
        %v3536 = vsel %vm3519, %v3503, %v2366
        %v3537 = vsel %vm3519, %v3504, %v2368
        %v3538 = vsel %vm3519, %v3505, %v2370
        %v3539 = vsel %vm3519, %v3506, %v2372
        %v3540 = vsel %vm3519, %v3507, %v2374
        %v3541 = vsel %vm3519, %v3508, %v2376
        %v3542 = vsel %vm3519, %v3509, %v2378
        %v3543 = vsel %vm3519, %v3510, %v2380
        %v3544 = vsel %vm3519, %v3511, %v2382
        %v3545 = vsel %vm3519, %v3512, %v2384
        %v3546 = vsel %vm3519, %v3513, %v2386
        %v3547 = vsel %vm3519, %v3514, %v2388
        %v3548 = vsel %vm3519, %v3515, %v2390
        %v3549 = vsel %vm3519, %v3516, %v2392
        %v3550 = vsel %vm3519, %v3517, %v2394
        %v3551 = vsel %vm3519, %v3518, %v2396
        %vm3552 = vcmask 392192
        %v3553 = vsel %vm3552, %v3520, %v2430
        %v3554 = vsel %vm3552, %v3521, %v2432
        %v3555 = vsel %vm3552, %v3522, %v2434
        %v3556 = vsel %vm3552, %v3523, %v2436
        %v3557 = vsel %vm3552, %v3524, %v2438
        %v3558 = vsel %vm3552, %v3525, %v2440
        %v3559 = vsel %vm3552, %v3526, %v2442
        %v3560 = vsel %vm3552, %v3527, %v2444
        %v3561 = vsel %vm3552, %v3528, %v2446
        %v3562 = vsel %vm3552, %v3529, %v2448
        %v3563 = vsel %vm3552, %v3530, %v2450
        %v3564 = vsel %vm3552, %v3531, %v2452
        %v3565 = vsel %vm3552, %v3532, %v2454
        %v3566 = vsel %vm3552, %v3533, %v2456
        %v3567 = vsel %vm3552, %v3534, %v2458
        %v3568 = vsel %vm3552, %v3535, %v2460
        %v3569 = vsel %vm3552, %v3536, %v2462
        %v3570 = vsel %vm3552, %v3537, %v2464
        %v3571 = vsel %vm3552, %v3538, %v2466
        %v3572 = vsel %vm3552, %v3539, %v2468
        %v3573 = vsel %vm3552, %v3540, %v2470
        %v3574 = vsel %vm3552, %v3541, %v2472
        %v3575 = vsel %vm3552, %v3542, %v2474
        %v3576 = vsel %vm3552, %v3543, %v2476
        %v3577 = vsel %vm3552, %v3544, %v2478
        %v3578 = vsel %vm3552, %v3545, %v2480
        %v3579 = vsel %vm3552, %v3546, %v2482
        %v3580 = vsel %vm3552, %v3547, %v2484
        %v3581 = vsel %vm3552, %v3548, %v2486
        %v3582 = vsel %vm3552, %v3549, %v2488
        %v3583 = vsel %vm3552, %v3550, %v2490
        %v3584 = vsel %vm3552, %v3551, %v2492
        %vm3585 = vcmask 457728
        %v3586 = vsel %vm3585, %v3553, %v2526
        %v3587 = vsel %vm3585, %v3554, %v2528
        %v3588 = vsel %vm3585, %v3555, %v2530
        %v3589 = vsel %vm3585, %v3556, %v2532
        %v3590 = vsel %vm3585, %v3557, %v2534
        %v3591 = vsel %vm3585, %v3558, %v2536
        %v3592 = vsel %vm3585, %v3559, %v2538
        %v3593 = vsel %vm3585, %v3560, %v2540
        %v3594 = vsel %vm3585, %v3561, %v2542
        %v3595 = vsel %vm3585, %v3562, %v2544
        %v3596 = vsel %vm3585, %v3563, %v2546
        %v3597 = vsel %vm3585, %v3564, %v2548
        %v3598 = vsel %vm3585, %v3565, %v2550
        %v3599 = vsel %vm3585, %v3566, %v2552
        %v3600 = vsel %vm3585, %v3567, %v2554
        %v3601 = vsel %vm3585, %v3568, %v2556
        %v3602 = vsel %vm3585, %v3569, %v2558
        %v3603 = vsel %vm3585, %v3570, %v2560
        %v3604 = vsel %vm3585, %v3571, %v2562
        %v3605 = vsel %vm3585, %v3572, %v2564
        %v3606 = vsel %vm3585, %v3573, %v2566
        %v3607 = vsel %vm3585, %v3574, %v2568
        %v3608 = vsel %vm3585, %v3575, %v2570
        %v3609 = vsel %vm3585, %v3576, %v2572
        %v3610 = vsel %vm3585, %v3577, %v2574
        %v3611 = vsel %vm3585, %v3578, %v2576
        %v3612 = vsel %vm3585, %v3579, %v2578
        %v3613 = vsel %vm3585, %v3580, %v2580
        %v3614 = vsel %vm3585, %v3581, %v2582
        %v3615 = vsel %vm3585, %v3582, %v2584
        %v3616 = vsel %vm3585, %v3583, %v2586
        %v3617 = vsel %vm3585, %v3584, %v2588
        %vm3618 = vcmask 523264
        %v3619 = vsel %vm3618, %v3586, %v2622
        %v3620 = vsel %vm3618, %v3587, %v2624
        %v3621 = vsel %vm3618, %v3588, %v2626
        %v3622 = vsel %vm3618, %v3589, %v2628
        %v3623 = vsel %vm3618, %v3590, %v2630
        %v3624 = vsel %vm3618, %v3591, %v2632
        %v3625 = vsel %vm3618, %v3592, %v2634
        %v3626 = vsel %vm3618, %v3593, %v2636
        %v3627 = vsel %vm3618, %v3594, %v2638
        %v3628 = vsel %vm3618, %v3595, %v2640
        %v3629 = vsel %vm3618, %v3596, %v2642
        %v3630 = vsel %vm3618, %v3597, %v2644
        %v3631 = vsel %vm3618, %v3598, %v2646
        %v3632 = vsel %vm3618, %v3599, %v2648
        %v3633 = vsel %vm3618, %v3600, %v2650
        %v3634 = vsel %vm3618, %v3601, %v2652
        %v3635 = vsel %vm3618, %v3602, %v2654
        %v3636 = vsel %vm3618, %v3603, %v2656
        %v3637 = vsel %vm3618, %v3604, %v2658
        %v3638 = vsel %vm3618, %v3605, %v2660
        %v3639 = vsel %vm3618, %v3606, %v2662
        %v3640 = vsel %vm3618, %v3607, %v2664
        %v3641 = vsel %vm3618, %v3608, %v2666
        %v3642 = vsel %vm3618, %v3609, %v2668
        %v3643 = vsel %vm3618, %v3610, %v2670
        %v3644 = vsel %vm3618, %v3611, %v2672
        %v3645 = vsel %vm3618, %v3612, %v2674
        %v3646 = vsel %vm3618, %v3613, %v2676
        %v3647 = vsel %vm3618, %v3614, %v2678
        %v3648 = vsel %vm3618, %v3615, %v2680
        %v3649 = vsel %vm3618, %v3616, %v2682
        %v3650 = vsel %vm3618, %v3617, %v2684
        %vm3651 = vcmask 588800
        %v3652 = vsel %vm3651, %v3619, %v2718
        %v3653 = vsel %vm3651, %v3620, %v2720
        %v3654 = vsel %vm3651, %v3621, %v2722
        %v3655 = vsel %vm3651, %v3622, %v2724
        %v3656 = vsel %vm3651, %v3623, %v2726
        %v3657 = vsel %vm3651, %v3624, %v2728
        %v3658 = vsel %vm3651, %v3625, %v2730
        %v3659 = vsel %vm3651, %v3626, %v2732
        %v3660 = vsel %vm3651, %v3627, %v2734
        %v3661 = vsel %vm3651, %v3628, %v2736
        %v3662 = vsel %vm3651, %v3629, %v2738
        %v3663 = vsel %vm3651, %v3630, %v2740
        %v3664 = vsel %vm3651, %v3631, %v2742
        %v3665 = vsel %vm3651, %v3632, %v2744
        %v3666 = vsel %vm3651, %v3633, %v2746
        %v3667 = vsel %vm3651, %v3634, %v2748
        %v3668 = vsel %vm3651, %v3635, %v2750
        %v3669 = vsel %vm3651, %v3636, %v2752
        %v3670 = vsel %vm3651, %v3637, %v2754
        %v3671 = vsel %vm3651, %v3638, %v2756
        %v3672 = vsel %vm3651, %v3639, %v2758
        %v3673 = vsel %vm3651, %v3640, %v2760
        %v3674 = vsel %vm3651, %v3641, %v2762
        %v3675 = vsel %vm3651, %v3642, %v2764
        %v3676 = vsel %vm3651, %v3643, %v2766
        %v3677 = vsel %vm3651, %v3644, %v2768
        %v3678 = vsel %vm3651, %v3645, %v2770
        %v3679 = vsel %vm3651, %v3646, %v2772
        %v3680 = vsel %vm3651, %v3647, %v2774
        %v3681 = vsel %vm3651, %v3648, %v2776
        %v3682 = vsel %vm3651, %v3649, %v2778
        %v3683 = vsel %vm3651, %v3650, %v2780
        %vm3684 = vcmask 654336
        %v3685 = vsel %vm3684, %v3652, %v2814
        %v3686 = vsel %vm3684, %v3653, %v2816
        %v3687 = vsel %vm3684, %v3654, %v2818
        %v3688 = vsel %vm3684, %v3655, %v2820
        %v3689 = vsel %vm3684, %v3656, %v2822
        %v3690 = vsel %vm3684, %v3657, %v2824
        %v3691 = vsel %vm3684, %v3658, %v2826
        %v3692 = vsel %vm3684, %v3659, %v2828
        %v3693 = vsel %vm3684, %v3660, %v2830
        %v3694 = vsel %vm3684, %v3661, %v2832
        %v3695 = vsel %vm3684, %v3662, %v2834
        %v3696 = vsel %vm3684, %v3663, %v2836
        %v3697 = vsel %vm3684, %v3664, %v2838
        %v3698 = vsel %vm3684, %v3665, %v2840
        %v3699 = vsel %vm3684, %v3666, %v2842
        %v3700 = vsel %vm3684, %v3667, %v2844
        %v3701 = vsel %vm3684, %v3668, %v2846
        %v3702 = vsel %vm3684, %v3669, %v2848
        %v3703 = vsel %vm3684, %v3670, %v2850
        %v3704 = vsel %vm3684, %v3671, %v2852
        %v3705 = vsel %vm3684, %v3672, %v2854
        %v3706 = vsel %vm3684, %v3673, %v2856
        %v3707 = vsel %vm3684, %v3674, %v2858
        %v3708 = vsel %vm3684, %v3675, %v2860
        %v3709 = vsel %vm3684, %v3676, %v2862
        %v3710 = vsel %vm3684, %v3677, %v2864
        %v3711 = vsel %vm3684, %v3678, %v2866
        %v3712 = vsel %vm3684, %v3679, %v2868
        %v3713 = vsel %vm3684, %v3680, %v2870
        %v3714 = vsel %vm3684, %v3681, %v2872
        %v3715 = vsel %vm3684, %v3682, %v2874
        %v3716 = vsel %vm3684, %v3683, %v2876
        %vm3717 = vcmask 719872
        %v3718 = vsel %vm3717, %v3685, %v2910
        %v3719 = vsel %vm3717, %v3686, %v2912
        %v3720 = vsel %vm3717, %v3687, %v2914
        %v3721 = vsel %vm3717, %v3688, %v2916
        %v3722 = vsel %vm3717, %v3689, %v2918
        %v3723 = vsel %vm3717, %v3690, %v2920
        %v3724 = vsel %vm3717, %v3691, %v2922
        %v3725 = vsel %vm3717, %v3692, %v2924
        %v3726 = vsel %vm3717, %v3693, %v2926
        %v3727 = vsel %vm3717, %v3694, %v2928
        %v3728 = vsel %vm3717, %v3695, %v2930
        %v3729 = vsel %vm3717, %v3696, %v2932
        %v3730 = vsel %vm3717, %v3697, %v2934
        %v3731 = vsel %vm3717, %v3698, %v2936
        %v3732 = vsel %vm3717, %v3699, %v2938
        %v3733 = vsel %vm3717, %v3700, %v2940
        %v3734 = vsel %vm3717, %v3701, %v2942
        %v3735 = vsel %vm3717, %v3702, %v2944
        %v3736 = vsel %vm3717, %v3703, %v2946
        %v3737 = vsel %vm3717, %v3704, %v2948
        %v3738 = vsel %vm3717, %v3705, %v2950
        %v3739 = vsel %vm3717, %v3706, %v2952
        %v3740 = vsel %vm3717, %v3707, %v2954
        %v3741 = vsel %vm3717, %v3708, %v2956
        %v3742 = vsel %vm3717, %v3709, %v2958
        %v3743 = vsel %vm3717, %v3710, %v2960
        %v3744 = vsel %vm3717, %v3711, %v2962
        %v3745 = vsel %vm3717, %v3712, %v2964
        %v3746 = vsel %vm3717, %v3713, %v2966
        %v3747 = vsel %vm3717, %v3714, %v2968
        %v3748 = vsel %vm3717, %v3715, %v2970
        %v3749 = vsel %vm3717, %v3716, %v2972
        %vm3750 = vcmask 785408
        %v3751 = vsel %vm3750, %v3718, %v3006
        %v3752 = vsel %vm3750, %v3719, %v3008
        %v3753 = vsel %vm3750, %v3720, %v3010
        %v3754 = vsel %vm3750, %v3721, %v3012
        %v3755 = vsel %vm3750, %v3722, %v3014
        %v3756 = vsel %vm3750, %v3723, %v3016
        %v3757 = vsel %vm3750, %v3724, %v3018
        %v3758 = vsel %vm3750, %v3725, %v3020
        %v3759 = vsel %vm3750, %v3726, %v3022
        %v3760 = vsel %vm3750, %v3727, %v3024
        %v3761 = vsel %vm3750, %v3728, %v3026
        %v3762 = vsel %vm3750, %v3729, %v3028
        %v3763 = vsel %vm3750, %v3730, %v3030
        %v3764 = vsel %vm3750, %v3731, %v3032
        %v3765 = vsel %vm3750, %v3732, %v3034
        %v3766 = vsel %vm3750, %v3733, %v3036
        %v3767 = vsel %vm3750, %v3734, %v3038
        %v3768 = vsel %vm3750, %v3735, %v3040
        %v3769 = vsel %vm3750, %v3736, %v3042
        %v3770 = vsel %vm3750, %v3737, %v3044
        %v3771 = vsel %vm3750, %v3738, %v3046
        %v3772 = vsel %vm3750, %v3739, %v3048
        %v3773 = vsel %vm3750, %v3740, %v3050
        %v3774 = vsel %vm3750, %v3741, %v3052
        %v3775 = vsel %vm3750, %v3742, %v3054
        %v3776 = vsel %vm3750, %v3743, %v3056
        %v3777 = vsel %vm3750, %v3744, %v3058
        %v3778 = vsel %vm3750, %v3745, %v3060
        %v3779 = vsel %vm3750, %v3746, %v3062
        %v3780 = vsel %vm3750, %v3747, %v3064
        %v3781 = vsel %vm3750, %v3748, %v3066
        %v3782 = vsel %vm3750, %v3749, %v3068
        %vm3783 = vcmask 850944
        %v3784 = vsel %vm3783, %v3751, %v3102
        %v3785 = vsel %vm3783, %v3752, %v3104
        %v3786 = vsel %vm3783, %v3753, %v3106
        %v3787 = vsel %vm3783, %v3754, %v3108
        %v3788 = vsel %vm3783, %v3755, %v3110
        %v3789 = vsel %vm3783, %v3756, %v3112
        %v3790 = vsel %vm3783, %v3757, %v3114
        %v3791 = vsel %vm3783, %v3758, %v3116
        %v3792 = vsel %vm3783, %v3759, %v3118
        %v3793 = vsel %vm3783, %v3760, %v3120
        %v3794 = vsel %vm3783, %v3761, %v3122
        %v3795 = vsel %vm3783, %v3762, %v3124
        %v3796 = vsel %vm3783, %v3763, %v3126
        %v3797 = vsel %vm3783, %v3764, %v3128
        %v3798 = vsel %vm3783, %v3765, %v3130
        %v3799 = vsel %vm3783, %v3766, %v3132
        %v3800 = vsel %vm3783, %v3767, %v3134
        %v3801 = vsel %vm3783, %v3768, %v3136
        %v3802 = vsel %vm3783, %v3769, %v3138
        %v3803 = vsel %vm3783, %v3770, %v3140
        %v3804 = vsel %vm3783, %v3771, %v3142
        %v3805 = vsel %vm3783, %v3772, %v3144
        %v3806 = vsel %vm3783, %v3773, %v3146
        %v3807 = vsel %vm3783, %v3774, %v3148
        %v3808 = vsel %vm3783, %v3775, %v3150
        %v3809 = vsel %vm3783, %v3776, %v3152
        %v3810 = vsel %vm3783, %v3777, %v3154
        %v3811 = vsel %vm3783, %v3778, %v3156
        %v3812 = vsel %vm3783, %v3779, %v3158
        %v3813 = vsel %vm3783, %v3780, %v3160
        %v3814 = vsel %vm3783, %v3781, %v3162
        %v3815 = vsel %vm3783, %v3782, %v3164
        %vm3816 = vcmask 916480
        %v3817 = vsel %vm3816, %v3784, %v3198
        %v3818 = vsel %vm3816, %v3785, %v3200
        %v3819 = vsel %vm3816, %v3786, %v3202
        %v3820 = vsel %vm3816, %v3787, %v3204
        %v3821 = vsel %vm3816, %v3788, %v3206
        %v3822 = vsel %vm3816, %v3789, %v3208
        %v3823 = vsel %vm3816, %v3790, %v3210
        %v3824 = vsel %vm3816, %v3791, %v3212
        %v3825 = vsel %vm3816, %v3792, %v3214
        %v3826 = vsel %vm3816, %v3793, %v3216
        %v3827 = vsel %vm3816, %v3794, %v3218
        %v3828 = vsel %vm3816, %v3795, %v3220
        %v3829 = vsel %vm3816, %v3796, %v3222
        %v3830 = vsel %vm3816, %v3797, %v3224
        %v3831 = vsel %vm3816, %v3798, %v3226
        %v3832 = vsel %vm3816, %v3799, %v3228
        %v3833 = vsel %vm3816, %v3800, %v3230
        %v3834 = vsel %vm3816, %v3801, %v3232
        %v3835 = vsel %vm3816, %v3802, %v3234
        %v3836 = vsel %vm3816, %v3803, %v3236
        %v3837 = vsel %vm3816, %v3804, %v3238
        %v3838 = vsel %vm3816, %v3805, %v3240
        %v3839 = vsel %vm3816, %v3806, %v3242
        %v3840 = vsel %vm3816, %v3807, %v3244
        %v3841 = vsel %vm3816, %v3808, %v3246
        %v3842 = vsel %vm3816, %v3809, %v3248
        %v3843 = vsel %vm3816, %v3810, %v3250
        %v3844 = vsel %vm3816, %v3811, %v3252
        %v3845 = vsel %vm3816, %v3812, %v3254
        %v3846 = vsel %vm3816, %v3813, %v3256
        %v3847 = vsel %vm3816, %v3814, %v3258
        %v3848 = vsel %vm3816, %v3815, %v3260
        %vm3849 = vcmask 982016
        %v3850 = vsel %vm3849, %v3817, %v3294
        %v3851 = vsel %vm3849, %v3818, %v3296
        %v3852 = vsel %vm3849, %v3819, %v3298
        %v3853 = vsel %vm3849, %v3820, %v3300
        %v3854 = vsel %vm3849, %v3821, %v3302
        %v3855 = vsel %vm3849, %v3822, %v3304
        %v3856 = vsel %vm3849, %v3823, %v3306
        %v3857 = vsel %vm3849, %v3824, %v3308
        %v3858 = vsel %vm3849, %v3825, %v3310
        %v3859 = vsel %vm3849, %v3826, %v3312
        %v3860 = vsel %vm3849, %v3827, %v3314
        %v3861 = vsel %vm3849, %v3828, %v3316
        %v3862 = vsel %vm3849, %v3829, %v3318
        %v3863 = vsel %vm3849, %v3830, %v3320
        %v3864 = vsel %vm3849, %v3831, %v3322
        %v3865 = vsel %vm3849, %v3832, %v3324
        %v3866 = vsel %vm3849, %v3833, %v3326
        %v3867 = vsel %vm3849, %v3834, %v3328
        %v3868 = vsel %vm3849, %v3835, %v3330
        %v3869 = vsel %vm3849, %v3836, %v3332
        %v3870 = vsel %vm3849, %v3837, %v3334
        %v3871 = vsel %vm3849, %v3838, %v3336
        %v3872 = vsel %vm3849, %v3839, %v3338
        %v3873 = vsel %vm3849, %v3840, %v3340
        %v3874 = vsel %vm3849, %v3841, %v3342
        %v3875 = vsel %vm3849, %v3842, %v3344
        %v3876 = vsel %vm3849, %v3843, %v3346
        %v3877 = vsel %vm3849, %v3844, %v3348
        %v3878 = vsel %vm3849, %v3845, %v3350
        %v3879 = vsel %vm3849, %v3846, %v3352
        %v3880 = vsel %vm3849, %v3847, %v3354
        %v3881 = vsel %vm3849, %v3848, %v3356
        %3882 = vrot.lane.b32.xlu0 %v1633, 8
        %v3883 = vpop.permute.xlu0 %3882
        %3884 = vrot.lane.b32.xlu0 %v1636, 8
        %v3885 = vpop.permute.xlu0 %3884
        %3886 = vrot.lane.b32.xlu0 %v1639, 8
        %v3887 = vpop.permute.xlu0 %3886
        %3888 = vrot.lane.b32.xlu0 %v1642, 8
        %v3889 = vpop.permute.xlu0 %3888
        %3890 = vrot.lane.b32.xlu0 %v1645, 8
        %v3891 = vpop.permute.xlu0 %3890
        %3892 = vrot.lane.b32.xlu0 %v1648, 8
        %v3893 = vpop.permute.xlu0 %3892
        %3894 = vrot.lane.b32.xlu0 %v1726, 8
        %v3895 = vpop.permute.xlu0 %3894
        %3896 = vrot.lane.b32.xlu0 %v1762, 8
        %v3897 = vpop.permute.xlu0 %3896
        %3898 = vrot.lane.b32.xlu0 %v1657, 8
        %v3899 = vpop.permute.xlu0 %3898
        %3900 = vrot.lane.b32.xlu0 %v1660, 8
        %v3901 = vpop.permute.xlu0 %3900
        %3902 = vrot.lane.b32.xlu0 %v1663, 8
        %v3903 = vpop.permute.xlu0 %3902
        %3904 = vrot.lane.b32.xlu0 %v1666, 8
        %v3905 = vpop.permute.xlu0 %3904
        %3906 = vrot.lane.b32.xlu0 %v1669, 8
        %v3907 = vpop.permute.xlu0 %3906
        %3908 = vrot.lane.b32.xlu0 %v1672, 8
        %v3909 = vpop.permute.xlu0 %3908
        %3910 = vrot.lane.b32.xlu0 %v1729, 8
        %v3911 = vpop.permute.xlu0 %3910
        %3912 = vrot.lane.b32.xlu0 %v1765, 8
        %v3913 = vpop.permute.xlu0 %3912
        %3914 = vrot.lane.b32.xlu0 %v1681, 8
        %v3915 = vpop.permute.xlu0 %3914
        %3916 = vrot.lane.b32.xlu0 %v1684, 8
        %v3917 = vpop.permute.xlu0 %3916
        %3918 = vrot.lane.b32.xlu0 %v1687, 8
        %v3919 = vpop.permute.xlu0 %3918
        %3920 = vrot.lane.b32.xlu0 %v1690, 8
        %v3921 = vpop.permute.xlu0 %3920
        %3922 = vrot.lane.b32.xlu0 %v1693, 8
        %v3923 = vpop.permute.xlu0 %3922
        %3924 = vrot.lane.b32.xlu0 %v1696, 8
        %v3925 = vpop.permute.xlu0 %3924
        %3926 = vrot.lane.b32.xlu0 %v1732, 8
        %v3927 = vpop.permute.xlu0 %3926
        %3928 = vrot.lane.b32.xlu0 %v1768, 8
        %v3929 = vpop.permute.xlu0 %3928
        %3930 = vrot.lane.b32.xlu0 %v1825, 8
        %v3931 = vpop.permute.xlu0 %3930
        %3932 = vrot.lane.b32.xlu0 %v1828, 8
        %v3933 = vpop.permute.xlu0 %3932
        %3934 = vrot.lane.b32.xlu0 %v1831, 8
        %v3935 = vpop.permute.xlu0 %3934
        %3936 = vrot.lane.b32.xlu0 %v1834, 8
        %v3937 = vpop.permute.xlu0 %3936
        %3938 = vrot.lane.b32.xlu0 %v1837, 8
        %v3939 = vpop.permute.xlu0 %3938
        %3940 = vrot.lane.b32.xlu0 %v1840, 8
        %v3941 = vpop.permute.xlu0 %3940
        %3942 = vrot.lane.b32.xlu0 %v1849, 8
        %v3943 = vpop.permute.xlu0 %3942
        %3944 = vrot.lane.b32.xlu0 %v1858, 8
        %v3945 = vpop.permute.xlu0 %3944
        %3978 = vrot.lane.b32.xlu0 %v1490, 16
        %v3979 = vpop.permute.xlu0 %3978
        %3980 = vrot.lane.b32.xlu0 %v1493, 16
        %v3981 = vpop.permute.xlu0 %3980
        %3982 = vrot.lane.b32.xlu0 %v1496, 16
        %v3983 = vpop.permute.xlu0 %3982
        %3984 = vrot.lane.b32.xlu0 %v1499, 16
        %v3985 = vpop.permute.xlu0 %3984
        %3986 = vrot.lane.b32.xlu0 %v1502, 16
        %v3987 = vpop.permute.xlu0 %3986
        %3988 = vrot.lane.b32.xlu0 %v1505, 16
        %v3989 = vpop.permute.xlu0 %3988
        %3990 = vrot.lane.b32.xlu0 %v1508, 16
        %v3991 = vpop.permute.xlu0 %3990
        %3992 = vrot.lane.b32.xlu0 %v1511, 16
        %v3993 = vpop.permute.xlu0 %3992
        %3994 = vrot.lane.b32.xlu0 %v1514, 16
        %v3995 = vpop.permute.xlu0 %3994
        %3996 = vrot.lane.b32.xlu0 %v1517, 16
        %v3997 = vpop.permute.xlu0 %3996
        %3998 = vrot.lane.b32.xlu0 %v1520, 16
        %v3999 = vpop.permute.xlu0 %3998
        %4000 = vrot.lane.b32.xlu0 %v1523, 16
        %v4001 = vpop.permute.xlu0 %4000
        %4002 = vrot.lane.b32.xlu0 %v1526, 16
        %v4003 = vpop.permute.xlu0 %4002
        %4004 = vrot.lane.b32.xlu0 %v1529, 16
        %v4005 = vpop.permute.xlu0 %4004
        %4006 = vrot.lane.b32.xlu0 %v1532, 16
        %v4007 = vpop.permute.xlu0 %4006
        %4008 = vrot.lane.b32.xlu0 %v1535, 16
        %v4009 = vpop.permute.xlu0 %4008
        %4010 = vrot.lane.b32.xlu0 %v1787, 16
        %v4011 = vpop.permute.xlu0 %4010
        %4012 = vrot.lane.b32.xlu0 %v1790, 16
        %v4013 = vpop.permute.xlu0 %4012
        %4014 = vrot.lane.b32.xlu0 %v1793, 16
        %v4015 = vpop.permute.xlu0 %4014
        %4016 = vrot.lane.b32.xlu0 %v1796, 16
        %v4017 = vpop.permute.xlu0 %4016
        %4018 = vrot.lane.b32.xlu0 %v1799, 16
        %v4019 = vpop.permute.xlu0 %4018
        %4020 = vrot.lane.b32.xlu0 %v1802, 16
        %v4021 = vpop.permute.xlu0 %4020
        %4022 = vrot.lane.b32.xlu0 %v1805, 16
        %v4023 = vpop.permute.xlu0 %4022
        %4024 = vrot.lane.b32.xlu0 %v1808, 16
        %v4025 = vpop.permute.xlu0 %4024
        %4026 = vrot.lane.b32.xlu0 %v1877, 16
        %v4027 = vpop.permute.xlu0 %4026
        %4028 = vrot.lane.b32.xlu0 %v1880, 16
        %v4029 = vpop.permute.xlu0 %4028
        %4030 = vrot.lane.b32.xlu0 %v1883, 16
        %v4031 = vpop.permute.xlu0 %4030
        %4032 = vrot.lane.b32.xlu0 %v1886, 16
        %v4033 = vpop.permute.xlu0 %4032
        %4034 = vrot.lane.b32.xlu0 %v1889, 16
        %v4035 = vpop.permute.xlu0 %4034
        %4036 = vrot.lane.b32.xlu0 %v1892, 16
        %v4037 = vpop.permute.xlu0 %4036
        %4038 = vrot.lane.b32.xlu0 %v1895, 16
        %v4039 = vpop.permute.xlu0 %4038
        %4040 = vrot.lane.b32.xlu0 %v1898, 16
        %v4041 = vpop.permute.xlu0 %4040
        %4074 = vrot.lane.b32.xlu0 %v1256, 24
        %v4075 = vpop.permute.xlu0 %4074
        %4076 = vrot.lane.b32.xlu0 %v1259, 24
        %v4077 = vpop.permute.xlu0 %4076
        %4078 = vrot.lane.b32.xlu0 %v1262, 24
        %v4079 = vpop.permute.xlu0 %4078
        %4080 = vrot.lane.b32.xlu0 %v1265, 24
        %v4081 = vpop.permute.xlu0 %4080
        %4082 = vrot.lane.b32.xlu0 %v1268, 24
        %v4083 = vpop.permute.xlu0 %4082
        %4084 = vrot.lane.b32.xlu0 %v1271, 24
        %v4085 = vpop.permute.xlu0 %4084
        %4086 = vrot.lane.b32.xlu0 %v1274, 24
        %v4087 = vpop.permute.xlu0 %4086
        %4088 = vrot.lane.b32.xlu0 %v1277, 24
        %v4089 = vpop.permute.xlu0 %4088
        %4090 = vrot.lane.b32.xlu0 %v1286, 24
        %v4091 = vpop.permute.xlu0 %4090
        %4092 = vrot.lane.b32.xlu0 %v1289, 24
        %v4093 = vpop.permute.xlu0 %4092
        %4094 = vrot.lane.b32.xlu0 %v1292, 24
        %v4095 = vpop.permute.xlu0 %4094
        %4096 = vrot.lane.b32.xlu0 %v1295, 24
        %v4097 = vpop.permute.xlu0 %4096
        %4098 = vrot.lane.b32.xlu0 %v1298, 24
        %v4099 = vpop.permute.xlu0 %4098
        %4100 = vrot.lane.b32.xlu0 %v1301, 24
        %v4101 = vpop.permute.xlu0 %4100
        %4102 = vrot.lane.b32.xlu0 %v1304, 24
        %v4103 = vpop.permute.xlu0 %4102
        %4104 = vrot.lane.b32.xlu0 %v1307, 24
        %v4105 = vpop.permute.xlu0 %4104
        %4106 = vrot.lane.b32.xlu0 %v1316, 24
        %v4107 = vpop.permute.xlu0 %4106
        %4108 = vrot.lane.b32.xlu0 %v1319, 24
        %v4109 = vpop.permute.xlu0 %4108
        %4110 = vrot.lane.b32.xlu0 %v1322, 24
        %v4111 = vpop.permute.xlu0 %4110
        %4112 = vrot.lane.b32.xlu0 %v1325, 24
        %v4113 = vpop.permute.xlu0 %4112
        %4114 = vrot.lane.b32.xlu0 %v1328, 24
        %v4115 = vpop.permute.xlu0 %4114
        %4116 = vrot.lane.b32.xlu0 %v1331, 24
        %v4117 = vpop.permute.xlu0 %4116
        %4118 = vrot.lane.b32.xlu0 %v1334, 24
        %v4119 = vpop.permute.xlu0 %4118
        %4120 = vrot.lane.b32.xlu0 %v1337, 24
        %v4121 = vpop.permute.xlu0 %4120
        %4122 = vrot.lane.b32.xlu0 %v1346, 24
        %v4123 = vpop.permute.xlu0 %4122
        %4124 = vrot.lane.b32.xlu0 %v1349, 24
        %v4125 = vpop.permute.xlu0 %4124
        %4126 = vrot.lane.b32.xlu0 %v1352, 24
        %v4127 = vpop.permute.xlu0 %4126
        %4128 = vrot.lane.b32.xlu0 %v1355, 24
        %v4129 = vpop.permute.xlu0 %4128
        %4130 = vrot.lane.b32.xlu0 %v1358, 24
        %v4131 = vpop.permute.xlu0 %4130
        %4132 = vrot.lane.b32.xlu0 %v1361, 24
        %v4133 = vpop.permute.xlu0 %4132
        %4134 = vrot.lane.b32.xlu0 %v1364, 24
        %v4135 = vpop.permute.xlu0 %4134
        %4136 = vrot.lane.b32.xlu0 %v1367, 24
        %v4137 = vpop.permute.xlu0 %4136
        %4170 = vrot.lane.b32.xlu0 %v1651, 32
        %v4171 = vpop.permute.xlu0 %4170
        %4172 = vrot.lane.b32.xlu0 %v1654, 32
        %v4173 = vpop.permute.xlu0 %4172
        %4174 = vrot.lane.b32.xlu0 %v1657, 32
        %v4175 = vpop.permute.xlu0 %4174
        %4176 = vrot.lane.b32.xlu0 %v1660, 32
        %v4177 = vpop.permute.xlu0 %4176
        %4178 = vrot.lane.b32.xlu0 %v1663, 32
        %v4179 = vpop.permute.xlu0 %4178
        %4180 = vrot.lane.b32.xlu0 %v1666, 32
        %v4181 = vpop.permute.xlu0 %4180
        %4182 = vrot.lane.b32.xlu0 %v1669, 32
        %v4183 = vpop.permute.xlu0 %4182
        %4184 = vrot.lane.b32.xlu0 %v1672, 32
        %v4185 = vpop.permute.xlu0 %4184
        %4186 = vrot.lane.b32.xlu0 %v1675, 32
        %v4187 = vpop.permute.xlu0 %4186
        %4188 = vrot.lane.b32.xlu0 %v1678, 32
        %v4189 = vpop.permute.xlu0 %4188
        %4190 = vrot.lane.b32.xlu0 %v1681, 32
        %v4191 = vpop.permute.xlu0 %4190
        %4192 = vrot.lane.b32.xlu0 %v1684, 32
        %v4193 = vpop.permute.xlu0 %4192
        %4194 = vrot.lane.b32.xlu0 %v1687, 32
        %v4195 = vpop.permute.xlu0 %4194
        %4196 = vrot.lane.b32.xlu0 %v1690, 32
        %v4197 = vpop.permute.xlu0 %4196
        %4198 = vrot.lane.b32.xlu0 %v1693, 32
        %v4199 = vpop.permute.xlu0 %4198
        %4200 = vrot.lane.b32.xlu0 %v1696, 32
        %v4201 = vpop.permute.xlu0 %4200
        %4202 = vrot.lane.b32.xlu0 %v1819, 32
        %v4203 = vpop.permute.xlu0 %4202
        %4204 = vrot.lane.b32.xlu0 %v1822, 32
        %v4205 = vpop.permute.xlu0 %4204
        %4206 = vrot.lane.b32.xlu0 %v1825, 32
        %v4207 = vpop.permute.xlu0 %4206
        %4208 = vrot.lane.b32.xlu0 %v1828, 32
        %v4209 = vpop.permute.xlu0 %4208
        %4210 = vrot.lane.b32.xlu0 %v1831, 32
        %v4211 = vpop.permute.xlu0 %4210
        %4212 = vrot.lane.b32.xlu0 %v1834, 32
        %v4213 = vpop.permute.xlu0 %4212
        %4214 = vrot.lane.b32.xlu0 %v1837, 32
        %v4215 = vpop.permute.xlu0 %4214
        %4216 = vrot.lane.b32.xlu0 %v1840, 32
        %v4217 = vpop.permute.xlu0 %4216
        %4218 = vrot.lane.b32.xlu0 %v1909, 32
        %v4219 = vpop.permute.xlu0 %4218
        %4220 = vrot.lane.b32.xlu0 %v1912, 32
        %v4221 = vpop.permute.xlu0 %4220
        %4222 = vrot.lane.b32.xlu0 %v1915, 32
        %v4223 = vpop.permute.xlu0 %4222
        %4224 = vrot.lane.b32.xlu0 %v1918, 32
        %v4225 = vpop.permute.xlu0 %4224
        %4226 = vrot.lane.b32.xlu0 %v1921, 32
        %v4227 = vpop.permute.xlu0 %4226
        %4228 = vrot.lane.b32.xlu0 %v1924, 32
        %v4229 = vpop.permute.xlu0 %4228
        %4230 = vrot.lane.b32.xlu0 %v1927, 32
        %v4231 = vpop.permute.xlu0 %4230
        %4232 = vrot.lane.b32.xlu0 %v1930, 32
        %v4233 = vpop.permute.xlu0 %4232
        %4266 = vrot.lane.b32.xlu0 %v1493, 40
        %v4267 = vpop.permute.xlu0 %4266
        %4268 = vrot.lane.b32.xlu0 %v1496, 40
        %v4269 = vpop.permute.xlu0 %4268
        %4270 = vrot.lane.b32.xlu0 %v1499, 40
        %v4271 = vpop.permute.xlu0 %4270
        %4272 = vrot.lane.b32.xlu0 %v1502, 40
        %v4273 = vpop.permute.xlu0 %4272
        %4274 = vrot.lane.b32.xlu0 %v1505, 40
        %v4275 = vpop.permute.xlu0 %4274
        %4276 = vrot.lane.b32.xlu0 %v1508, 40
        %v4277 = vpop.permute.xlu0 %4276
        %4278 = vrot.lane.b32.xlu0 %v1511, 40
        %v4279 = vpop.permute.xlu0 %4278
        %4280 = vrot.lane.b32.xlu0 %v1713, 40
        %v4281 = vpop.permute.xlu0 %4280
        %4282 = vrot.lane.b32.xlu0 %v1517, 40
        %v4283 = vpop.permute.xlu0 %4282
        %4284 = vrot.lane.b32.xlu0 %v1520, 40
        %v4285 = vpop.permute.xlu0 %4284
        %4286 = vrot.lane.b32.xlu0 %v1523, 40
        %v4287 = vpop.permute.xlu0 %4286
        %4288 = vrot.lane.b32.xlu0 %v1526, 40
        %v4289 = vpop.permute.xlu0 %4288
        %4290 = vrot.lane.b32.xlu0 %v1529, 40
        %v4291 = vpop.permute.xlu0 %4290
        %4292 = vrot.lane.b32.xlu0 %v1532, 40
        %v4293 = vpop.permute.xlu0 %4292
        %4294 = vrot.lane.b32.xlu0 %v1535, 40
        %v4295 = vpop.permute.xlu0 %4294
        %4296 = vrot.lane.b32.xlu0 %v1716, 40
        %v4297 = vpop.permute.xlu0 %4296
        %4298 = vrot.lane.b32.xlu0 %v1790, 40
        %v4299 = vpop.permute.xlu0 %4298
        %4300 = vrot.lane.b32.xlu0 %v1793, 40
        %v4301 = vpop.permute.xlu0 %4300
        %4302 = vrot.lane.b32.xlu0 %v1796, 40
        %v4303 = vpop.permute.xlu0 %4302
        %4304 = vrot.lane.b32.xlu0 %v1799, 40
        %v4305 = vpop.permute.xlu0 %4304
        %4306 = vrot.lane.b32.xlu0 %v1802, 40
        %v4307 = vpop.permute.xlu0 %4306
        %4308 = vrot.lane.b32.xlu0 %v1805, 40
        %v4309 = vpop.permute.xlu0 %4308
        %4310 = vrot.lane.b32.xlu0 %v1808, 40
        %v4311 = vpop.permute.xlu0 %4310
        %4312 = vrot.lane.b32.xlu0 %v1845, 40
        %v4313 = vpop.permute.xlu0 %4312
        %4314 = vrot.lane.b32.xlu0 %v1880, 40
        %v4315 = vpop.permute.xlu0 %4314
        %4316 = vrot.lane.b32.xlu0 %v1883, 40
        %v4317 = vpop.permute.xlu0 %4316
        %4318 = vrot.lane.b32.xlu0 %v1886, 40
        %v4319 = vpop.permute.xlu0 %4318
        %4320 = vrot.lane.b32.xlu0 %v1889, 40
        %v4321 = vpop.permute.xlu0 %4320
        %4322 = vrot.lane.b32.xlu0 %v1892, 40
        %v4323 = vpop.permute.xlu0 %4322
        %4324 = vrot.lane.b32.xlu0 %v1895, 40
        %v4325 = vpop.permute.xlu0 %4324
        %4326 = vrot.lane.b32.xlu0 %v1898, 40
        %v4327 = vpop.permute.xlu0 %4326
        %4328 = vrot.lane.b32.xlu0 %v1935, 40
        %v4329 = vpop.permute.xlu0 %4328
        %4362 = vrot.lane.b32.xlu0 %v1259, 48
        %v4363 = vpop.permute.xlu0 %4362
        %4364 = vrot.lane.b32.xlu0 %v1262, 48
        %v4365 = vpop.permute.xlu0 %4364
        %4366 = vrot.lane.b32.xlu0 %v1265, 48
        %v4367 = vpop.permute.xlu0 %4366
        %4368 = vrot.lane.b32.xlu0 %v1268, 48
        %v4369 = vpop.permute.xlu0 %4368
        %4370 = vrot.lane.b32.xlu0 %v1271, 48
        %v4371 = vpop.permute.xlu0 %4370
        %4372 = vrot.lane.b32.xlu0 %v1274, 48
        %v4373 = vpop.permute.xlu0 %4372
        %4374 = vrot.lane.b32.xlu0 %v1277, 48
        %v4375 = vpop.permute.xlu0 %4374
        %4376 = vrot.lane.b32.xlu0 %v1280, 48
        %v4377 = vpop.permute.xlu0 %4376
        %4378 = vrot.lane.b32.xlu0 %v1289, 48
        %v4379 = vpop.permute.xlu0 %4378
        %4380 = vrot.lane.b32.xlu0 %v1292, 48
        %v4381 = vpop.permute.xlu0 %4380
        %4382 = vrot.lane.b32.xlu0 %v1295, 48
        %v4383 = vpop.permute.xlu0 %4382
        %4384 = vrot.lane.b32.xlu0 %v1298, 48
        %v4385 = vpop.permute.xlu0 %4384
        %4386 = vrot.lane.b32.xlu0 %v1301, 48
        %v4387 = vpop.permute.xlu0 %4386
        %4388 = vrot.lane.b32.xlu0 %v1304, 48
        %v4389 = vpop.permute.xlu0 %4388
        %4390 = vrot.lane.b32.xlu0 %v1307, 48
        %v4391 = vpop.permute.xlu0 %4390
        %4392 = vrot.lane.b32.xlu0 %v1310, 48
        %v4393 = vpop.permute.xlu0 %4392
        %4394 = vrot.lane.b32.xlu0 %v1319, 48
        %v4395 = vpop.permute.xlu0 %4394
        %4396 = vrot.lane.b32.xlu0 %v1322, 48
        %v4397 = vpop.permute.xlu0 %4396
        %4398 = vrot.lane.b32.xlu0 %v1325, 48
        %v4399 = vpop.permute.xlu0 %4398
        %4400 = vrot.lane.b32.xlu0 %v1328, 48
        %v4401 = vpop.permute.xlu0 %4400
        %4402 = vrot.lane.b32.xlu0 %v1331, 48
        %v4403 = vpop.permute.xlu0 %4402
        %4404 = vrot.lane.b32.xlu0 %v1334, 48
        %v4405 = vpop.permute.xlu0 %4404
        %4406 = vrot.lane.b32.xlu0 %v1337, 48
        %v4407 = vpop.permute.xlu0 %4406
        %4408 = vrot.lane.b32.xlu0 %v1340, 48
        %v4409 = vpop.permute.xlu0 %4408
        %4410 = vrot.lane.b32.xlu0 %v1349, 48
        %v4411 = vpop.permute.xlu0 %4410
        %4412 = vrot.lane.b32.xlu0 %v1352, 48
        %v4413 = vpop.permute.xlu0 %4412
        %4414 = vrot.lane.b32.xlu0 %v1355, 48
        %v4415 = vpop.permute.xlu0 %4414
        %4416 = vrot.lane.b32.xlu0 %v1358, 48
        %v4417 = vpop.permute.xlu0 %4416
        %4418 = vrot.lane.b32.xlu0 %v1361, 48
        %v4419 = vpop.permute.xlu0 %4418
        %4420 = vrot.lane.b32.xlu0 %v1364, 48
        %v4421 = vpop.permute.xlu0 %4420
        %4422 = vrot.lane.b32.xlu0 %v1367, 48
        %v4423 = vpop.permute.xlu0 %4422
        %4424 = vrot.lane.b32.xlu0 %v1370, 48
        %v4425 = vpop.permute.xlu0 %4424
        %4458 = vrot.lane.b32.xlu0 %v1654, 56
        %v4459 = vpop.permute.xlu0 %4458
        %4460 = vrot.lane.b32.xlu0 %v1657, 56
        %v4461 = vpop.permute.xlu0 %4460
        %4462 = vrot.lane.b32.xlu0 %v1660, 56
        %v4463 = vpop.permute.xlu0 %4462
        %4464 = vrot.lane.b32.xlu0 %v1663, 56
        %v4465 = vpop.permute.xlu0 %4464
        %4466 = vrot.lane.b32.xlu0 %v1666, 56
        %v4467 = vpop.permute.xlu0 %4466
        %4468 = vrot.lane.b32.xlu0 %v1669, 56
        %v4469 = vpop.permute.xlu0 %4468
        %4470 = vrot.lane.b32.xlu0 %v1672, 56
        %v4471 = vpop.permute.xlu0 %4470
        %4472 = vrot.lane.b32.xlu0 %v1729, 56
        %v4473 = vpop.permute.xlu0 %4472
        %4474 = vrot.lane.b32.xlu0 %v1678, 56
        %v4475 = vpop.permute.xlu0 %4474
        %4476 = vrot.lane.b32.xlu0 %v1681, 56
        %v4477 = vpop.permute.xlu0 %4476
        %4478 = vrot.lane.b32.xlu0 %v1684, 56
        %v4479 = vpop.permute.xlu0 %4478
        %4480 = vrot.lane.b32.xlu0 %v1687, 56
        %v4481 = vpop.permute.xlu0 %4480
        %4482 = vrot.lane.b32.xlu0 %v1690, 56
        %v4483 = vpop.permute.xlu0 %4482
        %4484 = vrot.lane.b32.xlu0 %v1693, 56
        %v4485 = vpop.permute.xlu0 %4484
        %4486 = vrot.lane.b32.xlu0 %v1696, 56
        %v4487 = vpop.permute.xlu0 %4486
        %4488 = vrot.lane.b32.xlu0 %v1732, 56
        %v4489 = vpop.permute.xlu0 %4488
        %4490 = vrot.lane.b32.xlu0 %v1822, 56
        %v4491 = vpop.permute.xlu0 %4490
        %4492 = vrot.lane.b32.xlu0 %v1825, 56
        %v4493 = vpop.permute.xlu0 %4492
        %4494 = vrot.lane.b32.xlu0 %v1828, 56
        %v4495 = vpop.permute.xlu0 %4494
        %4496 = vrot.lane.b32.xlu0 %v1831, 56
        %v4497 = vpop.permute.xlu0 %4496
        %4498 = vrot.lane.b32.xlu0 %v1834, 56
        %v4499 = vpop.permute.xlu0 %4498
        %4500 = vrot.lane.b32.xlu0 %v1837, 56
        %v4501 = vpop.permute.xlu0 %4500
        %4502 = vrot.lane.b32.xlu0 %v1840, 56
        %v4503 = vpop.permute.xlu0 %4502
        %4504 = vrot.lane.b32.xlu0 %v1849, 56
        %v4505 = vpop.permute.xlu0 %4504
        %4506 = vrot.lane.b32.xlu0 %v1912, 56
        %v4507 = vpop.permute.xlu0 %4506
        %4508 = vrot.lane.b32.xlu0 %v1915, 56
        %v4509 = vpop.permute.xlu0 %4508
        %4510 = vrot.lane.b32.xlu0 %v1918, 56
        %v4511 = vpop.permute.xlu0 %4510
        %4512 = vrot.lane.b32.xlu0 %v1921, 56
        %v4513 = vpop.permute.xlu0 %4512
        %4514 = vrot.lane.b32.xlu0 %v1924, 56
        %v4515 = vpop.permute.xlu0 %4514
        %4516 = vrot.lane.b32.xlu0 %v1927, 56
        %v4517 = vpop.permute.xlu0 %4516
        %4518 = vrot.lane.b32.xlu0 %v1930, 56
        %v4519 = vpop.permute.xlu0 %4518
        %4520 = vrot.lane.b32.xlu0 %v1939, 56
        %v4521 = vpop.permute.xlu0 %4520
        %4554 = vrot.lane.b32.xlu0 %v1496, 64
        %v4555 = vpop.permute.xlu0 %4554
        %4556 = vrot.lane.b32.xlu0 %v1499, 64
        %v4557 = vpop.permute.xlu0 %4556
        %4558 = vrot.lane.b32.xlu0 %v1502, 64
        %v4559 = vpop.permute.xlu0 %4558
        %4560 = vrot.lane.b32.xlu0 %v1505, 64
        %v4561 = vpop.permute.xlu0 %4560
        %4562 = vrot.lane.b32.xlu0 %v1508, 64
        %v4563 = vpop.permute.xlu0 %4562
        %4564 = vrot.lane.b32.xlu0 %v1511, 64
        %v4565 = vpop.permute.xlu0 %4564
        %4566 = vrot.lane.b32.xlu0 %v1713, 64
        %v4567 = vpop.permute.xlu0 %4566
        %4568 = vrot.lane.b32.xlu0 %v1749, 64
        %v4569 = vpop.permute.xlu0 %4568
        %4570 = vrot.lane.b32.xlu0 %v1520, 64
        %v4571 = vpop.permute.xlu0 %4570
        %4572 = vrot.lane.b32.xlu0 %v1523, 64
        %v4573 = vpop.permute.xlu0 %4572
        %4574 = vrot.lane.b32.xlu0 %v1526, 64
        %v4575 = vpop.permute.xlu0 %4574
        %4576 = vrot.lane.b32.xlu0 %v1529, 64
        %v4577 = vpop.permute.xlu0 %4576
        %4578 = vrot.lane.b32.xlu0 %v1532, 64
        %v4579 = vpop.permute.xlu0 %4578
        %4580 = vrot.lane.b32.xlu0 %v1535, 64
        %v4581 = vpop.permute.xlu0 %4580
        %4582 = vrot.lane.b32.xlu0 %v1716, 64
        %v4583 = vpop.permute.xlu0 %4582
        %4584 = vrot.lane.b32.xlu0 %v1752, 64
        %v4585 = vpop.permute.xlu0 %4584
        %4586 = vrot.lane.b32.xlu0 %v1793, 64
        %v4587 = vpop.permute.xlu0 %4586
        %4588 = vrot.lane.b32.xlu0 %v1796, 64
        %v4589 = vpop.permute.xlu0 %4588
        %4590 = vrot.lane.b32.xlu0 %v1799, 64
        %v4591 = vpop.permute.xlu0 %4590
        %4592 = vrot.lane.b32.xlu0 %v1802, 64
        %v4593 = vpop.permute.xlu0 %4592
        %4594 = vrot.lane.b32.xlu0 %v1805, 64
        %v4595 = vpop.permute.xlu0 %4594
        %4596 = vrot.lane.b32.xlu0 %v1808, 64
        %v4597 = vpop.permute.xlu0 %4596
        %4598 = vrot.lane.b32.xlu0 %v1845, 64
        %v4599 = vpop.permute.xlu0 %4598
        %4600 = vrot.lane.b32.xlu0 %v1854, 64
        %v4601 = vpop.permute.xlu0 %4600
        %4602 = vrot.lane.b32.xlu0 %v1883, 64
        %v4603 = vpop.permute.xlu0 %4602
        %4604 = vrot.lane.b32.xlu0 %v1886, 64
        %v4605 = vpop.permute.xlu0 %4604
        %4606 = vrot.lane.b32.xlu0 %v1889, 64
        %v4607 = vpop.permute.xlu0 %4606
        %4608 = vrot.lane.b32.xlu0 %v1892, 64
        %v4609 = vpop.permute.xlu0 %4608
        %4610 = vrot.lane.b32.xlu0 %v1895, 64
        %v4611 = vpop.permute.xlu0 %4610
        %4612 = vrot.lane.b32.xlu0 %v1898, 64
        %v4613 = vpop.permute.xlu0 %4612
        %4614 = vrot.lane.b32.xlu0 %v1935, 64
        %v4615 = vpop.permute.xlu0 %4614
        %4616 = vrot.lane.b32.xlu0 %v1944, 64
        %v4617 = vpop.permute.xlu0 %4616
        %4650 = vrot.lane.b32.xlu0 %v1262, 72
        %v4651 = vpop.permute.xlu0 %4650
        %4652 = vrot.lane.b32.xlu0 %v1265, 72
        %v4653 = vpop.permute.xlu0 %4652
        %4654 = vrot.lane.b32.xlu0 %v1268, 72
        %v4655 = vpop.permute.xlu0 %4654
        %4656 = vrot.lane.b32.xlu0 %v1271, 72
        %v4657 = vpop.permute.xlu0 %4656
        %4658 = vrot.lane.b32.xlu0 %v1274, 72
        %v4659 = vpop.permute.xlu0 %4658
        %4660 = vrot.lane.b32.xlu0 %v1277, 72
        %v4661 = vpop.permute.xlu0 %4660
        %4662 = vrot.lane.b32.xlu0 %v1280, 72
        %v4663 = vpop.permute.xlu0 %4662
        %4664 = vrot.lane.b32.xlu0 %v1283, 72
        %v4665 = vpop.permute.xlu0 %4664
        %4666 = vrot.lane.b32.xlu0 %v1292, 72
        %v4667 = vpop.permute.xlu0 %4666
        %4668 = vrot.lane.b32.xlu0 %v1295, 72
        %v4669 = vpop.permute.xlu0 %4668
        %4670 = vrot.lane.b32.xlu0 %v1298, 72
        %v4671 = vpop.permute.xlu0 %4670
        %4672 = vrot.lane.b32.xlu0 %v1301, 72
        %v4673 = vpop.permute.xlu0 %4672
        %4674 = vrot.lane.b32.xlu0 %v1304, 72
        %v4675 = vpop.permute.xlu0 %4674
        %4676 = vrot.lane.b32.xlu0 %v1307, 72
        %v4677 = vpop.permute.xlu0 %4676
        %4678 = vrot.lane.b32.xlu0 %v1310, 72
        %v4679 = vpop.permute.xlu0 %4678
        %4680 = vrot.lane.b32.xlu0 %v1313, 72
        %v4681 = vpop.permute.xlu0 %4680
        %4682 = vrot.lane.b32.xlu0 %v1322, 72
        %v4683 = vpop.permute.xlu0 %4682
        %4684 = vrot.lane.b32.xlu0 %v1325, 72
        %v4685 = vpop.permute.xlu0 %4684
        %4686 = vrot.lane.b32.xlu0 %v1328, 72
        %v4687 = vpop.permute.xlu0 %4686
        %4688 = vrot.lane.b32.xlu0 %v1331, 72
        %v4689 = vpop.permute.xlu0 %4688
        %4690 = vrot.lane.b32.xlu0 %v1334, 72
        %v4691 = vpop.permute.xlu0 %4690
        %4692 = vrot.lane.b32.xlu0 %v1337, 72
        %v4693 = vpop.permute.xlu0 %4692
        %4694 = vrot.lane.b32.xlu0 %v1340, 72
        %v4695 = vpop.permute.xlu0 %4694
        %4696 = vrot.lane.b32.xlu0 %v1343, 72
        %v4697 = vpop.permute.xlu0 %4696
        %4698 = vrot.lane.b32.xlu0 %v1352, 72
        %v4699 = vpop.permute.xlu0 %4698
        %4700 = vrot.lane.b32.xlu0 %v1355, 72
        %v4701 = vpop.permute.xlu0 %4700
        %4702 = vrot.lane.b32.xlu0 %v1358, 72
        %v4703 = vpop.permute.xlu0 %4702
        %4704 = vrot.lane.b32.xlu0 %v1361, 72
        %v4705 = vpop.permute.xlu0 %4704
        %4706 = vrot.lane.b32.xlu0 %v1364, 72
        %v4707 = vpop.permute.xlu0 %4706
        %4708 = vrot.lane.b32.xlu0 %v1367, 72
        %v4709 = vpop.permute.xlu0 %4708
        %4710 = vrot.lane.b32.xlu0 %v1370, 72
        %v4711 = vpop.permute.xlu0 %4710
        %4712 = vrot.lane.b32.xlu0 %v1373, 72
        %v4713 = vpop.permute.xlu0 %4712
        %4746 = vrot.lane.b32.xlu0 %v1657, 80
        %v4747 = vpop.permute.xlu0 %4746
        %4748 = vrot.lane.b32.xlu0 %v1660, 80
        %v4749 = vpop.permute.xlu0 %4748
        %4750 = vrot.lane.b32.xlu0 %v1663, 80
        %v4751 = vpop.permute.xlu0 %4750
        %4752 = vrot.lane.b32.xlu0 %v1666, 80
        %v4753 = vpop.permute.xlu0 %4752
        %4754 = vrot.lane.b32.xlu0 %v1669, 80
        %v4755 = vpop.permute.xlu0 %4754
        %4756 = vrot.lane.b32.xlu0 %v1672, 80
        %v4757 = vpop.permute.xlu0 %4756
        %4758 = vrot.lane.b32.xlu0 %v1729, 80
        %v4759 = vpop.permute.xlu0 %4758
        %4760 = vrot.lane.b32.xlu0 %v1765, 80
        %v4761 = vpop.permute.xlu0 %4760
        %4762 = vrot.lane.b32.xlu0 %v1681, 80
        %v4763 = vpop.permute.xlu0 %4762
        %4764 = vrot.lane.b32.xlu0 %v1684, 80
        %v4765 = vpop.permute.xlu0 %4764
        %4766 = vrot.lane.b32.xlu0 %v1687, 80
        %v4767 = vpop.permute.xlu0 %4766
        %4768 = vrot.lane.b32.xlu0 %v1690, 80
        %v4769 = vpop.permute.xlu0 %4768
        %4770 = vrot.lane.b32.xlu0 %v1693, 80
        %v4771 = vpop.permute.xlu0 %4770
        %4772 = vrot.lane.b32.xlu0 %v1696, 80
        %v4773 = vpop.permute.xlu0 %4772
        %4774 = vrot.lane.b32.xlu0 %v1732, 80
        %v4775 = vpop.permute.xlu0 %4774
        %4776 = vrot.lane.b32.xlu0 %v1768, 80
        %v4777 = vpop.permute.xlu0 %4776
        %4778 = vrot.lane.b32.xlu0 %v1825, 80
        %v4779 = vpop.permute.xlu0 %4778
        %4780 = vrot.lane.b32.xlu0 %v1828, 80
        %v4781 = vpop.permute.xlu0 %4780
        %4782 = vrot.lane.b32.xlu0 %v1831, 80
        %v4783 = vpop.permute.xlu0 %4782
        %4784 = vrot.lane.b32.xlu0 %v1834, 80
        %v4785 = vpop.permute.xlu0 %4784
        %4786 = vrot.lane.b32.xlu0 %v1837, 80
        %v4787 = vpop.permute.xlu0 %4786
        %4788 = vrot.lane.b32.xlu0 %v1840, 80
        %v4789 = vpop.permute.xlu0 %4788
        %4790 = vrot.lane.b32.xlu0 %v1849, 80
        %v4791 = vpop.permute.xlu0 %4790
        %4792 = vrot.lane.b32.xlu0 %v1858, 80
        %v4793 = vpop.permute.xlu0 %4792
        %4794 = vrot.lane.b32.xlu0 %v1915, 80
        %v4795 = vpop.permute.xlu0 %4794
        %4796 = vrot.lane.b32.xlu0 %v1918, 80
        %v4797 = vpop.permute.xlu0 %4796
        %4798 = vrot.lane.b32.xlu0 %v1921, 80
        %v4799 = vpop.permute.xlu0 %4798
        %4800 = vrot.lane.b32.xlu0 %v1924, 80
        %v4801 = vpop.permute.xlu0 %4800
        %4802 = vrot.lane.b32.xlu0 %v1927, 80
        %v4803 = vpop.permute.xlu0 %4802
        %4804 = vrot.lane.b32.xlu0 %v1930, 80
        %v4805 = vpop.permute.xlu0 %4804
        %4806 = vrot.lane.b32.xlu0 %v1939, 80
        %v4807 = vpop.permute.xlu0 %4806
        %4808 = vrot.lane.b32.xlu0 %v1948, 80
        %v4809 = vpop.permute.xlu0 %4808
        %v4842 = vsel %vm980, %v1232, %v3883
        %v4843 = vsel %vm980, %v1235, %v3885
        %v4844 = vsel %vm980, %v1238, %v3887
        %v4845 = vsel %vm980, %v1241, %v3889
        %v4846 = vsel %vm980, %v1244, %v3891
        %v4847 = vsel %vm980, %v1247, %v3893
        %v4848 = vsel %vm980, %v1250, %v3895
        %v4849 = vsel %vm980, %v1253, %v3897
        %v4850 = vsel %vm980, %v1262, %v3899
        %v4851 = vsel %vm980, %v1265, %v3901
        %v4852 = vsel %vm980, %v1268, %v3903
        %v4853 = vsel %vm980, %v1271, %v3905
        %v4854 = vsel %vm980, %v1274, %v3907
        %v4855 = vsel %vm980, %v1277, %v3909
        %v4856 = vsel %vm980, %v1280, %v3911
        %v4857 = vsel %vm980, %v1283, %v3913
        %v4858 = vsel %vm980, %v1292, %v3915
        %v4859 = vsel %vm980, %v1295, %v3917
        %v4860 = vsel %vm980, %v1298, %v3919
        %v4861 = vsel %vm980, %v1301, %v3921
        %v4862 = vsel %vm980, %v1304, %v3923
        %v4863 = vsel %vm980, %v1307, %v3925
        %v4864 = vsel %vm980, %v1310, %v3927
        %v4865 = vsel %vm980, %v1313, %v3929
        %v4866 = vsel %vm980, %v1322, %v3931
        %v4867 = vsel %vm980, %v1325, %v3933
        %v4868 = vsel %vm980, %v1328, %v3935
        %v4869 = vsel %vm980, %v1331, %v3937
        %v4870 = vsel %vm980, %v1334, %v3939
        %v4871 = vsel %vm980, %v1337, %v3941
        %v4872 = vsel %vm980, %v1340, %v3943
        %v4873 = vsel %vm980, %v1343, %v3945
        %v4874 = vsel %vm392, %v4842, %v3979
        %v4875 = vsel %vm392, %v4843, %v3981
        %v4876 = vsel %vm392, %v4844, %v3983
        %v4877 = vsel %vm392, %v4845, %v3985
        %v4878 = vsel %vm392, %v4846, %v3987
        %v4879 = vsel %vm392, %v4847, %v3989
        %v4880 = vsel %vm392, %v4848, %v3991
        %v4881 = vsel %vm392, %v4849, %v3993
        %v4882 = vsel %vm392, %v4850, %v3995
        %v4883 = vsel %vm392, %v4851, %v3997
        %v4884 = vsel %vm392, %v4852, %v3999
        %v4885 = vsel %vm392, %v4853, %v4001
        %v4886 = vsel %vm392, %v4854, %v4003
        %v4887 = vsel %vm392, %v4855, %v4005
        %v4888 = vsel %vm392, %v4856, %v4007
        %v4889 = vsel %vm392, %v4857, %v4009
        %v4890 = vsel %vm392, %v4858, %v4011
        %v4891 = vsel %vm392, %v4859, %v4013
        %v4892 = vsel %vm392, %v4860, %v4015
        %v4893 = vsel %vm392, %v4861, %v4017
        %v4894 = vsel %vm392, %v4862, %v4019
        %v4895 = vsel %vm392, %v4863, %v4021
        %v4896 = vsel %vm392, %v4864, %v4023
        %v4897 = vsel %vm392, %v4865, %v4025
        %v4898 = vsel %vm392, %v4866, %v4027
        %v4899 = vsel %vm392, %v4867, %v4029
        %v4900 = vsel %vm392, %v4868, %v4031
        %v4901 = vsel %vm392, %v4869, %v4033
        %v4902 = vsel %vm392, %v4870, %v4035
        %v4903 = vsel %vm392, %v4871, %v4037
        %v4904 = vsel %vm392, %v4872, %v4039
        %v4905 = vsel %vm392, %v4873, %v4041
        %v4906 = vsel %vm3453, %v4874, %v4075
        %v4907 = vsel %vm3453, %v4875, %v4077
        %v4908 = vsel %vm3453, %v4876, %v4079
        %v4909 = vsel %vm3453, %v4877, %v4081
        %v4910 = vsel %vm3453, %v4878, %v4083
        %v4911 = vsel %vm3453, %v4879, %v4085
        %v4912 = vsel %vm3453, %v4880, %v4087
        %v4913 = vsel %vm3453, %v4881, %v4089
        %v4914 = vsel %vm3453, %v4882, %v4091
        %v4915 = vsel %vm3453, %v4883, %v4093
        %v4916 = vsel %vm3453, %v4884, %v4095
        %v4917 = vsel %vm3453, %v4885, %v4097
        %v4918 = vsel %vm3453, %v4886, %v4099
        %v4919 = vsel %vm3453, %v4887, %v4101
        %v4920 = vsel %vm3453, %v4888, %v4103
        %v4921 = vsel %vm3453, %v4889, %v4105
        %v4922 = vsel %vm3453, %v4890, %v4107
        %v4923 = vsel %vm3453, %v4891, %v4109
        %v4924 = vsel %vm3453, %v4892, %v4111
        %v4925 = vsel %vm3453, %v4893, %v4113
        %v4926 = vsel %vm3453, %v4894, %v4115
        %v4927 = vsel %vm3453, %v4895, %v4117
        %v4928 = vsel %vm3453, %v4896, %v4119
        %v4929 = vsel %vm3453, %v4897, %v4121
        %v4930 = vsel %vm3453, %v4898, %v4123
        %v4931 = vsel %vm3453, %v4899, %v4125
        %v4932 = vsel %vm3453, %v4900, %v4127
        %v4933 = vsel %vm3453, %v4901, %v4129
        %v4934 = vsel %vm3453, %v4902, %v4131
        %v4935 = vsel %vm3453, %v4903, %v4133
        %v4936 = vsel %vm3453, %v4904, %v4135
        %v4937 = vsel %vm3453, %v4905, %v4137
        %v4938 = vsel %vm3486, %v4906, %v4171
        %v4939 = vsel %vm3486, %v4907, %v4173
        %v4940 = vsel %vm3486, %v4908, %v4175
        %v4941 = vsel %vm3486, %v4909, %v4177
        %v4942 = vsel %vm3486, %v4910, %v4179
        %v4943 = vsel %vm3486, %v4911, %v4181
        %v4944 = vsel %vm3486, %v4912, %v4183
        %v4945 = vsel %vm3486, %v4913, %v4185
        %v4946 = vsel %vm3486, %v4914, %v4187
        %v4947 = vsel %vm3486, %v4915, %v4189
        %v4948 = vsel %vm3486, %v4916, %v4191
        %v4949 = vsel %vm3486, %v4917, %v4193
        %v4950 = vsel %vm3486, %v4918, %v4195
        %v4951 = vsel %vm3486, %v4919, %v4197
        %v4952 = vsel %vm3486, %v4920, %v4199
        %v4953 = vsel %vm3486, %v4921, %v4201
        %v4954 = vsel %vm3486, %v4922, %v4203
        %v4955 = vsel %vm3486, %v4923, %v4205
        %v4956 = vsel %vm3486, %v4924, %v4207
        %v4957 = vsel %vm3486, %v4925, %v4209
        %v4958 = vsel %vm3486, %v4926, %v4211
        %v4959 = vsel %vm3486, %v4927, %v4213
        %v4960 = vsel %vm3486, %v4928, %v4215
        %v4961 = vsel %vm3486, %v4929, %v4217
        %v4962 = vsel %vm3486, %v4930, %v4219
        %v4963 = vsel %vm3486, %v4931, %v4221
        %v4964 = vsel %vm3486, %v4932, %v4223
        %v4965 = vsel %vm3486, %v4933, %v4225
        %v4966 = vsel %vm3486, %v4934, %v4227
        %v4967 = vsel %vm3486, %v4935, %v4229
        %v4968 = vsel %vm3486, %v4936, %v4231
        %v4969 = vsel %vm3486, %v4937, %v4233
        %v4970 = vsel %vm3519, %v4938, %v4267
        %v4971 = vsel %vm3519, %v4939, %v4269
        %v4972 = vsel %vm3519, %v4940, %v4271
        %v4973 = vsel %vm3519, %v4941, %v4273
        %v4974 = vsel %vm3519, %v4942, %v4275
        %v4975 = vsel %vm3519, %v4943, %v4277
        %v4976 = vsel %vm3519, %v4944, %v4279
        %v4977 = vsel %vm3519, %v4945, %v4281
        %v4978 = vsel %vm3519, %v4946, %v4283
        %v4979 = vsel %vm3519, %v4947, %v4285
        %v4980 = vsel %vm3519, %v4948, %v4287
        %v4981 = vsel %vm3519, %v4949, %v4289
        %v4982 = vsel %vm3519, %v4950, %v4291
        %v4983 = vsel %vm3519, %v4951, %v4293
        %v4984 = vsel %vm3519, %v4952, %v4295
        %v4985 = vsel %vm3519, %v4953, %v4297
        %v4986 = vsel %vm3519, %v4954, %v4299
        %v4987 = vsel %vm3519, %v4955, %v4301
        %v4988 = vsel %vm3519, %v4956, %v4303
        %v4989 = vsel %vm3519, %v4957, %v4305
        %v4990 = vsel %vm3519, %v4958, %v4307
        %v4991 = vsel %vm3519, %v4959, %v4309
        %v4992 = vsel %vm3519, %v4960, %v4311
        %v4993 = vsel %vm3519, %v4961, %v4313
        %v4994 = vsel %vm3519, %v4962, %v4315
        %v4995 = vsel %vm3519, %v4963, %v4317
        %v4996 = vsel %vm3519, %v4964, %v4319
        %v4997 = vsel %vm3519, %v4965, %v4321
        %v4998 = vsel %vm3519, %v4966, %v4323
        %v4999 = vsel %vm3519, %v4967, %v4325
        %v5000 = vsel %vm3519, %v4968, %v4327
        %v5001 = vsel %vm3519, %v4969, %v4329
        %v5002 = vsel %vm3552, %v4970, %v4363
        %v5003 = vsel %vm3552, %v4971, %v4365
        %v5004 = vsel %vm3552, %v4972, %v4367
        %v5005 = vsel %vm3552, %v4973, %v4369
        %v5006 = vsel %vm3552, %v4974, %v4371
        %v5007 = vsel %vm3552, %v4975, %v4373
        %v5008 = vsel %vm3552, %v4976, %v4375
        %v5009 = vsel %vm3552, %v4977, %v4377
        %v5010 = vsel %vm3552, %v4978, %v4379
        %v5011 = vsel %vm3552, %v4979, %v4381
        %v5012 = vsel %vm3552, %v4980, %v4383
        %v5013 = vsel %vm3552, %v4981, %v4385
        %v5014 = vsel %vm3552, %v4982, %v4387
        %v5015 = vsel %vm3552, %v4983, %v4389
        %v5016 = vsel %vm3552, %v4984, %v4391
        %v5017 = vsel %vm3552, %v4985, %v4393
        %v5018 = vsel %vm3552, %v4986, %v4395
        %v5019 = vsel %vm3552, %v4987, %v4397
        %v5020 = vsel %vm3552, %v4988, %v4399
        %v5021 = vsel %vm3552, %v4989, %v4401
        %v5022 = vsel %vm3552, %v4990, %v4403
        %v5023 = vsel %vm3552, %v4991, %v4405
        %v5024 = vsel %vm3552, %v4992, %v4407
        %v5025 = vsel %vm3552, %v4993, %v4409
        %v5026 = vsel %vm3552, %v4994, %v4411
        %v5027 = vsel %vm3552, %v4995, %v4413
        %v5028 = vsel %vm3552, %v4996, %v4415
        %v5029 = vsel %vm3552, %v4997, %v4417
        %v5030 = vsel %vm3552, %v4998, %v4419
        %v5031 = vsel %vm3552, %v4999, %v4421
        %v5032 = vsel %vm3552, %v5000, %v4423
        %v5033 = vsel %vm3552, %v5001, %v4425
        %v5034 = vsel %vm3585, %v5002, %v4459
        %v5035 = vsel %vm3585, %v5003, %v4461
        %v5036 = vsel %vm3585, %v5004, %v4463
        %v5037 = vsel %vm3585, %v5005, %v4465
        %v5038 = vsel %vm3585, %v5006, %v4467
        %v5039 = vsel %vm3585, %v5007, %v4469
        %v5040 = vsel %vm3585, %v5008, %v4471
        %v5041 = vsel %vm3585, %v5009, %v4473
        %v5042 = vsel %vm3585, %v5010, %v4475
        %v5043 = vsel %vm3585, %v5011, %v4477
        %v5044 = vsel %vm3585, %v5012, %v4479
        %v5045 = vsel %vm3585, %v5013, %v4481
        %v5046 = vsel %vm3585, %v5014, %v4483
        %v5047 = vsel %vm3585, %v5015, %v4485
        %v5048 = vsel %vm3585, %v5016, %v4487
        %v5049 = vsel %vm3585, %v5017, %v4489
        %v5050 = vsel %vm3585, %v5018, %v4491
        %v5051 = vsel %vm3585, %v5019, %v4493
        %v5052 = vsel %vm3585, %v5020, %v4495
        %v5053 = vsel %vm3585, %v5021, %v4497
        %v5054 = vsel %vm3585, %v5022, %v4499
        %v5055 = vsel %vm3585, %v5023, %v4501
        %v5056 = vsel %vm3585, %v5024, %v4503
        %v5057 = vsel %vm3585, %v5025, %v4505
        %v5058 = vsel %vm3585, %v5026, %v4507
        %v5059 = vsel %vm3585, %v5027, %v4509
        %v5060 = vsel %vm3585, %v5028, %v4511
        %v5061 = vsel %vm3585, %v5029, %v4513
        %v5062 = vsel %vm3585, %v5030, %v4515
        %v5063 = vsel %vm3585, %v5031, %v4517
        %v5064 = vsel %vm3585, %v5032, %v4519
        %v5065 = vsel %vm3585, %v5033, %v4521
        %v5066 = vsel %vm3618, %v5034, %v4555
        %v5067 = vsel %vm3618, %v5035, %v4557
        %v5068 = vsel %vm3618, %v5036, %v4559
        %v5069 = vsel %vm3618, %v5037, %v4561
        %v5070 = vsel %vm3618, %v5038, %v4563
        %v5071 = vsel %vm3618, %v5039, %v4565
        %v5072 = vsel %vm3618, %v5040, %v4567
        %v5073 = vsel %vm3618, %v5041, %v4569
        %v5074 = vsel %vm3618, %v5042, %v4571
        %v5075 = vsel %vm3618, %v5043, %v4573
        %v5076 = vsel %vm3618, %v5044, %v4575
        %v5077 = vsel %vm3618, %v5045, %v4577
        %v5078 = vsel %vm3618, %v5046, %v4579
        %v5079 = vsel %vm3618, %v5047, %v4581
        %v5080 = vsel %vm3618, %v5048, %v4583
        %v5081 = vsel %vm3618, %v5049, %v4585
        %v5082 = vsel %vm3618, %v5050, %v4587
        %v5083 = vsel %vm3618, %v5051, %v4589
        %v5084 = vsel %vm3618, %v5052, %v4591
        %v5085 = vsel %vm3618, %v5053, %v4593
        %v5086 = vsel %vm3618, %v5054, %v4595
        %v5087 = vsel %vm3618, %v5055, %v4597
        %v5088 = vsel %vm3618, %v5056, %v4599
        %v5089 = vsel %vm3618, %v5057, %v4601
        %v5090 = vsel %vm3618, %v5058, %v4603
        %v5091 = vsel %vm3618, %v5059, %v4605
        %v5092 = vsel %vm3618, %v5060, %v4607
        %v5093 = vsel %vm3618, %v5061, %v4609
        %v5094 = vsel %vm3618, %v5062, %v4611
        %v5095 = vsel %vm3618, %v5063, %v4613
        %v5096 = vsel %vm3618, %v5064, %v4615
        %v5097 = vsel %vm3618, %v5065, %v4617
        %v5098 = vsel %vm3651, %v5066, %v4651
        %v5099 = vsel %vm3651, %v5067, %v4653
        %v5100 = vsel %vm3651, %v5068, %v4655
        %v5101 = vsel %vm3651, %v5069, %v4657
        %v5102 = vsel %vm3651, %v5070, %v4659
        %v5103 = vsel %vm3651, %v5071, %v4661
        %v5104 = vsel %vm3651, %v5072, %v4663
        %v5105 = vsel %vm3651, %v5073, %v4665
        %v5106 = vsel %vm3651, %v5074, %v4667
        %v5107 = vsel %vm3651, %v5075, %v4669
        %v5108 = vsel %vm3651, %v5076, %v4671
        %v5109 = vsel %vm3651, %v5077, %v4673
        %v5110 = vsel %vm3651, %v5078, %v4675
        %v5111 = vsel %vm3651, %v5079, %v4677
        %v5112 = vsel %vm3651, %v5080, %v4679
        %v5113 = vsel %vm3651, %v5081, %v4681
        %v5114 = vsel %vm3651, %v5082, %v4683
        %v5115 = vsel %vm3651, %v5083, %v4685
        %v5116 = vsel %vm3651, %v5084, %v4687
        %v5117 = vsel %vm3651, %v5085, %v4689
        %v5118 = vsel %vm3651, %v5086, %v4691
        %v5119 = vsel %vm3651, %v5087, %v4693
        %v5120 = vsel %vm3651, %v5088, %v4695
        %v5121 = vsel %vm3651, %v5089, %v4697
        %v5122 = vsel %vm3651, %v5090, %v4699
        %v5123 = vsel %vm3651, %v5091, %v4701
        %v5124 = vsel %vm3651, %v5092, %v4703
        %v5125 = vsel %vm3651, %v5093, %v4705
        %v5126 = vsel %vm3651, %v5094, %v4707
        %v5127 = vsel %vm3651, %v5095, %v4709
        %v5128 = vsel %vm3651, %v5096, %v4711
        %v5129 = vsel %vm3651, %v5097, %v4713
        %v5130 = vsel %vm3684, %v5098, %v4747
        %v5131 = vsel %vm3684, %v5099, %v4749
        %v5132 = vsel %vm3684, %v5100, %v4751
        %v5133 = vsel %vm3684, %v5101, %v4753
        %v5134 = vsel %vm3684, %v5102, %v4755
        %v5135 = vsel %vm3684, %v5103, %v4757
        %v5136 = vsel %vm3684, %v5104, %v4759
        %v5137 = vsel %vm3684, %v5105, %v4761
        %v5138 = vsel %vm3684, %v5106, %v4763
        %v5139 = vsel %vm3684, %v5107, %v4765
        %v5140 = vsel %vm3684, %v5108, %v4767
        %v5141 = vsel %vm3684, %v5109, %v4769
        %v5142 = vsel %vm3684, %v5110, %v4771
        %v5143 = vsel %vm3684, %v5111, %v4773
        %v5144 = vsel %vm3684, %v5112, %v4775
        %v5145 = vsel %vm3684, %v5113, %v4777
        %v5146 = vsel %vm3684, %v5114, %v4779
        %v5147 = vsel %vm3684, %v5115, %v4781
        %v5148 = vsel %vm3684, %v5116, %v4783
        %v5149 = vsel %vm3684, %v5117, %v4785
        %v5150 = vsel %vm3684, %v5118, %v4787
        %v5151 = vsel %vm3684, %v5119, %v4789
        %v5152 = vsel %vm3684, %v5120, %v4791
        %v5153 = vsel %vm3684, %v5121, %v4793
        %v5154 = vsel %vm3684, %v5122, %v4795
        %v5155 = vsel %vm3684, %v5123, %v4797
        %v5156 = vsel %vm3684, %v5124, %v4799
        %v5157 = vsel %vm3684, %v5125, %v4801
        %v5158 = vsel %vm3684, %v5126, %v4803
        %v5159 = vsel %vm3684, %v5127, %v4805
        %v5160 = vsel %vm3684, %v5128, %v4807
        %v5161 = vsel %vm3684, %v5129, %v4809
        %v5162 = vld [vmem:[%s3] sm:$0xff]
        %v5163 = vld [vmem:[%s3 + $0x8] sm:$0xff]
        %v5164 = vld [vmem:[%s3 + $0x10] sm:$0xff]
        %v5165 = vld [vmem:[%s3 + $0x18] sm:$0xff]
        %v5166 = vld [vmem:[%s3 + $0x20] sm:$0xff]
        %v5167 = vld [vmem:[%s3 + $0x28] sm:$0xff]
        %v5168 = vld [vmem:[%s3 + $0x30] sm:$0xff]
        %v5169 = vld [vmem:[%s3 + $0x38] sm:$0xff]
        %v5170 = vld [vmem:[%s3 + $0x40] sm:$0xff]
        %v5171 = vld [vmem:[%s3 + $0x48] sm:$0xff]
        %v5172 = vld [vmem:[%s3 + $0x50] sm:$0xff]
        %v5173 = vld [vmem:[%s3 + $0x58] sm:$0xff]
        %v5174 = vld [vmem:[%s3 + $0x60] sm:$0xff]
        %v5175 = vld [vmem:[%s3 + $0x68] sm:$0xff]
        %v5176 = vld [vmem:[%s3 + $0x70] sm:$0xff]
        %v5177 = vld [vmem:[%s3 + $0x78] sm:$0xff]
        %v5178 = vld [vmem:[%s3 + $0x80] sm:$0xff]
        %v5179 = vld [vmem:[%s3 + $0x88] sm:$0xff]
        %v5180 = vld [vmem:[%s3 + $0x90] sm:$0xff]
        %v5181 = vld [vmem:[%s3 + $0x98] sm:$0xff]
        %v5182 = vld [vmem:[%s3 + $0xa0] sm:$0xff]
        %v5183 = vld [vmem:[%s3 + $0xa8] sm:$0xff]
        %v5184 = vld [vmem:[%s3 + $0xb0] sm:$0xff]
        %v5185 = vld [vmem:[%s3 + $0xb8] sm:$0xff]
        %v5186 = vld [vmem:[%s3 + $0xc0] sm:$0xff]
        %v5187 = vld [vmem:[%s3 + $0xc8] sm:$0xff]
        %v5188 = vld [vmem:[%s3 + $0xd0] sm:$0xff]
        %v5189 = vld [vmem:[%s4] sm:$0x1]
        %v5191 = vlaneseq
        %v5192 = vshrl.u32 %v5191, 7
        %v5193 = vsub.s32 0, %v5192
        %v5194 = vrot.slane %v5189, %v5193
        %v5197 = vsel %vm3717, %v5130, 0
        %v5200 = vsel %vm3717, %v5131, 0
        %v5203 = vsel %vm3717, %v5132, 0
        %v5206 = vsel %vm3717, %v5133, 0
        %v5209 = vsel %vm3717, %v5134, 0
        %v5212 = vsel %vm3717, %v5135, 0
        %v5215 = vsel %vm3717, %v5136, 0
        %v5218 = vsel %vm3717, %v5137, 0
        %v5221 = vsel %vm3717, %v5138, 0
        %v5224 = vsel %vm3717, %v5139, 0
        %v5227 = vsel %vm3717, %v5140, 0
        %v5230 = vsel %vm3717, %v5141, 0
        %v5233 = vsel %vm3717, %v5142, 0
        %v5236 = vsel %vm3717, %v5143, 0
        %v5239 = vsel %vm3717, %v5144, 0
        %v5242 = vsel %vm3717, %v5145, 0
        %v5245 = vsel %vm3717, %v5146, 0
        %v5248 = vsel %vm3717, %v5147, 0
        %v5251 = vsel %vm3717, %v5148, 0
        %v5254 = vsel %vm3717, %v5149, 0
        %v5257 = vsel %vm3717, %v5150, 0
        %v5260 = vsel %vm3717, %v5151, 0
        %v5263 = vsel %vm3717, %v5152, 0
        %v5266 = vsel %vm3717, %v5153, 0
        %v5269 = vsel %vm3717, %v5154, 0
        %v5272 = vsel %vm3717, %v5155, 0
        %v5275 = vsel %vm3717, %v5156, 0
        %v5278 = vsel %vm3717, %v5157, 0
        %v5281 = vsel %vm3717, %v5158, 0
        %v5284 = vsel %vm3717, %v5159, 0
        %v5287 = vsel %vm3717, %v5160, 0
        %v5290 = vsel %vm3717, %v5161, 0
        %5292 = vmatprep.subr.mxu0 0.0
        %5293 = vmatpush1.msra.mxu0 %v5162
        %5294 = vmatprep.subr.mxu0 0.0
        %5295 = vmatpush1.msra.mxu0 %v5163
        %5296 = vmatprep.subr.mxu0 0.0
        %5297 = vmatpush1.msra.mxu0 %v5164
        %5298 = vmatprep.subr.mxu0 0.0
        %5299 = vmatpush1.msra.mxu0 %v5165
        %5300 = vmatprep.subr.mxu0 0.0
        %5301 = vmatpush1.msra.mxu0 %v5166
        %5302 = vmatprep.subr.mxu0 0.0
        %5303 = vmatpush1.msra.mxu0 %v5167
        %5304 = vmatprep.subr.mxu0 0.0
        %5305 = vmatpush1.msra.mxu0 %v5168
        %5306 = vmatprep.subr.mxu0 0.0
        %5307 = vmatpush1.msra.mxu0 %v5169
        %5308 = vmatprep.subr.mxu0 0.0
        %5309 = vmatpush1.msra.mxu0 %v5170
        %5310 = vmatprep.subr.mxu0 0.0
        %5311 = vmatpush1.msra.mxu0 %v5171
        %5312 = vmatprep.subr.mxu0 0.0
        %5313 = vmatpush1.msra.mxu0 %v5172
        %5314 = vmatprep.subr.mxu0 0.0
        %5315 = vmatpush1.msra.mxu0 %v5173
        %5316 = vmatprep.subr.mxu0 0.0
        %5317 = vmatpush1.msra.mxu0 %v5174
        %5318 = vmatprep.subr.mxu0 0.0
        %5319 = vmatpush1.msra.mxu0 %v5175
        %5320 = vmatprep.subr.mxu0 0.0
        %5321 = vmatpush1.msra.mxu0 %v5176
        %5322 = vmatprep.subr.mxu0 0.0
        %5323 = vmatpush1.msra.mxu0 %v5177
        %5324 = vmatprep.subr.mxu0 0.0
        %5325 = vmatpush1.msra.mxu0 %v5178
        %5326 = vmatprep.subr.mxu0 0.0
        %5327 = vmatpush1.msra.mxu0 %v5179
        %5328 = vmatprep.subr.mxu0 0.0
        %5329 = vmatpush1.msra.mxu0 %v5180
        %5330 = vmatprep.subr.mxu0 0.0
        %5331 = vmatpush1.msra.mxu0 %v5181
        %5332 = vmatprep.subr.mxu0 0.0
        %5333 = vmatpush1.msra.mxu0 %v5182
        %5334 = vmatprep.subr.mxu0 0.0
        %5335 = vmatpush1.msra.mxu0 %v5183
        %5336 = vmatprep.subr.mxu0 0.0
        %5337 = vmatpush1.msra.mxu0 %v5184
        %5338 = vmatprep.subr.mxu0 0.0
        %5339 = vmatpush1.msra.mxu0 %v5185
        %5340 = vmatprep.subr.mxu0 0.0
        %5341 = vmatpush1.msra.mxu0 %v5186
        %5342 = vmatprep.subr.mxu0 0.0
        %5343 = vmatpush1.msra.mxu0 %v5187
        %5344 = vmatprep.subr.mxu0 0.0
        %5345 = vmatpush1.msra.mxu0 %v5188
        %5346 = vmatprep.subr.mxu0 0.0
        %5347 = vmatpush1.msra.mxu0 0.0
        %5348 = vmatprep.subr.mxu0 0.0
        %5349 = vmatpush1.msra.mxu0 0.0
        %5350 = vmatprep.subr.mxu0 0.0
        %5351 = vmatpush1.msra.mxu0 0.0
        %5352 = vmatprep.subr.mxu0 0.0
        %5353 = vmatpush1.msra.mxu0 0.0
        %5354 = vmatprep.subr.mxu0 0.0
        %5355 = vmatpush1.msra.mxu0 0.0
        %5356 = vmatprep.mubr.f32.mxu0 %v5197
        %5357 = vmatmul.mubr.f32.gmra.mrb[0].mxu0 %v3850
        %v5358 = vpop.f32.mrb[0].mxu0
        %v5359 = vadd.f32 %v5194, %v5358
        %v5360 = vpop.f32.mrb[0].mxu0
        %5361 = vmatprep.mubr.f32.mxu0 %v5200
        %5362 = vmatmul.mubr.f32.gmra.mrb[0].mxu0 %v3851
        %v5363 = vpop.f32.mrb[0].mxu0
        %v5364 = vadd.f32 %v5194, %v5363
        %v5365 = vpop.f32.mrb[0].mxu0
        %5366 = vmatprep.mubr.f32.mxu0 %v5203
        %5367 = vmatmul.mubr.f32.gmra.mrb[0].mxu0 %v3852
        %v5368 = vpop.f32.mrb[0].mxu0
        %v5369 = vadd.f32 %v5194, %v5368
        %v5370 = vpop.f32.mrb[0].mxu0
        %5371 = vmatprep.mubr.f32.mxu0 %v5206
        %5372 = vmatmul.mubr.f32.gmra.mrb[0].mxu0 %v3853
        %v5373 = vpop.f32.mrb[0].mxu0
        %v5374 = vadd.f32 %v5194, %v5373
        %v5375 = vpop.f32.mrb[0].mxu0
        %5376 = vmatprep.mubr.f32.mxu0 %v5209
        %5377 = vmatmul.mubr.f32.gmra.mrb[0].mxu0 %v3854
        %v5378 = vpop.f32.mrb[0].mxu0
        %v5379 = vadd.f32 %v5194, %v5378
        %v5380 = vpop.f32.mrb[0].mxu0
        %5381 = vmatprep.mubr.f32.mxu0 %v5212
        %5382 = vmatmul.mubr.f32.gmra.mrb[0].mxu0 %v3855
        %v5383 = vpop.f32.mrb[0].mxu0
        %v5384 = vadd.f32 %v5194, %v5383
        %v5385 = vpop.f32.mrb[0].mxu0
        %5386 = vmatprep.mubr.f32.mxu0 %v5215
        %5387 = vmatmul.mubr.f32.gmra.mrb[0].mxu0 %v3856
        %v5388 = vpop.f32.mrb[0].mxu0
        %v5389 = vadd.f32 %v5194, %v5388
        %v5390 = vpop.f32.mrb[0].mxu0
        %5391 = vmatprep.mubr.f32.mxu0 %v5218
        %5392 = vmatmul.mubr.f32.gmra.mrb[0].mxu0 %v3857
        %v5393 = vpop.f32.mrb[0].mxu0
        %v5394 = vadd.f32 %v5194, %v5393
        %v5395 = vpop.f32.mrb[0].mxu0
        %5396 = vmatprep.mubr.f32.mxu0 %v5221
        %5397 = vmatmul.mubr.f32.gmra.mrb[0].mxu0 %v3858
        %v5398 = vpop.f32.mrb[0].mxu0
        %v5399 = vadd.f32 %v5194, %v5398
        %v5400 = vpop.f32.mrb[0].mxu0
        %5401 = vmatprep.mubr.f32.mxu0 %v5224
        %5402 = vmatmul.mubr.f32.gmra.mrb[0].mxu0 %v3859
        %v5403 = vpop.f32.mrb[0].mxu0
        %v5404 = vadd.f32 %v5194, %v5403
        %v5405 = vpop.f32.mrb[0].mxu0
        %5406 = vmatprep.mubr.f32.mxu0 %v5227
        %5407 = vmatmul.mubr.f32.gmra.mrb[0].mxu0 %v3860
        %v5408 = vpop.f32.mrb[0].mxu0
        %v5409 = vadd.f32 %v5194, %v5408
        %v5410 = vpop.f32.mrb[0].mxu0
        %5411 = vmatprep.mubr.f32.mxu0 %v5230
        %5412 = vmatmul.mubr.f32.gmra.mrb[0].mxu0 %v3861
        %v5413 = vpop.f32.mrb[0].mxu0
        %v5414 = vadd.f32 %v5194, %v5413
        %v5415 = vpop.f32.mrb[0].mxu0
        %5416 = vmatprep.mubr.f32.mxu0 %v5233
        %5417 = vmatmul.mubr.f32.gmra.mrb[0].mxu0 %v3862
        %v5418 = vpop.f32.mrb[0].mxu0
        %v5419 = vadd.f32 %v5194, %v5418
        %v5420 = vpop.f32.mrb[0].mxu0
        %5421 = vmatprep.mubr.f32.mxu0 %v5236
        %5422 = vmatmul.mubr.f32.gmra.mrb[0].mxu0 %v3863
        %v5423 = vpop.f32.mrb[0].mxu0
        %v5424 = vadd.f32 %v5194, %v5423
        %v5425 = vpop.f32.mrb[0].mxu0
        %5426 = vmatprep.mubr.f32.mxu0 %v5239
        %5427 = vmatmul.mubr.f32.gmra.mrb[0].mxu0 %v3864
        %v5428 = vpop.f32.mrb[0].mxu0
        %v5429 = vadd.f32 %v5194, %v5428
        %v5430 = vpop.f32.mrb[0].mxu0
        %5431 = vmatprep.mubr.f32.mxu0 %v5242
        %5432 = vmatmul.mubr.f32.gmra.mrb[0].mxu0 %v3865
        %v5433 = vpop.f32.mrb[0].mxu0
        %v5434 = vadd.f32 %v5194, %v5433
        %v5435 = vpop.f32.mrb[0].mxu0
        %5436 = vmatprep.mubr.f32.mxu0 %v5245
        %5437 = vmatmul.mubr.f32.gmra.mrb[0].mxu0 %v3866
        %v5438 = vpop.f32.mrb[0].mxu0
        %v5439 = vadd.f32 %v5194, %v5438
        %v5440 = vpop.f32.mrb[0].mxu0
        %5441 = vmatprep.mubr.f32.mxu0 %v5248
        %5442 = vmatmul.mubr.f32.gmra.mrb[0].mxu0 %v3867
        %v5443 = vpop.f32.mrb[0].mxu0
        %v5444 = vadd.f32 %v5194, %v5443
        %v5445 = vpop.f32.mrb[0].mxu0
        %5446 = vmatprep.mubr.f32.mxu0 %v5251
        %5447 = vmatmul.mubr.f32.gmra.mrb[0].mxu0 %v3868
        %v5448 = vpop.f32.mrb[0].mxu0
        %v5449 = vadd.f32 %v5194, %v5448
        %v5450 = vpop.f32.mrb[0].mxu0
        %5451 = vmatprep.mubr.f32.mxu0 %v5254
        %5452 = vmatmul.mubr.f32.gmra.mrb[0].mxu0 %v3869
        %v5453 = vpop.f32.mrb[0].mxu0
        %v5454 = vadd.f32 %v5194, %v5453
        %v5455 = vpop.f32.mrb[0].mxu0
        %5456 = vmatprep.mubr.f32.mxu0 %v5257
        %5457 = vmatmul.mubr.f32.gmra.mrb[0].mxu0 %v3870
        %v5458 = vpop.f32.mrb[0].mxu0
        %v5459 = vadd.f32 %v5194, %v5458
        %v5460 = vpop.f32.mrb[0].mxu0
        %5461 = vmatprep.mubr.f32.mxu0 %v5260
        %5462 = vmatmul.mubr.f32.gmra.mrb[0].mxu0 %v3871
        %v5463 = vpop.f32.mrb[0].mxu0
        %v5464 = vadd.f32 %v5194, %v5463
        %v5465 = vpop.f32.mrb[0].mxu0
        %5466 = vmatprep.mubr.f32.mxu0 %v5263
        %5467 = vmatmul.mubr.f32.gmra.mrb[0].mxu0 %v3872
        %v5468 = vpop.f32.mrb[0].mxu0
        %v5469 = vadd.f32 %v5194, %v5468
        %v5470 = vpop.f32.mrb[0].mxu0
        %5471 = vmatprep.mubr.f32.mxu0 %v5266
        %5472 = vmatmul.mubr.f32.gmra.mrb[0].mxu0 %v3873
        %v5473 = vpop.f32.mrb[0].mxu0
        %v5474 = vadd.f32 %v5194, %v5473
        %v5475 = vpop.f32.mrb[0].mxu0
        %5476 = vmatprep.mubr.f32.mxu0 %v5269
        %5477 = vmatmul.mubr.f32.gmra.mrb[0].mxu0 %v3874
        %v5478 = vpop.f32.mrb[0].mxu0
        %v5479 = vadd.f32 %v5194, %v5478
        %v5480 = vpop.f32.mrb[0].mxu0
        %5481 = vmatprep.mubr.f32.mxu0 %v5272
        %5482 = vmatmul.mubr.f32.gmra.mrb[0].mxu0 %v3875
        %v5483 = vpop.f32.mrb[0].mxu0
        %v5484 = vadd.f32 %v5194, %v5483
        %v5485 = vpop.f32.mrb[0].mxu0
        %5486 = vmatprep.mubr.f32.mxu0 %v5275
        %5487 = vmatmul.mubr.f32.gmra.mrb[0].mxu0 %v3876
        %v5488 = vpop.f32.mrb[0].mxu0
        %v5489 = vadd.f32 %v5194, %v5488
        %v5490 = vpop.f32.mrb[0].mxu0
        %5491 = vmatprep.mubr.f32.mxu0 %v5278
        %5492 = vmatmul.mubr.f32.gmra.mrb[0].mxu0 %v3877
        %v5493 = vpop.f32.mrb[0].mxu0
        %v5494 = vadd.f32 %v5194, %v5493
        %v5495 = vpop.f32.mrb[0].mxu0
        %5496 = vmatprep.mubr.f32.mxu0 %v5281
        %5497 = vmatmul.mubr.f32.gmra.mrb[0].mxu0 %v3878
        %v5498 = vpop.f32.mrb[0].mxu0
        %v5499 = vadd.f32 %v5194, %v5498
        %v5500 = vpop.f32.mrb[0].mxu0
        %5501 = vmatprep.mubr.f32.mxu0 %v5284
        %5502 = vmatmul.mubr.f32.gmra.mrb[0].mxu0 %v3879
        %v5503 = vpop.f32.mrb[0].mxu0
        %v5504 = vadd.f32 %v5194, %v5503
        %v5505 = vpop.f32.mrb[0].mxu0
        %5506 = vmatprep.mubr.f32.mxu0 %v5287
        %5507 = vmatmul.mubr.f32.gmra.mrb[0].mxu0 %v3880
        %v5508 = vpop.f32.mrb[0].mxu0
        %v5509 = vadd.f32 %v5194, %v5508
        %v5510 = vpop.f32.mrb[0].mxu0
        %5511 = vmatprep.mubr.f32.mxu0 %v5290
        %5512 = vmatmul.mubr.f32.gmra.mrb[0].mxu0 %v3881
        %v5513 = vpop.f32.mrb[0].mxu0
        %v5514 = vadd.f32 %v5194, %v5513
        %v5515 = vpop.f32.mrb[0].mxu0
        %5516 = vdwg.mxu0
        %v5517 = vmax.f32 %v5359, 0.0
        %v5518 = vmax.f32 %v5364, 0.0
        %v5519 = vmax.f32 %v5369, 0.0
        %v5520 = vmax.f32 %v5374, 0.0
        %v5521 = vmax.f32 %v5379, 0.0
        %v5522 = vmax.f32 %v5384, 0.0
        %v5523 = vmax.f32 %v5389, 0.0
        %v5524 = vmax.f32 %v5394, 0.0
        %v5525 = vmax.f32 %v5399, 0.0
        %v5526 = vmax.f32 %v5404, 0.0
        %v5527 = vmax.f32 %v5409, 0.0
        %v5528 = vmax.f32 %v5414, 0.0
        %v5529 = vmax.f32 %v5419, 0.0
        %v5530 = vmax.f32 %v5424, 0.0
        %v5531 = vmax.f32 %v5429, 0.0
        %v5532 = vmax.f32 %v5434, 0.0
        %v5533 = vmax.f32 %v5439, 0.0
        %v5534 = vmax.f32 %v5444, 0.0
        %v5535 = vmax.f32 %v5449, 0.0
        %v5536 = vmax.f32 %v5454, 0.0
        %v5537 = vmax.f32 %v5459, 0.0
        %v5538 = vmax.f32 %v5464, 0.0
        %v5539 = vmax.f32 %v5469, 0.0
        %v5540 = vmax.f32 %v5474, 0.0
        %v5541 = vmax.f32 %v5479, 0.0
        %v5542 = vmax.f32 %v5484, 0.0
        %v5543 = vmax.f32 %v5489, 0.0
        %v5544 = vmax.f32 %v5494, 0.0
        %v5545 = vmax.f32 %v5499, 0.0
        %v5546 = vmax.f32 %v5504, 0.0
        %v5547 = vmax.f32 %v5509, 0.0
        %v5548 = vmax.f32 %v5514, 0.0
        %v5549 = vld [vmem:[%s5] sm:$0xff]
        %v5550 = vld [vmem:[%s6] sm:$0x1]
        %v5552 = vlaneseq
        %v5553 = vshrl.u32 %v5552, 7
        %v5554 = vsub.s32 0, %v5553
        %v5555 = vrot.slane %v5550, %v5554
        %v5558 = vsel %vm980, %v5517, 0
        %v5561 = vsel %vm980, %v5518, 0
        %v5564 = vsel %vm980, %v5519, 0
        %v5567 = vsel %vm980, %v5520, 0
        %v5570 = vsel %vm980, %v5521, 0
        %v5573 = vsel %vm980, %v5522, 0
        %v5576 = vsel %vm980, %v5523, 0
        %v5579 = vsel %vm980, %v5524, 0
        %v5582 = vsel %vm980, %v5525, 0
        %v5585 = vsel %vm980, %v5526, 0
        %v5588 = vsel %vm980, %v5527, 0
        %v5591 = vsel %vm980, %v5528, 0
        %v5594 = vsel %vm980, %v5529, 0
        %v5597 = vsel %vm980, %v5530, 0
        %v5600 = vsel %vm980, %v5531, 0
        %v5603 = vsel %vm980, %v5532, 0
        %v5606 = vsel %vm980, %v5533, 0
        %v5609 = vsel %vm980, %v5534, 0
        %v5612 = vsel %vm980, %v5535, 0
        %v5615 = vsel %vm980, %v5536, 0
        %v5618 = vsel %vm980, %v5537, 0
        %v5621 = vsel %vm980, %v5538, 0
        %v5624 = vsel %vm980, %v5539, 0
        %v5627 = vsel %vm980, %v5540, 0
        %v5630 = vsel %vm980, %v5541, 0
        %v5633 = vsel %vm980, %v5542, 0
        %v5636 = vsel %vm980, %v5543, 0
        %v5639 = vsel %vm980, %v5544, 0
        %v5642 = vsel %vm980, %v5545, 0
        %v5645 = vsel %vm980, %v5546, 0
        %v5648 = vsel %vm980, %v5547, 0
        %v5651 = vsel %vm980, %v5548, 0
        %5653 = vmatprep.subr.mxu0 0.0
        %5654 = vmatpush1.msra.mxu0 %v5549
        %5655 = vmatprep.subr.mxu0 0.0
        %5656 = vmatpush1.msra.mxu0 0.0
        %5657 = vmatprep.subr.mxu0 0.0
        %5658 = vmatpush1.msra.mxu0 0.0
        %5659 = vmatprep.subr.mxu0 0.0
        %5660 = vmatpush1.msra.mxu0 0.0
        %5661 = vmatprep.subr.mxu0 0.0
        %5662 = vmatpush1.msra.mxu0 0.0
        %5663 = vmatprep.subr.mxu0 0.0
        %5664 = vmatpush1.msra.mxu0 0.0
        %5665 = vmatprep.subr.mxu0 0.0
        %5666 = vmatpush1.msra.mxu0 0.0
        %5667 = vmatprep.subr.mxu0 0.0
        %5668 = vmatpush1.msra.mxu0 0.0
        %5669 = vmatprep.subr.mxu0 0.0
        %5670 = vmatpush1.msra.mxu0 0.0
        %5671 = vmatprep.subr.mxu0 0.0
        %5672 = vmatpush1.msra.mxu0 0.0
        %5673 = vmatprep.subr.mxu0 0.0
        %5674 = vmatpush1.msra.mxu0 0.0
        %5675 = vmatprep.subr.mxu0 0.0
        %5676 = vmatpush1.msra.mxu0 0.0
        %5677 = vmatprep.subr.mxu0 0.0
        %5678 = vmatpush1.msra.mxu0 0.0
        %5679 = vmatprep.subr.mxu0 0.0
        %5680 = vmatpush1.msra.mxu0 0.0
        %5681 = vmatprep.subr.mxu0 0.0
        %5682 = vmatpush1.msra.mxu0 0.0
        %5683 = vmatprep.subr.mxu0 0.0
        %5684 = vmatpush1.msra.mxu0 0.0
        %5685 = vmatprep.subr.mxu0 0.0
        %5686 = vmatpush1.msra.mxu0 0.0
        %5687 = vmatprep.subr.mxu0 0.0
        %5688 = vmatpush1.msra.mxu0 0.0
        %5689 = vmatprep.subr.mxu0 0.0
        %5690 = vmatpush1.msra.mxu0 0.0
        %5691 = vmatprep.subr.mxu0 0.0
        %5692 = vmatpush1.msra.mxu0 0.0
        %5693 = vmatprep.subr.mxu0 0.0
        %5694 = vmatpush1.msra.mxu0 0.0
        %5695 = vmatprep.subr.mxu0 0.0
        %5696 = vmatpush1.msra.mxu0 0.0
        %5697 = vmatprep.subr.mxu0 0.0
        %5698 = vmatpush1.msra.mxu0 0.0
        %5699 = vmatprep.subr.mxu0 0.0
        %5700 = vmatpush1.msra.mxu0 0.0
        %5701 = vmatprep.subr.mxu0 0.0
        %5702 = vmatpush1.msra.mxu0 0.0
        %5703 = vmatprep.subr.mxu0 0.0
        %5704 = vmatpush1.msra.mxu0 0.0
        %5705 = vmatprep.subr.mxu0 0.0
        %5706 = vmatpush1.msra.mxu0 0.0
        %5707 = vmatprep.subr.mxu0 0.0
        %5708 = vmatpush1.msra.mxu0 0.0
        %5709 = vmatprep.subr.mxu0 0.0
        %5710 = vmatpush1.msra.mxu0 0.0
        %5711 = vmatprep.subr.mxu0 0.0
        %5712 = vmatpush1.msra.mxu0 0.0
        %5713 = vmatprep.subr.mxu0 0.0
        %5714 = vmatpush1.msra.mxu0 0.0
        %5715 = vmatprep.subr.mxu0 0.0
        %5716 = vmatpush1.msra.mxu0 0.0
        %5717 = vmatprep.mubr.f32.mxu0 0.0
        %5718 = vmatmul.mubr.f32.gmra.mrb[0].mxu0 %v5558
        %v5719 = vpop.f32.mrb[0].mxu0
        %v5720 = vadd.f32 %v5555, %v5719
        %v5721 = vpop.f32.mrb[0].mxu0
        %5722 = vmatprep.mubr.f32.mxu0 0.0
        %5723 = vmatmul.mubr.f32.gmra.mrb[0].mxu0 %v5561
        %v5724 = vpop.f32.mrb[0].mxu0
        %v5725 = vadd.f32 %v5555, %v5724
        %v5726 = vpop.f32.mrb[0].mxu0
        %5727 = vmatprep.mubr.f32.mxu0 0.0
        %5728 = vmatmul.mubr.f32.gmra.mrb[0].mxu0 %v5564
        %v5729 = vpop.f32.mrb[0].mxu0
        %v5730 = vadd.f32 %v5555, %v5729
        %v5731 = vpop.f32.mrb[0].mxu0
        %5732 = vmatprep.mubr.f32.mxu0 0.0
        %5733 = vmatmul.mubr.f32.gmra.mrb[0].mxu0 %v5567
        %v5734 = vpop.f32.mrb[0].mxu0
        %v5735 = vadd.f32 %v5555, %v5734
        %v5736 = vpop.f32.mrb[0].mxu0
        %5737 = vmatprep.mubr.f32.mxu0 0.0
        %5738 = vmatmul.mubr.f32.gmra.mrb[0].mxu0 %v5570
        %v5739 = vpop.f32.mrb[0].mxu0
        %v5740 = vadd.f32 %v5555, %v5739
        %v5741 = vpop.f32.mrb[0].mxu0
        %5742 = vmatprep.mubr.f32.mxu0 0.0
        %5743 = vmatmul.mubr.f32.gmra.mrb[0].mxu0 %v5573
        %v5744 = vpop.f32.mrb[0].mxu0
        %v5745 = vadd.f32 %v5555, %v5744
        %v5746 = vpop.f32.mrb[0].mxu0
        %5747 = vmatprep.mubr.f32.mxu0 0.0
        %5748 = vmatmul.mubr.f32.gmra.mrb[0].mxu0 %v5576
        %v5749 = vpop.f32.mrb[0].mxu0
        %v5750 = vadd.f32 %v5555, %v5749
        %v5751 = vpop.f32.mrb[0].mxu0
        %5752 = vmatprep.mubr.f32.mxu0 0.0
        %5753 = vmatmul.mubr.f32.gmra.mrb[0].mxu0 %v5579
        %v5754 = vpop.f32.mrb[0].mxu0
        %v5755 = vadd.f32 %v5555, %v5754
        %v5756 = vpop.f32.mrb[0].mxu0
        %5757 = vmatprep.mubr.f32.mxu0 0.0
        %5758 = vmatmul.mubr.f32.gmra.mrb[0].mxu0 %v5582
        %v5759 = vpop.f32.mrb[0].mxu0
        %v5760 = vadd.f32 %v5555, %v5759
        %v5761 = vpop.f32.mrb[0].mxu0
        %5762 = vmatprep.mubr.f32.mxu0 0.0
        %5763 = vmatmul.mubr.f32.gmra.mrb[0].mxu0 %v5585
        %v5764 = vpop.f32.mrb[0].mxu0
        %v5765 = vadd.f32 %v5555, %v5764
        %v5766 = vpop.f32.mrb[0].mxu0
        %5767 = vmatprep.mubr.f32.mxu0 0.0
        %5768 = vmatmul.mubr.f32.gmra.mrb[0].mxu0 %v5588
        %v5769 = vpop.f32.mrb[0].mxu0
        %v5770 = vadd.f32 %v5555, %v5769
        %v5771 = vpop.f32.mrb[0].mxu0
        %5772 = vmatprep.mubr.f32.mxu0 0.0
        %5773 = vmatmul.mubr.f32.gmra.mrb[0].mxu0 %v5591
        %v5774 = vpop.f32.mrb[0].mxu0
        %v5775 = vadd.f32 %v5555, %v5774
        %v5776 = vpop.f32.mrb[0].mxu0
        %5777 = vmatprep.mubr.f32.mxu0 0.0
        %5778 = vmatmul.mubr.f32.gmra.mrb[0].mxu0 %v5594
        %v5779 = vpop.f32.mrb[0].mxu0
        %v5780 = vadd.f32 %v5555, %v5779
        %v5781 = vpop.f32.mrb[0].mxu0
        %5782 = vmatprep.mubr.f32.mxu0 0.0
        %5783 = vmatmul.mubr.f32.gmra.mrb[0].mxu0 %v5597
        %v5784 = vpop.f32.mrb[0].mxu0
        %v5785 = vadd.f32 %v5555, %v5784
        %v5786 = vpop.f32.mrb[0].mxu0
        %5787 = vmatprep.mubr.f32.mxu0 0.0
        %5788 = vmatmul.mubr.f32.gmra.mrb[0].mxu0 %v5600
        %v5789 = vpop.f32.mrb[0].mxu0
        %v5790 = vadd.f32 %v5555, %v5789
        %v5791 = vpop.f32.mrb[0].mxu0
        %5792 = vmatprep.mubr.f32.mxu0 0.0
        %5793 = vmatmul.mubr.f32.gmra.mrb[0].mxu0 %v5603
        %v5794 = vpop.f32.mrb[0].mxu0
        %v5795 = vadd.f32 %v5555, %v5794
        %v5796 = vpop.f32.mrb[0].mxu0
        %5797 = vmatprep.mubr.f32.mxu0 0.0
        %5798 = vmatmul.mubr.f32.gmra.mrb[0].mxu0 %v5606
        %v5799 = vpop.f32.mrb[0].mxu0
        %v5800 = vadd.f32 %v5555, %v5799
        %v5801 = vpop.f32.mrb[0].mxu0
        %5802 = vmatprep.mubr.f32.mxu0 0.0
        %5803 = vmatmul.mubr.f32.gmra.mrb[0].mxu0 %v5609
        %v5804 = vpop.f32.mrb[0].mxu0
        %v5805 = vadd.f32 %v5555, %v5804
        %v5806 = vpop.f32.mrb[0].mxu0
        %5807 = vmatprep.mubr.f32.mxu0 0.0
        %5808 = vmatmul.mubr.f32.gmra.mrb[0].mxu0 %v5612
        %v5809 = vpop.f32.mrb[0].mxu0
        %v5810 = vadd.f32 %v5555, %v5809
        %v5811 = vpop.f32.mrb[0].mxu0
        %5812 = vmatprep.mubr.f32.mxu0 0.0
        %5813 = vmatmul.mubr.f32.gmra.mrb[0].mxu0 %v5615
        %v5814 = vpop.f32.mrb[0].mxu0
        %v5815 = vadd.f32 %v5555, %v5814
        %v5816 = vpop.f32.mrb[0].mxu0
        %5817 = vmatprep.mubr.f32.mxu0 0.0
        %5818 = vmatmul.mubr.f32.gmra.mrb[0].mxu0 %v5618
        %v5819 = vpop.f32.mrb[0].mxu0
        %v5820 = vadd.f32 %v5555, %v5819
        %v5821 = vpop.f32.mrb[0].mxu0
        %5822 = vmatprep.mubr.f32.mxu0 0.0
        %5823 = vmatmul.mubr.f32.gmra.mrb[0].mxu0 %v5621
        %v5824 = vpop.f32.mrb[0].mxu0
        %v5825 = vadd.f32 %v5555, %v5824
        %v5826 = vpop.f32.mrb[0].mxu0
        %5827 = vmatprep.mubr.f32.mxu0 0.0
        %5828 = vmatmul.mubr.f32.gmra.mrb[0].mxu0 %v5624
        %v5829 = vpop.f32.mrb[0].mxu0
        %v5830 = vadd.f32 %v5555, %v5829
        %v5831 = vpop.f32.mrb[0].mxu0
        %5832 = vmatprep.mubr.f32.mxu0 0.0
        %5833 = vmatmul.mubr.f32.gmra.mrb[0].mxu0 %v5627
        %v5834 = vpop.f32.mrb[0].mxu0
        %v5835 = vadd.f32 %v5555, %v5834
        %v5836 = vpop.f32.mrb[0].mxu0
        %5837 = vmatprep.mubr.f32.mxu0 0.0
        %5838 = vmatmul.mubr.f32.gmra.mrb[0].mxu0 %v5630
        %v5839 = vpop.f32.mrb[0].mxu0
        %v5840 = vadd.f32 %v5555, %v5839
        %v5841 = vpop.f32.mrb[0].mxu0
        %5842 = vmatprep.mubr.f32.mxu0 0.0
        %5843 = vmatmul.mubr.f32.gmra.mrb[0].mxu0 %v5633
        %v5844 = vpop.f32.mrb[0].mxu0
        %v5845 = vadd.f32 %v5555, %v5844
        %v5846 = vpop.f32.mrb[0].mxu0
        %5847 = vmatprep.mubr.f32.mxu0 0.0
        %5848 = vmatmul.mubr.f32.gmra.mrb[0].mxu0 %v5636
        %v5849 = vpop.f32.mrb[0].mxu0
        %v5850 = vadd.f32 %v5555, %v5849
        %v5851 = vpop.f32.mrb[0].mxu0
        %5852 = vmatprep.mubr.f32.mxu0 0.0
        %5853 = vmatmul.mubr.f32.gmra.mrb[0].mxu0 %v5639
        %v5854 = vpop.f32.mrb[0].mxu0
        %v5855 = vadd.f32 %v5555, %v5854
        %v5856 = vpop.f32.mrb[0].mxu0
        %5857 = vmatprep.mubr.f32.mxu0 0.0
        %5858 = vmatmul.mubr.f32.gmra.mrb[0].mxu0 %v5642
        %v5859 = vpop.f32.mrb[0].mxu0
        %v5860 = vadd.f32 %v5555, %v5859
        %v5861 = vpop.f32.mrb[0].mxu0
        %5862 = vmatprep.mubr.f32.mxu0 0.0
        %5863 = vmatmul.mubr.f32.gmra.mrb[0].mxu0 %v5645
        %v5864 = vpop.f32.mrb[0].mxu0
        %v5865 = vadd.f32 %v5555, %v5864
        %v5866 = vpop.f32.mrb[0].mxu0
        %5867 = vmatprep.mubr.f32.mxu0 0.0
        %5868 = vmatmul.mubr.f32.gmra.mrb[0].mxu0 %v5648
        %v5869 = vpop.f32.mrb[0].mxu0
        %v5870 = vadd.f32 %v5555, %v5869
        %v5871 = vpop.f32.mrb[0].mxu0
        %5872 = vmatprep.mubr.f32.mxu0 0.0
        %5873 = vmatmul.mubr.f32.gmra.mrb[0].mxu0 %v5651
        %v5874 = vpop.f32.mrb[0].mxu0
        %v5875 = vadd.f32 %v5555, %v5874
        %v5876 = vpop.f32.mrb[0].mxu0
        %5877 = vdwg.mxu0
        %v5878 = vadd.f32 %v5720, %v556
        %v5879 = vadd.f32 %v5725, %v561
        %v5880 = vadd.f32 %v5730, %v566
        %v5881 = vadd.f32 %v5735, %v571
        %v5882 = vadd.f32 %v5740, %v576
        %v5883 = vadd.f32 %v5745, %v581
        %v5884 = vadd.f32 %v5750, %v586
        %v5885 = vadd.f32 %v5755, %v591
        %v5886 = vadd.f32 %v5760, %v596
        %v5887 = vadd.f32 %v5765, %v601
        %v5888 = vadd.f32 %v5770, %v606
        %v5889 = vadd.f32 %v5775, %v611
        %v5890 = vadd.f32 %v5780, %v616
        %v5891 = vadd.f32 %v5785, %v621
        %v5892 = vadd.f32 %v5790, %v626
        %v5893 = vadd.f32 %v5795, %v631
        %v5894 = vadd.f32 %v5800, %v636
        %v5895 = vadd.f32 %v5805, %v641
        %v5896 = vadd.f32 %v5810, %v646
        %v5897 = vadd.f32 %v5815, %v651
        %v5898 = vadd.f32 %v5820, %v656
        %v5899 = vadd.f32 %v5825, %v661
        %v5900 = vadd.f32 %v5830, %v666
        %v5901 = vadd.f32 %v5835, %v671
        %v5902 = vadd.f32 %v5840, %v676
        %v5903 = vadd.f32 %v5845, %v681
        %v5904 = vadd.f32 %v5850, %v686
        %v5905 = vadd.f32 %v5855, %v691
        %v5906 = vadd.f32 %v5860, %v696
        %v5907 = vadd.f32 %v5865, %v701
        %v5908 = vadd.f32 %v5870, %v706
        %v5909 = vadd.f32 %v5875, %v711
        %v5910 = vmax.f32 %v5878, 0.0
        %v5911 = vmax.f32 %v5879, 0.0
        %v5912 = vmax.f32 %v5880, 0.0
        %v5913 = vmax.f32 %v5881, 0.0
        %v5914 = vmax.f32 %v5882, 0.0
        %v5915 = vmax.f32 %v5883, 0.0
        %v5916 = vmax.f32 %v5884, 0.0
        %v5917 = vmax.f32 %v5885, 0.0
        %v5918 = vmax.f32 %v5886, 0.0
        %v5919 = vmax.f32 %v5887, 0.0
        %v5920 = vmax.f32 %v5888, 0.0
        %v5921 = vmax.f32 %v5889, 0.0
        %v5922 = vmax.f32 %v5890, 0.0
        %v5923 = vmax.f32 %v5891, 0.0
        %v5924 = vmax.f32 %v5892, 0.0
        %v5925 = vmax.f32 %v5893, 0.0
        %v5926 = vmax.f32 %v5894, 0.0
        %v5927 = vmax.f32 %v5895, 0.0
        %v5928 = vmax.f32 %v5896, 0.0
        %v5929 = vmax.f32 %v5897, 0.0
        %v5930 = vmax.f32 %v5898, 0.0
        %v5931 = vmax.f32 %v5899, 0.0
        %v5932 = vmax.f32 %v5900, 0.0
        %v5933 = vmax.f32 %v5901, 0.0
        %v5934 = vmax.f32 %v5902, 0.0
        %v5935 = vmax.f32 %v5903, 0.0
        %v5936 = vmax.f32 %v5904, 0.0
        %v5937 = vmax.f32 %v5905, 0.0
        %v5938 = vmax.f32 %v5906, 0.0
        %v5939 = vmax.f32 %v5907, 0.0
        %v5940 = vmax.f32 %v5908, 0.0
        %v5941 = vmax.f32 %v5909, 0.0
        %5942 = vst.msk [vmem:[%s350] sm:$0xff] %vm3486, %v5910
        %5943 = vst.msk [vmem:[%s350 + $0x8] sm:$0xff] %vm3486, %v5911
        %5944 = vst.msk [vmem:[%s350 + $0x10] sm:$0xff] %vm3486, %v5912
        %5945 = vst.msk [vmem:[%s350 + $0x18] sm:$0xff] %vm3486, %v5913
        %5946 = vst.msk [vmem:[%s350 + $0x20] sm:$0xff] %vm3486, %v5914
        %5947 = vst.msk [vmem:[%s350 + $0x28] sm:$0xff] %vm3486, %v5915
        %5948 = vst.msk [vmem:[%s350 + $0x30] sm:$0xff] %vm3486, %v5916
        %5949 = vst.msk [vmem:[%s350 + $0x38] sm:$0xff] %vm3486, %v5917
        %5950 = vst.msk [vmem:[%s350 + $0x40] sm:$0xff] %vm3486, %v5918
        %5951 = vst.msk [vmem:[%s350 + $0x48] sm:$0xff] %vm3486, %v5919
        %5952 = vst.msk [vmem:[%s350 + $0x50] sm:$0xff] %vm3486, %v5920
        %5953 = vst.msk [vmem:[%s350 + $0x58] sm:$0xff] %vm3486, %v5921
        %5954 = vst.msk [vmem:[%s350 + $0x60] sm:$0xff] %vm3486, %v5922
        %5955 = vst.msk [vmem:[%s350 + $0x68] sm:$0xff] %vm3486, %v5923
        %5956 = vst.msk [vmem:[%s350 + $0x70] sm:$0xff] %vm3486, %v5924
        %5957 = vst.msk [vmem:[%s350 + $0x78] sm:$0xff] %vm3486, %v5925
        %5958 = vst.msk [vmem:[%s350 + $0x80] sm:$0xff] %vm3486, %v5926
        %5959 = vst.msk [vmem:[%s350 + $0x88] sm:$0xff] %vm3486, %v5927
        %5960 = vst.msk [vmem:[%s350 + $0x90] sm:$0xff] %vm3486, %v5928
        %5961 = vst.msk [vmem:[%s350 + $0x98] sm:$0xff] %vm3486, %v5929
        %5962 = vst.msk [vmem:[%s350 + $0xa0] sm:$0xff] %vm3486, %v5930
        %5963 = vst.msk [vmem:[%s350 + $0xa8] sm:$0xff] %vm3486, %v5931
        %5964 = vst.msk [vmem:[%s350 + $0xb0] sm:$0xff] %vm3486, %v5932
        %5965 = vst.msk [vmem:[%s350 + $0xb8] sm:$0xff] %vm3486, %v5933
        %5966 = vst.msk [vmem:[%s350 + $0xc0] sm:$0xff] %vm3486, %v5934
        %5967 = vst.msk [vmem:[%s350 + $0xc8] sm:$0xff] %vm3486, %v5935
        %5968 = vst.msk [vmem:[%s350 + $0xd0] sm:$0xff] %vm3486, %v5936
        %5969 = vst.msk [vmem:[%s350 + $0xd8] sm:$0xff] %vm3486, %v5937
        %5970 = vst.msk [vmem:[%s350 + $0xe0] sm:$0xff] %vm3486, %v5938
        %5971 = vst.msk [vmem:[%s350 + $0xe8] sm:$0xff] %vm3486, %v5939
        %5972 = vst.msk [vmem:[%s350 + $0xf0] sm:$0xff] %vm3486, %v5940
        %5973 = vst.msk [vmem:[%s350 + $0xf8] sm:$0xff] %vm3486, %v5941
        %s5974 = sand.u32 %s228, 1
        %s5975 = scalar_lea.sflag [#allocation5], %s5974
        %s5976 = sand.u32 %s228, 1
        %s5977 = smul.addr %s5976, 256
        %s5978 = scalar_lea.vmem [#allocation6], %s5977
        // Predicated region
        $region61: #{bottleneck_forward.1} parent=55 // pred_check
          %p5979 = pneg %p238
        $region62: #{bottleneck_forward.1} parent=55 // pred_check_branch
          %5981 = sbr.rel (%p5979) target = $region64
        $region63: #{bottleneck_forward.1} parent=55 // pred_region
          %s5983 = ssub.s32 4096, 4096
          %5984 = vsyncadd %s5975, %s5983
          %s5985 = smul.addr %s26, 32
          %s5986 = smul.addr %s5985, 128
          %s5987 = scalar_lea.hbm %s9, %s5986
          %s5988 = sshll.u32 %s5978, 4
          %s5989 = int_to_ptr.vmem [resolvable:$true] %s5988
          %5994 = dma.vmem_to_hbm [thread:$0]  %s5989, 4096, %s5987, %s5975, 128, 128, 8
        $region64: #{bottleneck_forward.1} parent=55 // pred_fallthru
          _
      $region56: #{bottleneck_forward.1} parent=5 // pred_fallthru
        _
      %p5995 = scmp.le.s32.totalorder 2, %s21
      // Predicated region
      $region65: #{bottleneck_forward.1} parent=5 // pred_check
        %p5996 = pneg %p5995
      $region66: #{bottleneck_forward.1} parent=5 // pred_check_branch
        %5998 = sbr.rel (%p5996) target = $region68
      $region67: #{bottleneck_forward.1} parent=5 // pred_region
        %s5999 = ssub.s32 %s21, 2
        // Predicated region
        $region69: #{bottleneck_forward.1} parent=67 // pred_check
          %p6000 = pneg %p244
        $region70: #{bottleneck_forward.1} parent=67 // pred_check_branch
          %6002 = sbr.rel (%p6000) target = $region72
        $region71: #{bottleneck_forward.1} parent=67 // pred_region
          %s6003 = sand.u32 %s229, 1
          %s6004 = scalar_lea.sflag [#allocation5], %s6003
          %s6005 = sand.u32 %s229, 1
          %s6006 = smul.addr %s6005, 256
          %s6007 = scalar_lea.vmem [#allocation6], %s6006
          %6008 = dma.done %s6004, 4096
        $region72: #{bottleneck_forward.1} parent=67 // pred_fallthru
          _
      $region68: #{bottleneck_forward.1} parent=5 // pred_fallthru
        _
    $region6: #{bottleneck_forward.1} parent=1 // loop_footer
      %s25 = sadd.s32 1, %s21
    $region7: #{bottleneck_forward.1} parent=1 // loop_footer_branch
      %20 = sbr.rel target = $region3
    $region8: #{bottleneck_forward.1} parent=1 // loop_exit
      _
    %6009 = vsyncpa [#allocation4], 1
    %s6010 = scalar_lea.sflag [#allocation4], 1
    %6011 = vsyncpa %s6010, 1
    %6012 = vsyncpa [#allocation5], 1
    %s6013 = scalar_lea.sflag [#allocation5], 1
    %6014 = vsyncpa %s6013, 1

</llo_original>
